<compile_context>
chip_gen: v5e
topology: v5e:2x2
jax: 0.10.0
libtpu: 0.0.40
codegen_flags: <defaults>
</compile_context>

<pallas_src>
import functools

import jax
import jax.numpy as jnp
from jax.experimental import pallas as pl
from jax.experimental.pallas import tpu as pltpu


def _round_up(n, m):
    return (n + m - 1) // m * m


def _tpu_generation():
    """Best-effort TPU generation (5/6/7); 0 if unknown. Only tunes tiling."""
    try:
        kind = jax.devices()[0].device_kind.lower()
    except Exception:
        return 0
    if "tpu" not in kind:
        return 0
    for g in (7, 6, 5, 4, 3, 2):
        if str(g) in kind:
            return g
    return 0


def _vmem_cap_bytes():
    try:
        info = pltpu.get_tpu_info()
        for name in ("vmem_capacity_bytes", "vmem_size_bytes", "vmem_bytes"):
            cap = int(getattr(info, name, 0) or 0)
            if cap > 0:
                return cap
    except Exception:
        pass
    return 64 * 1024 * 1024   # conservative (v7x per-TC)


def _sigmoid(x):
    # One EUP push (tanh) + cheap VALU instead of exp + divide.
    return 0.5 * jnp.tanh(0.5 * x) + 0.5


# ----------------------------- fused LSTM kernel ------------------------------
def _fused_lstm_kernel(x_ref, len_ref, wih0_ref, wihr_ref, whh_ref, b_ref,
                       wout_ref, bout_ref, o_ref, gates_scr, hseq_scr, *,
                       num_layers, seq_len, b_tile, hidden_pad, t_chunk):
    T, Bt, Hp, Tc = seq_len, b_tile, hidden_pad, t_chunk
    n_chunks = (T + Tc - 1) // Tc

    lens_m1 = len_ref[0] - 1                     # (Bt, 1) int32

    h_last = jnp.zeros((Bt, Hp), jnp.float32)

    for layer in range(num_layers):
        is_last_layer = layer == num_layers - 1
        whh = whh_ref[layer]                     # (Hp, 4Hp) bf16
        bias = b_ref[layer]                      # (1, 4Hp)  f32

        h = jnp.zeros((Bt, Hp), jnp.float32)
        c = jnp.zeros((Bt, Hp), jnp.float32)
        hl = jnp.zeros((Bt, Hp), jnp.float32)

        for ci in range(n_chunks):
            t0 = ci * Tc
            tc = min(Tc, T - t0)                 # static chunk length
            rows = tc * Bt
            row0 = t0 * Bt

            # Hoisted input projection for this time chunk: one large MXU
            # matmul covering tc timesteps, cached in bf16 (half the VMEM and
            # half the per-step vld traffic of f32).
            if layer == 0:
                xin = x_ref[0, pl.ds(row0, rows), :]           # (rows, Dp) bf16
                w_in = wih0_ref[...]
            else:
                xin = hseq_scr[pl.ds(row0, rows), :]           # (rows, Hp) bf16
                w_in = wihr_ref[layer - 1]
            gates_scr[pl.ds(0, rows), :] = jnp.dot(
                xin, w_in,
                preferred_element_type=jnp.float32).astype(jnp.bfloat16)

            def step(t, carry):
                if is_last_layer:
                    h, c, hl = carry
                else:
                    h, c = carry
                row = pl.multiple_of(t * Bt, Bt)
                # Single MXU op on the serial critical path; bias folded here
                # (rides on a gates slice that is loaded anyway).
                gates = (gates_scr[pl.ds(row, Bt), :].astype(jnp.float32)
                         + bias
                         + jnp.dot(h.astype(jnp.bfloat16), whh,
                                   preferred_element_type=jnp.float32))
                # PyTorch gate order: i, f, g, o (lane-aligned Hp slices).
                i_g = _sigmoid(gates[:, 0 * Hp:1 * Hp])
                f_g = _sigmoid(gates[:, 1 * Hp:2 * Hp])
                g_g = jnp.tanh(gates[:, 2 * Hp:3 * Hp])
                o_g = _sigmoid(gates[:, 3 * Hp:4 * Hp])
                c_new = f_g * c + i_g * g_g
                h_new = o_g * jnp.tanh(c_new)
                if is_last_layer:
                    # In-kernel "_fetch": keep hidden state at t == length-1.
                    hl = jnp.where(lens_m1 == (t0 + t), h_new, hl)
                    return h_new, c_new, hl
                # Non-final layers: store h sequence (bf16) for the next
                # layer's hoisted projection; no last-hidden select needed.
                abs_row = pl.multiple_of(row0 + t * Bt, Bt)
                hseq_scr[pl.ds(abs_row, Bt), :] = h_new.astype(jnp.bfloat16)
                return h_new, c_new

            unroll = tc if tc <= 8 else 4        # bounded unroll: no vreg spill
            if is_last_layer:
                h, c, hl = jax.lax.fori_loop(0, tc, step, (h, c, hl),
                                             unroll=unroll)
            else:
                h, c = jax.lax.fori_loop(0, tc, step, (h, c), unroll=unroll)

        if is_last_layer:
            h_last = hl

    # Fused output head: Linear + softmax (exact divide; denominator is only
    # (Bt,1)). Padded classes carry a -1e9 bias -> exactly zero probability.
    logits = (jnp.dot(h_last.astype(jnp.bfloat16), wout_ref[...],
                      preferred_element_type=jnp.float32) + bout_ref[...])
    m = jnp.max(logits, axis=-1, keepdims=True)
    e = jnp.exp(logits - m)
    o_ref[0] = e / jnp.sum(e, axis=-1, keepdims=True)


def _fused_lstm_call(x_pk, lens_pk, wih0, wihr, whh, bias, wout, bout, *,
                     num_layers, seq_len, b_tile, hidden_pad, out_pad,
                     t_chunk):
    nbt, TB, Dp = x_pk.shape
    L, T, Bt, Hp, Op, Tc = num_layers, seq_len, b_tile, hidden_pad, out_pad, t_chunk
    hseq_rows = TB if L > 1 else Bt

    # VMEM budget: double-buffered inputs/outputs + single-copy scratch,
    # with headroom, clamped to the chip's VMEM capacity.
    bf2, f4 = 2, 4
    est = (2 * TB * Dp * bf2                    # x block (double-buffered)
           + 2 * 8 * 128 * f4                   # lengths block (padded)
           + 2 * wih0.size * bf2
           + 2 * wihr.size * bf2
           + 2 * whh.size * bf2
           + 2 * L * 8 * 4 * Hp * f4            # bias (sublane-padded)
           + 2 * wout.size * bf2
           + 2 * 8 * Op * f4
           + 2 * Bt * Op * f4                   # output block
           + Tc * Bt * 4 * Hp * bf2             # gates scratch (bf16)
           + hseq_rows * Hp * bf2)              # h-seq scratch (bf16)
    vmem_limit = int(min(_vmem_cap_bytes(),
                         max(32 * 1024 * 1024, int(est * 1.25) + (4 << 20))))

    kernel = functools.partial(_fused_lstm_kernel, num_layers=L, seq_len=T,
                               b_tile=Bt, hidden_pad=Hp, t_chunk=Tc)
    return pl.pallas_call(
        kernel,
        out_shape=jax.ShapeDtypeStruct((nbt, Bt, Op), jnp.float32),
        grid_spec=pltpu.PrefetchScalarGridSpec(
            num_scalar_prefetch=0,
            grid=(nbt,),                         # batch tiles: data-parallel
            in_specs=[
                pl.BlockSpec((1, TB, Dp), lambda b: (b, 0, 0)),       # x
                pl.BlockSpec((1, Bt, 1), lambda b: (b, 0, 0)),        # lengths
                pl.BlockSpec(wih0.shape, lambda b: (0, 0)),           # W_ih L0
                pl.BlockSpec(wihr.shape, lambda b: (0, 0, 0)),        # W_ih L>0
                pl.BlockSpec(whh.shape, lambda b: (0, 0, 0)),         # W_hh
                pl.BlockSpec(bias.shape, lambda b: (0, 0, 0)),        # biases
                pl.BlockSpec(wout.shape, lambda b: (0, 0)),           # W_out
                pl.BlockSpec(bout.shape, lambda b: (0, 0)),           # b_out
            ],
            out_specs=pl.BlockSpec((1, Bt, Op), lambda b: (b, 0, 0)),
            scratch_shapes=[
                pltpu.VMEM((Tc * Bt, 4 * Hp), jnp.bfloat16),  # chunk gates
                pltpu.VMEM((hseq_rows, Hp), jnp.bfloat16),    # layer h-seq
            ],
        ),
        compiler_params=pltpu.CompilerParams(
            dimension_semantics=("parallel",),
            vmem_limit_bytes=vmem_limit),
    )(x_pk, lens_pk, wih0, wihr, whh, bias, wout, bout)


# ------------------------------ tiling selection -------------------------------
def _select_tiling(B, T, Dp, Hp, L, gen):
    B_pad = _round_up(B, 8)
    tile_cap = 256 if gen == 6 else 128          # 256-row MXU on v6e
    b_tile = min(B_pad, tile_cap)

    # Bound per-tile resident VMEM (double-buffered x block + h-seq scratch).
    budget = (24 if gen >= 7 else 56) * 1024 * 1024

    def resident(bt):
        return 2 * T * bt * Dp * 2 + (T * bt * Hp * 2 if L > 1 else 0)

    while b_tile > 8 and resident(b_tile) > budget:
        b_tile = max(8, (b_tile // 2) // 8 * 8)

    B_pad = _round_up(B, b_tile)
    nbt = B_pad // b_tile

    # v7x: 2 TensorCores per chip -> guarantee >=2 tiles on the parallel axis.
    if gen >= 7 and nbt == 1 and B_pad >= 16:
        B_pad = _round_up(B, 16)
        b_tile = B_pad // 2
        nbt = 2

    # Time chunk: <=16 steps, also bounding the gates scratch to ~4 MiB.
    t_chunk = max(1, min(T, 16, (4 << 20) // max(1, b_tile * 4 * Hp * 2)))
    return B_pad, b_tile, nbt, t_chunk


# -------------------------------- full forward --------------------------------
def lstm_forward(params, sen_batch, sen_lengths, sen_mask_matrix=None):
    """Replicates LSTM.forward (eval mode).

    sen_batch:   (B, T) int32 token ids
    sen_lengths: (B,)   int32 true lengths (>= 1)
    returns:     (B, output_dim) float32 softmax probabilities
    """
    del sen_mask_matrix  # unused by the reference forward
    emb = params["emb"]
    wih0 = params["w_ih0_t"]
    wihr = params["w_ihr_t"]
    whh = params["w_hh_t"]
    bias = params["bias"]
    wout = params["w_out_t"]
    bout = params["b_out"]
    output_dim = params["output_dim"]

    B, T = sen_batch.shape
    D = emb.shape[1]
    Dp = wih0.shape[0]
    Hp = whh.shape[1]
    Op = wout.shape[1]
    L = whh.shape[0]

    gen = _tpu_generation()
    B_pad, b_tile, nbt, t_chunk = _select_tiling(B, T, Dp, Hp, L, gen)

    # Glue: embedding gather, padding, (batch-tile, t, b) packing.
    x = emb[sen_batch].astype(jnp.float32)                      # (B, T, D)
    x = jnp.pad(x, ((0, B_pad - B), (0, 0), (0, Dp - D)))       # (B_pad, T, Dp)
    x = x.reshape(nbt, b_tile, T, Dp).transpose(0, 2, 1, 3)     # (nbt, T, bt, Dp)
    x = x.reshape(nbt, T * b_tile, Dp).astype(jnp.bfloat16)

    # NOTE: padded batch entries get length 1; their output rows are dropped.
    lens = jnp.pad(sen_lengths.astype(jnp.int32), (0, B_pad - B),
                   constant_values=1)
    lens = lens.reshape(nbt, b_tile, 1)

    out = _fused_lstm_call(x, lens, wih0, wihr, whh, bias, wout, bout,
                           num_layers=L, seq_len=T, b_tile=b_tile,
                           hidden_pad=Hp, out_pad=Op, t_chunk=t_chunk)
    return out.reshape(B_pad, Op)[:B, :output_dim]


# --------------------------------- param init ----------------------------------
def init_params(key, vocab_size, input_dim, hidden_dim, num_layers,
                output_dim):
    Hp = _round_up(hidden_dim, 128)
    Dp = _round_up(input_dim, 128)
    Op = _round_up(output_dim, 128)

    keys = jax.random.split(key, 3 + 4 * num_layers)
    k_it = iter(keys)

    emb = 0.1 * jax.random.normal(next(k_it), (vocab_size, input_dim),
                                  jnp.float32)

    def pad_gates_t(w_t, d_in, d_in_pad):
        # w_t: (d_in, 4H), gate order [i|f|g|o]; pad each gate H -> Hp and the
        # input dim -> d_in_pad so every gate slice stays lane-aligned.
        w4 = w_t.reshape(d_in, 4, hidden_dim)
        w4 = jnp.pad(w4, ((0, d_in_pad - d_in), (0, 0), (0, Hp - hidden_dim)))
        return w4.reshape(d_in_pad, 4 * Hp)

    wih_list, whh_list, bias_list = [], [], []
    for layer in range(num_layers):
        d_in = input_dim if layer == 0 else hidden_dim
        d_in_pad = Dp if layer == 0 else Hp
        w_ih = 0.1 * jax.random.normal(next(k_it), (4 * hidden_dim, d_in),
                                       jnp.float32)
        w_hh = 0.1 * jax.random.normal(next(k_it),
                                       (4 * hidden_dim, hidden_dim),
                                       jnp.float32)
        b_ih = 0.1 * jax.random.normal(next(k_it), (4 * hidden_dim,),
                                       jnp.float32)
        b_hh = 0.1 * jax.random.normal(next(k_it), (4 * hidden_dim,),
                                       jnp.float32)
        wih_list.append(pad_gates_t(w_ih.T, d_in, d_in_pad))
        whh_list.append(pad_gates_t(w_hh.T, hidden_dim, Hp))
        b = (b_ih + b_hh).reshape(4, hidden_dim)
        b = jnp.pad(b, ((0, 0), (0, Hp - hidden_dim))).reshape(1, 4 * Hp)
        bias_list.append(b)

    w_out = 0.1 * jax.random.normal(next(k_it), (output_dim, hidden_dim),
                                    jnp.float32)
    b_out = 0.1 * jax.random.normal(next(k_it), (output_dim,), jnp.float32)

    w_out_t = jnp.pad(w_out.T, ((0, Hp - hidden_dim), (0, Op - output_dim)))
    # Padded classes: large negative bias -> exactly zero softmax mass.
    b_out_pad = jnp.full((Op,), -1e9, jnp.float32).at[:output_dim].set(b_out)

    if num_layers > 1:
        w_ihr_t = jnp.stack(wih_list[1:])                       # (L-1, Hp, 4Hp)
    else:
        w_ihr_t = jnp.zeros((1, Hp, 4 * Hp), jnp.float32)       # unused dummy

    return {
        "emb": emb,                                             # (V, D) f32
        "w_ih0_t": wih_list[0].astype(jnp.bfloat16),            # (Dp, 4Hp)
        "w_ihr_t": w_ihr_t.astype(jnp.bfloat16),                # (max(L-1,1),Hp,4Hp)
        "w_hh_t": jnp.stack(whh_list).astype(jnp.bfloat16),     # (L, Hp, 4Hp)
        "bias": jnp.stack(bias_list),                           # (L, 1, 4Hp) f32
        "w_out_t": w_out_t.astype(jnp.bfloat16),                # (Hp, Op)
        "b_out": b_out_pad[None, :],                            # (1, Op) f32
        "output_dim": output_dim,
    }


if __name__ == "__main__":
    # Small, module-consistent shapes.
    vocab_size = 50
    input_dim = 16     # embedding dim == LSTM input_size
    hidden_dim = 32
    num_layers = 2
    output_dim = 3
    max_len = 8
    batch = 4

    key = jax.random.PRNGKey(0)
    k_params, k_tok, k_len = jax.random.split(key, 3)

    params = init_params(k_params, vocab_size, input_dim, hidden_dim,
                         num_layers, output_dim)

    sen_batch = jax.random.randint(k_tok, (batch, max_len), 1, vocab_size,
                                   dtype=jnp.int32)
    sen_lengths = jax.random.randint(k_len, (batch,), 1, max_len + 1,
                                     dtype=jnp.int32)

    out_prob = lstm_forward(params, sen_batch, sen_lengths)
    out_prob = jax.block_until_ready(out_prob)

    assert out_prob.shape == (batch, output_dim)
    assert bool(jnp.all(jnp.isfinite(out_prob)))
    # softmax rows sum to 1 (exact divide in the head)
    assert bool(jnp.allclose(jnp.sum(out_prob, axis=-1), 1.0, atol=1e-4))

    print("KERNEL_OK")
</pallas_src>

<mosaic_0001>
module attributes {stable_mosaic.version = 11 : i64} {
  func.func @_fused_lstm_kernel(%arg0: i32, %arg1: memref<1x64x128xbf16, #tpu.memory_space<vmem>>, %arg2: memref<1x8x1xi32, #tpu.memory_space<vmem>>, %arg3: memref<128x512xbf16, #tpu.memory_space<vmem>>, %arg4: memref<1x128x512xbf16, #tpu.memory_space<vmem>>, %arg5: memref<2x128x512xbf16, #tpu.memory_space<vmem>>, %arg6: memref<2x1x512xf32, #tpu.memory_space<vmem>>, %arg7: memref<128x128xbf16, #tpu.memory_space<vmem>>, %arg8: memref<1x128xf32, #tpu.memory_space<vmem>>, %arg9: memref<1x8x128xf32, #tpu.memory_space<vmem>>, %arg10: memref<64x512xbf16, #tpu.memory_space<vmem>>, %arg11: memref<64x128xbf16, #tpu.memory_space<vmem>>) attributes {dimension_semantics = [#tpu.dimension_semantics<parallel>], iteration_bounds = array<i64: 1>, scalar_prefetch = 0 : i64, scratch_operands = 2 : i64, tpu.core_type = #tpu.core_type<tc>, window_params = [{transform_indices = @transform_0, window_bounds = array<i64: 1, 64, 128>}, {transform_indices = @transform_1, window_bounds = array<i64: 1, 8, 1>}, {pipeline_mode = #tpu.pipeline_mode<synchronous>, transform_indices = @transform_2, window_bounds = array<i64: 128, 512>}, {pipeline_mode = #tpu.pipeline_mode<synchronous>, transform_indices = @transform_3, window_bounds = array<i64: 1, 128, 512>}, {pipeline_mode = #tpu.pipeline_mode<synchronous>, transform_indices = @transform_4, window_bounds = array<i64: 2, 128, 512>}, {pipeline_mode = #tpu.pipeline_mode<synchronous>, transform_indices = @transform_5, window_bounds = array<i64: 2, 1, 512>}, {pipeline_mode = #tpu.pipeline_mode<synchronous>, transform_indices = @transform_6, window_bounds = array<i64: 128, 128>}, {pipeline_mode = #tpu.pipeline_mode<synchronous>, transform_indices = @transform_7, window_bounds = array<i64: 1, 128>}, {transform_indices = @transform_8, window_bounds = array<i64: 1, 8, 128>}]} {
    %c0 = arith.constant 0 : index
    %c0_0 = arith.constant 0 : index
    %c0_1 = arith.constant 0 : index
    %0 = vector.load %arg2[%c0, %c0_0, %c0_1] : memref<1x8x1xi32, #tpu.memory_space<vmem>>, vector<1x8x1xi32>
    %1 = vector.shape_cast %0 : vector<1x8x1xi32> to vector<8x1xi32>
    %c1_i32 = arith.constant 1 : i32
    %2 = vector.broadcast %c1_i32 : i32 to vector<8x1xi32>
    %3 = arith.subi %1, %2 : vector<8x1xi32>
    %c0_2 = arith.constant 0 : index
    %c0_3 = arith.constant 0 : index
    %c0_4 = arith.constant 0 : index
    %4 = vector.load %arg5[%c0_2, %c0_3, %c0_4] : memref<2x128x512xbf16, #tpu.memory_space<vmem>>, vector<1x128x512xbf16>
    %5 = vector.shape_cast %4 : vector<1x128x512xbf16> to vector<128x512xbf16>
    %c0_5 = arith.constant 0 : index
    %c0_6 = arith.constant 0 : index
    %c0_7 = arith.constant 0 : index
    %6 = vector.load %arg6[%c0_5, %c0_6, %c0_7] : memref<2x1x512xf32, #tpu.memory_space<vmem>>, vector<1x1x512xf32>
    %7 = vector.shape_cast %6 : vector<1x1x512xf32> to vector<1x512xf32>
    %cst = arith.constant 0.000000e+00 : f32
    %8 = vector.broadcast %cst : f32 to vector<8x128xf32>
    %cst_8 = arith.constant 0.000000e+00 : f32
    %9 = vector.broadcast %cst_8 : f32 to vector<8x128xf32>
    %c0_9 = arith.constant 0 : index
    %c0_10 = arith.constant 0 : index
    %c0_11 = arith.constant 0 : index
    %10 = vector.load %arg1[%c0_9, %c0_10, %c0_11] : memref<1x64x128xbf16, #tpu.memory_space<vmem>>, vector<1x64x128xbf16>
    %11 = vector.shape_cast %10 : vector<1x64x128xbf16> to vector<64x128xbf16>
    %c0_12 = arith.constant 0 : index
    %c0_13 = arith.constant 0 : index
    %12 = vector.load %arg3[%c0_12, %c0_13] : memref<128x512xbf16, #tpu.memory_space<vmem>>, vector<128x512xbf16>
    %cst_14 = arith.constant dense<0.000000e+00> : vector<64x512xf32>
    %13 = tpu.matmul %11, %12, %cst_14 {dimension_numbers = #tpu.dot_dimension_numbers<[1], [0], [0], [1], [0, 0, 1, 1], [], []>} : vector<64x128xbf16>, vector<128x512xbf16>, vector<64x512xf32> -> vector<64x512xf32>
    %14 = arith.truncf %13 : vector<64x512xf32> to vector<64x512xbf16>
    %c0_15 = arith.constant 0 : index
    %c0_16 = arith.constant 0 : index
    %15 = vector.load %arg10[%c0_15, %c0_16] : memref<64x512xbf16, #tpu.memory_space<vmem>>, vector<64x512xbf16>
    tpu.vector_store %arg10[%c0_15, %c0_16], %14 {strides = array<i32>} : memref<64x512xbf16, #tpu.memory_space<vmem>>, vector<64x512xbf16>,
    %c0_i32 = arith.constant 0 : i32
    %c8_i32 = arith.constant 8 : i32
    %16 = arith.muli %c0_i32, %c8_i32 : i32
    %17 = tpu.assume_multiple %16, 8 : i32
    %18 = arith.index_cast %17 : i32 to index
    %c0_17 = arith.constant 0 : index
    %19 = vector.load %arg10[%18, %c0_17] : memref<64x512xbf16, #tpu.memory_space<vmem>>, vector<8x512xbf16>
    %20 = arith.extf %19 : vector<8x512xbf16> to vector<8x512xf32>
    %21 = vector.broadcast %7 : vector<1x512xf32> to vector<8x512xf32>
    %22 = arith.addf %20, %21 : vector<8x512xf32>
    %23 = arith.truncf %8 : vector<8x128xf32> to vector<8x128xbf16>
    %cst_18 = arith.constant dense<0.000000e+00> : vector<8x512xf32>
    %24 = tpu.matmul %23, %5, %cst_18 {dimension_numbers = #tpu.dot_dimension_numbers<[1], [0], [0], [1], [0, 0, 1, 1], [], []>} : vector<8x128xbf16>, vector<128x512xbf16>, vector<8x512xf32> -> vector<8x512xf32>
    %25 = arith.addf %22, %24 : vector<8x512xf32>
    %26 = vector.extract_strided_slice %25 {offsets = [0, 0], sizes = [8, 128], strides = [1, 1]} : vector<8x512xf32> to vector<8x128xf32>
    %cst_19 = arith.constant 5.000000e-01 : f32
    %27 = vector.broadcast %cst_19 : f32 to vector<8x128xf32>
    %28 = arith.mulf %27, %26 : vector<8x128xf32>
    %29 = math.tanh %28 : vector<8x128xf32>
    %cst_20 = arith.constant 5.000000e-01 : f32
    %30 = vector.broadcast %cst_20 : f32 to vector<8x128xf32>
    %31 = arith.mulf %30, %29 : vector<8x128xf32>
    %cst_21 = arith.constant 5.000000e-01 : f32
    %32 = vector.broadcast %cst_21 : f32 to vector<8x128xf32>
    %33 = arith.addf %31, %32 : vector<8x128xf32>
    %34 = vector.extract_strided_slice %25 {offsets = [0, 128], sizes = [8, 128], strides = [1, 1]} : vector<8x512xf32> to vector<8x128xf32>
    %cst_22 = arith.constant 5.000000e-01 : f32
    %35 = vector.broadcast %cst_22 : f32 to vector<8x128xf32>
    %36 = arith.mulf %35, %34 : vector<8x128xf32>
    %37 = math.tanh %36 : vector<8x128xf32>
    %cst_23 = arith.constant 5.000000e-01 : f32
    %38 = vector.broadcast %cst_23 : f32 to vector<8x128xf32>
    %39 = arith.mulf %38, %37 : vector<8x128xf32>
    %cst_24 = arith.constant 5.000000e-01 : f32
    %40 = vector.broadcast %cst_24 : f32 to vector<8x128xf32>
    %41 = arith.addf %39, %40 : vector<8x128xf32>
    %42 = vector.extract_strided_slice %25 {offsets = [0, 256], sizes = [8, 128], strides = [1, 1]} : vector<8x512xf32> to vector<8x128xf32>
    %43 = math.tanh %42 : vector<8x128xf32>
    %44 = vector.extract_strided_slice %25 {offsets = [0, 384], sizes = [8, 128], strides = [1, 1]} : vector<8x512xf32> to vector<8x128xf32>
    %cst_25 = arith.constant 5.000000e-01 : f32
    %45 = vector.broadcast %cst_25 : f32 to vector<8x128xf32>
    %46 = arith.mulf %45, %44 : vector<8x128xf32>
    %47 = math.tanh %46 : vector<8x128xf32>
    %cst_26 = arith.constant 5.000000e-01 : f32
    %48 = vector.broadcast %cst_26 : f32 to vector<8x128xf32>
    %49 = arith.mulf %48, %47 : vector<8x128xf32>
    %cst_27 = arith.constant 5.000000e-01 : f32
    %50 = vector.broadcast %cst_27 : f32 to vector<8x128xf32>
    %51 = arith.addf %49, %50 : vector<8x128xf32>
    %52 = arith.mulf %41, %9 : vector<8x128xf32>
    %53 = arith.mulf %33, %43 : vector<8x128xf32>
    %54 = arith.addf %52, %53 : vector<8x128xf32>
    %55 = math.tanh %54 : vector<8x128xf32>
    %56 = arith.mulf %51, %55 : vector<8x128xf32>
    %c8_i32_28 = arith.constant 8 : i32
    %57 = arith.muli %c0_i32, %c8_i32_28 : i32
    %c0_i32_29 = arith.constant 0 : i32
    %58 = arith.addi %c0_i32_29, %57 : i32
    %59 = tpu.assume_multiple %58, 8 : i32
    %60 = arith.truncf %56 : vector<8x128xf32> to vector<8x128xbf16>
    %61 = arith.index_cast %59 : i32 to index
    %c0_30 = arith.constant 0 : index
    %62 = vector.load %arg11[%61, %c0_30] : memref<64x128xbf16, #tpu.memory_space<vmem>>, vector<8x128xbf16>
    tpu.vector_store %arg11[%61, %c0_30], %60 {strides = array<i32>} : memref<64x128xbf16, #tpu.memory_space<vmem>>, vector<8x128xbf16>,
    %c1_i32_31 = arith.constant 1 : i32
    %c8_i32_32 = arith.constant 8 : i32
    %63 = arith.muli %c1_i32_31, %c8_i32_32 : i32
    %64 = tpu.assume_multiple %63, 8 : i32
    %65 = arith.index_cast %64 : i32 to index
    %c0_33 = arith.constant 0 : index
    %66 = vector.load %arg10[%65, %c0_33] : memref<64x512xbf16, #tpu.memory_space<vmem>>, vector<8x512xbf16>
    %67 = arith.extf %66 : vector<8x512xbf16> to vector<8x512xf32>
    %68 = vector.broadcast %7 : vector<1x512xf32> to vector<8x512xf32>
    %69 = arith.addf %67, %68 : vector<8x512xf32>
    %70 = arith.truncf %56 : vector<8x128xf32> to vector<8x128xbf16>
    %cst_34 = arith.constant dense<0.000000e+00> : vector<8x512xf32>
    %71 = tpu.matmul %70, %5, %cst_34 {dimension_numbers = #tpu.dot_dimension_numbers<[1], [0], [0], [1], [0, 0, 1, 1], [], []>} : vector<8x128xbf16>, vector<128x512xbf16>, vector<8x512xf32> -> vector<8x512xf32>
    %72 = arith.addf %69, %71 : vector<8x512xf32>
    %73 = vector.extract_strided_slice %72 {offsets = [0, 0], sizes = [8, 128], strides = [1, 1]} : vector<8x512xf32> to vector<8x128xf32>
    %cst_35 = arith.constant 5.000000e-01 : f32
    %74 = vector.broadcast %cst_35 : f32 to vector<8x128xf32>
    %75 = arith.mulf %74, %73 : vector<8x128xf32>
    %76 = math.tanh %75 : vector<8x128xf32>
    %cst_36 = arith.constant 5.000000e-01 : f32
    %77 = vector.broadcast %cst_36 : f32 to vector<8x128xf32>
    %78 = arith.mulf %77, %76 : vector<8x128xf32>
    %cst_37 = arith.constant 5.000000e-01 : f32
    %79 = vector.broadcast %cst_37 : f32 to vector<8x128xf32>
    %80 = arith.addf %78, %79 : vector<8x128xf32>
    %81 = vector.extract_strided_slice %72 {offsets = [0, 128], sizes = [8, 128], strides = [1, 1]} : vector<8x512xf32> to vector<8x128xf32>
    %cst_38 = arith.constant 5.000000e-01 : f32
    %82 = vector.broadcast %cst_38 : f32 to vector<8x128xf32>
    %83 = arith.mulf %82, %81 : vector<8x128xf32>
    %84 = math.tanh %83 : vector<8x128xf32>
    %cst_39 = arith.constant 5.000000e-01 : f32
    %85 = vector.broadcast %cst_39 : f32 to vector<8x128xf32>
    %86 = arith.mulf %85, %84 : vector<8x128xf32>
    %cst_40 = arith.constant 5.000000e-01 : f32
    %87 = vector.broadcast %cst_40 : f32 to vector<8x128xf32>
    %88 = arith.addf %86, %87 : vector<8x128xf32>
    %89 = vector.extract_strided_slice %72 {offsets = [0, 256], sizes = [8, 128], strides = [1, 1]} : vector<8x512xf32> to vector<8x128xf32>
    %90 = math.tanh %89 : vector<8x128xf32>
    %91 = vector.extract_strided_slice %72 {offsets = [0, 384], sizes = [8, 128], strides = [1, 1]} : vector<8x512xf32> to vector<8x128xf32>
    %cst_41 = arith.constant 5.000000e-01 : f32
    %92 = vector.broadcast %cst_41 : f32 to vector<8x128xf32>
    %93 = arith.mulf %92, %91 : vector<8x128xf32>
    %94 = math.tanh %93 : vector<8x128xf32>
    %cst_42 = arith.constant 5.000000e-01 : f32
    %95 = vector.broadcast %cst_42 : f32 to vector<8x128xf32>
    %96 = arith.mulf %95, %94 : vector<8x128xf32>
    %cst_43 = arith.constant 5.000000e-01 : f32
    %97 = vector.broadcast %cst_43 : f32 to vector<8x128xf32>
    %98 = arith.addf %96, %97 : vector<8x128xf32>
    %99 = arith.mulf %88, %54 : vector<8x128xf32>
    %100 = arith.mulf %80, %90 : vector<8x128xf32>
    %101 = arith.addf %99, %100 : vector<8x128xf32>
    %102 = math.tanh %101 : vector<8x128xf32>
    %103 = arith.mulf %98, %102 : vector<8x128xf32>
    %c8_i32_44 = arith.constant 8 : i32
    %104 = arith.muli %c1_i32_31, %c8_i32_44 : i32
    %c0_i32_45 = arith.constant 0 : i32
    %105 = arith.addi %c0_i32_45, %104 : i32
    %106 = tpu.assume_multiple %105, 8 : i32
    %107 = arith.truncf %103 : vector<8x128xf32> to vector<8x128xbf16>
    %108 = arith.index_cast %106 : i32 to index
    %c0_46 = arith.constant 0 : index
    %109 = vector.load %arg11[%108, %c0_46] : memref<64x128xbf16, #tpu.memory_space<vmem>>, vector<8x128xbf16>
    tpu.vector_store %arg11[%108, %c0_46], %107 {strides = array<i32>} : memref<64x128xbf16, #tpu.memory_space<vmem>>, vector<8x128xbf16>,
    %c2_i32 = arith.constant 2 : i32
    %c8_i32_47 = arith.constant 8 : i32
    %110 = arith.muli %c2_i32, %c8_i32_47 : i32
    %111 = tpu.assume_multiple %110, 8 : i32
    %112 = arith.index_cast %111 : i32 to index
    %c0_48 = arith.constant 0 : index
    %113 = vector.load %arg10[%112, %c0_48] : memref<64x512xbf16, #tpu.memory_space<vmem>>, vector<8x512xbf16>
    %114 = arith.extf %113 : vector<8x512xbf16> to vector<8x512xf32>
    %115 = vector.broadcast %7 : vector<1x512xf32> to vector<8x512xf32>
    %116 = arith.addf %114, %115 : vector<8x512xf32>
    %117 = arith.truncf %103 : vector<8x128xf32> to vector<8x128xbf16>
    %cst_49 = arith.constant dense<0.000000e+00> : vector<8x512xf32>
    %118 = tpu.matmul %117, %5, %cst_49 {dimension_numbers = #tpu.dot_dimension_numbers<[1], [0], [0], [1], [0, 0, 1, 1], [], []>} : vector<8x128xbf16>, vector<128x512xbf16>, vector<8x512xf32> -> vector<8x512xf32>
    %119 = arith.addf %116, %118 : vector<8x512xf32>
    %120 = vector.extract_strided_slice %119 {offsets = [0, 0], sizes = [8, 128], strides = [1, 1]} : vector<8x512xf32> to vector<8x128xf32>
    %cst_50 = arith.constant 5.000000e-01 : f32
    %121 = vector.broadcast %cst_50 : f32 to vector<8x128xf32>
    %122 = arith.mulf %121, %120 : vector<8x128xf32>
    %123 = math.tanh %122 : vector<8x128xf32>
    %cst_51 = arith.constant 5.000000e-01 : f32
    %124 = vector.broadcast %cst_51 : f32 to vector<8x128xf32>
    %125 = arith.mulf %124, %123 : vector<8x128xf32>
    %cst_52 = arith.constant 5.000000e-01 : f32
    %126 = vector.broadcast %cst_52 : f32 to vector<8x128xf32>
    %127 = arith.addf %125, %126 : vector<8x128xf32>
    %128 = vector.extract_strided_slice %119 {offsets = [0, 128], sizes = [8, 128], strides = [1, 1]} : vector<8x512xf32> to vector<8x128xf32>
    %cst_53 = arith.constant 5.000000e-01 : f32
    %129 = vector.broadcast %cst_53 : f32 to vector<8x128xf32>
    %130 = arith.mulf %129, %128 : vector<8x128xf32>
    %131 = math.tanh %130 : vector<8x128xf32>
    %cst_54 = arith.constant 5.000000e-01 : f32
    %132 = vector.broadcast %cst_54 : f32 to vector<8x128xf32>
    %133 = arith.mulf %132, %131 : vector<8x128xf32>
    %cst_55 = arith.constant 5.000000e-01 : f32
    %134 = vector.broadcast %cst_55 : f32 to vector<8x128xf32>
    %135 = arith.addf %133, %134 : vector<8x128xf32>
    %136 = vector.extract_strided_slice %119 {offsets = [0, 256], sizes = [8, 128], strides = [1, 1]} : vector<8x512xf32> to vector<8x128xf32>
    %137 = math.tanh %136 : vector<8x128xf32>
    %138 = vector.extract_strided_slice %119 {offsets = [0, 384], sizes = [8, 128], strides = [1, 1]} : vector<8x512xf32> to vector<8x128xf32>
    %cst_56 = arith.constant 5.000000e-01 : f32
    %139 = vector.broadcast %cst_56 : f32 to vector<8x128xf32>
    %140 = arith.mulf %139, %138 : vector<8x128xf32>
    %141 = math.tanh %140 : vector<8x128xf32>
    %cst_57 = arith.constant 5.000000e-01 : f32
    %142 = vector.broadcast %cst_57 : f32 to vector<8x128xf32>
    %143 = arith.mulf %142, %141 : vector<8x128xf32>
    %cst_58 = arith.constant 5.000000e-01 : f32
    %144 = vector.broadcast %cst_58 : f32 to vector<8x128xf32>
    %145 = arith.addf %143, %144 : vector<8x128xf32>
    %146 = arith.mulf %135, %101 : vector<8x128xf32>
    %147 = arith.mulf %127, %137 : vector<8x128xf32>
    %148 = arith.addf %146, %147 : vector<8x128xf32>
    %149 = math.tanh %148 : vector<8x128xf32>
    %150 = arith.mulf %145, %149 : vector<8x128xf32>
    %c8_i32_59 = arith.constant 8 : i32
    %151 = arith.muli %c2_i32, %c8_i32_59 : i32
    %c0_i32_60 = arith.constant 0 : i32
    %152 = arith.addi %c0_i32_60, %151 : i32
    %153 = tpu.assume_multiple %152, 8 : i32
    %154 = arith.truncf %150 : vector<8x128xf32> to vector<8x128xbf16>
    %155 = arith.index_cast %153 : i32 to index
    %c0_61 = arith.constant 0 : index
    %156 = vector.load %arg11[%155, %c0_61] : memref<64x128xbf16, #tpu.memory_space<vmem>>, vector<8x128xbf16>
    tpu.vector_store %arg11[%155, %c0_61], %154 {strides = array<i32>} : memref<64x128xbf16, #tpu.memory_space<vmem>>, vector<8x128xbf16>,
    %c3_i32 = arith.constant 3 : i32
    %c8_i32_62 = arith.constant 8 : i32
    %157 = arith.muli %c3_i32, %c8_i32_62 : i32
    %158 = tpu.assume_multiple %157, 8 : i32
    %159 = arith.index_cast %158 : i32 to index
    %c0_63 = arith.constant 0 : index
    %160 = vector.load %arg10[%159, %c0_63] : memref<64x512xbf16, #tpu.memory_space<vmem>>, vector<8x512xbf16>
    %161 = arith.extf %160 : vector<8x512xbf16> to vector<8x512xf32>
    %162 = vector.broadcast %7 : vector<1x512xf32> to vector<8x512xf32>
    %163 = arith.addf %161, %162 : vector<8x512xf32>
    %164 = arith.truncf %150 : vector<8x128xf32> to vector<8x128xbf16>
    %cst_64 = arith.constant dense<0.000000e+00> : vector<8x512xf32>
    %165 = tpu.matmul %164, %5, %cst_64 {dimension_numbers = #tpu.dot_dimension_numbers<[1], [0], [0], [1], [0, 0, 1, 1], [], []>} : vector<8x128xbf16>, vector<128x512xbf16>, vector<8x512xf32> -> vector<8x512xf32>
    %166 = arith.addf %163, %165 : vector<8x512xf32>
    %167 = vector.extract_strided_slice %166 {offsets = [0, 0], sizes = [8, 128], strides = [1, 1]} : vector<8x512xf32> to vector<8x128xf32>
    %cst_65 = arith.constant 5.000000e-01 : f32
    %168 = vector.broadcast %cst_65 : f32 to vector<8x128xf32>
    %169 = arith.mulf %168, %167 : vector<8x128xf32>
    %170 = math.tanh %169 : vector<8x128xf32>
    %cst_66 = arith.constant 5.000000e-01 : f32
    %171 = vector.broadcast %cst_66 : f32 to vector<8x128xf32>
    %172 = arith.mulf %171, %170 : vector<8x128xf32>
    %cst_67 = arith.constant 5.000000e-01 : f32
    %173 = vector.broadcast %cst_67 : f32 to vector<8x128xf32>
    %174 = arith.addf %172, %173 : vector<8x128xf32>
    %175 = vector.extract_strided_slice %166 {offsets = [0, 128], sizes = [8, 128], strides = [1, 1]} : vector<8x512xf32> to vector<8x128xf32>
    %cst_68 = arith.constant 5.000000e-01 : f32
    %176 = vector.broadcast %cst_68 : f32 to vector<8x128xf32>
    %177 = arith.mulf %176, %175 : vector<8x128xf32>
    %178 = math.tanh %177 : vector<8x128xf32>
    %cst_69 = arith.constant 5.000000e-01 : f32
    %179 = vector.broadcast %cst_69 : f32 to vector<8x128xf32>
    %180 = arith.mulf %179, %178 : vector<8x128xf32>
    %cst_70 = arith.constant 5.000000e-01 : f32
    %181 = vector.broadcast %cst_70 : f32 to vector<8x128xf32>
    %182 = arith.addf %180, %181 : vector<8x128xf32>
    %183 = vector.extract_strided_slice %166 {offsets = [0, 256], sizes = [8, 128], strides = [1, 1]} : vector<8x512xf32> to vector<8x128xf32>
    %184 = math.tanh %183 : vector<8x128xf32>
    %185 = vector.extract_strided_slice %166 {offsets = [0, 384], sizes = [8, 128], strides = [1, 1]} : vector<8x512xf32> to vector<8x128xf32>
    %cst_71 = arith.constant 5.000000e-01 : f32
    %186 = vector.broadcast %cst_71 : f32 to vector<8x128xf32>
    %187 = arith.mulf %186, %185 : vector<8x128xf32>
    %188 = math.tanh %187 : vector<8x128xf32>
    %cst_72 = arith.constant 5.000000e-01 : f32
    %189 = vector.broadcast %cst_72 : f32 to vector<8x128xf32>
    %190 = arith.mulf %189, %188 : vector<8x128xf32>
    %cst_73 = arith.constant 5.000000e-01 : f32
    %191 = vector.broadcast %cst_73 : f32 to vector<8x128xf32>
    %192 = arith.addf %190, %191 : vector<8x128xf32>
    %193 = arith.mulf %182, %148 : vector<8x128xf32>
    %194 = arith.mulf %174, %184 : vector<8x128xf32>
    %195 = arith.addf %193, %194 : vector<8x128xf32>
    %196 = math.tanh %195 : vector<8x128xf32>
    %197 = arith.mulf %192, %196 : vector<8x128xf32>
    %c8_i32_74 = arith.constant 8 : i32
    %198 = arith.muli %c3_i32, %c8_i32_74 : i32
    %c0_i32_75 = arith.constant 0 : i32
    %199 = arith.addi %c0_i32_75, %198 : i32
    %200 = tpu.assume_multiple %199, 8 : i32
    %201 = arith.truncf %197 : vector<8x128xf32> to vector<8x128xbf16>
    %202 = arith.index_cast %200 : i32 to index
    %c0_76 = arith.constant 0 : index
    %203 = vector.load %arg11[%202, %c0_76] : memref<64x128xbf16, #tpu.memory_space<vmem>>, vector<8x128xbf16>
    tpu.vector_store %arg11[%202, %c0_76], %201 {strides = array<i32>} : memref<64x128xbf16, #tpu.memory_space<vmem>>, vector<8x128xbf16>,
    %c4_i32 = arith.constant 4 : i32
    %c8_i32_77 = arith.constant 8 : i32
    %204 = arith.muli %c4_i32, %c8_i32_77 : i32
    %205 = tpu.assume_multiple %204, 8 : i32
    %206 = arith.index_cast %205 : i32 to index
    %c0_78 = arith.constant 0 : index
    %207 = vector.load %arg10[%206, %c0_78] : memref<64x512xbf16, #tpu.memory_space<vmem>>, vector<8x512xbf16>
    %208 = arith.extf %207 : vector<8x512xbf16> to vector<8x512xf32>
    %209 = vector.broadcast %7 : vector<1x512xf32> to vector<8x512xf32>
    %210 = arith.addf %208, %209 : vector<8x512xf32>
    %211 = arith.truncf %197 : vector<8x128xf32> to vector<8x128xbf16>
    %cst_79 = arith.constant dense<0.000000e+00> : vector<8x512xf32>
    %212 = tpu.matmul %211, %5, %cst_79 {dimension_numbers = #tpu.dot_dimension_numbers<[1], [0], [0], [1], [0, 0, 1, 1], [], []>} : vector<8x128xbf16>, vector<128x512xbf16>, vector<8x512xf32> -> vector<8x512xf32>
    %213 = arith.addf %210, %212 : vector<8x512xf32>
    %214 = vector.extract_strided_slice %213 {offsets = [0, 0], sizes = [8, 128], strides = [1, 1]} : vector<8x512xf32> to vector<8x128xf32>
    %cst_80 = arith.constant 5.000000e-01 : f32
    %215 = vector.broadcast %cst_80 : f32 to vector<8x128xf32>
    %216 = arith.mulf %215, %214 : vector<8x128xf32>
    %217 = math.tanh %216 : vector<8x128xf32>
    %cst_81 = arith.constant 5.000000e-01 : f32
    %218 = vector.broadcast %cst_81 : f32 to vector<8x128xf32>
    %219 = arith.mulf %218, %217 : vector<8x128xf32>
    %cst_82 = arith.constant 5.000000e-01 : f32
    %220 = vector.broadcast %cst_82 : f32 to vector<8x128xf32>
    %221 = arith.addf %219, %220 : vector<8x128xf32>
    %222 = vector.extract_strided_slice %213 {offsets = [0, 128], sizes = [8, 128], strides = [1, 1]} : vector<8x512xf32> to vector<8x128xf32>
    %cst_83 = arith.constant 5.000000e-01 : f32
    %223 = vector.broadcast %cst_83 : f32 to vector<8x128xf32>
    %224 = arith.mulf %223, %222 : vector<8x128xf32>
    %225 = math.tanh %224 : vector<8x128xf32>
    %cst_84 = arith.constant 5.000000e-01 : f32
    %226 = vector.broadcast %cst_84 : f32 to vector<8x128xf32>
    %227 = arith.mulf %226, %225 : vector<8x128xf32>
    %cst_85 = arith.constant 5.000000e-01 : f32
    %228 = vector.broadcast %cst_85 : f32 to vector<8x128xf32>
    %229 = arith.addf %227, %228 : vector<8x128xf32>
    %230 = vector.extract_strided_slice %213 {offsets = [0, 256], sizes = [8, 128], strides = [1, 1]} : vector<8x512xf32> to vector<8x128xf32>
    %231 = math.tanh %230 : vector<8x128xf32>
    %232 = vector.extract_strided_slice %213 {offsets = [0, 384], sizes = [8, 128], strides = [1, 1]} : vector<8x512xf32> to vector<8x128xf32>
    %cst_86 = arith.constant 5.000000e-01 : f32
    %233 = vector.broadcast %cst_86 : f32 to vector<8x128xf32>
    %234 = arith.mulf %233, %232 : vector<8x128xf32>
    %235 = math.tanh %234 : vector<8x128xf32>
    %cst_87 = arith.constant 5.000000e-01 : f32
    %236 = vector.broadcast %cst_87 : f32 to vector<8x128xf32>
    %237 = arith.mulf %236, %235 : vector<8x128xf32>
    %cst_88 = arith.constant 5.000000e-01 : f32
    %238 = vector.broadcast %cst_88 : f32 to vector<8x128xf32>
    %239 = arith.addf %237, %238 : vector<8x128xf32>
    %240 = arith.mulf %229, %195 : vector<8x128xf32>
    %241 = arith.mulf %221, %231 : vector<8x128xf32>
    %242 = arith.addf %240, %241 : vector<8x128xf32>
    %243 = math.tanh %242 : vector<8x128xf32>
    %244 = arith.mulf %239, %243 : vector<8x128xf32>
    %c8_i32_89 = arith.constant 8 : i32
    %245 = arith.muli %c4_i32, %c8_i32_89 : i32
    %c0_i32_90 = arith.constant 0 : i32
    %246 = arith.addi %c0_i32_90, %245 : i32
    %247 = tpu.assume_multiple %246, 8 : i32
    %248 = arith.truncf %244 : vector<8x128xf32> to vector<8x128xbf16>
    %249 = arith.index_cast %247 : i32 to index
    %c0_91 = arith.constant 0 : index
    %250 = vector.load %arg11[%249, %c0_91] : memref<64x128xbf16, #tpu.memory_space<vmem>>, vector<8x128xbf16>
    tpu.vector_store %arg11[%249, %c0_91], %248 {strides = array<i32>} : memref<64x128xbf16, #tpu.memory_space<vmem>>, vector<8x128xbf16>,
    %c5_i32 = arith.constant 5 : i32
    %c8_i32_92 = arith.constant 8 : i32
    %251 = arith.muli %c5_i32, %c8_i32_92 : i32
    %252 = tpu.assume_multiple %251, 8 : i32
    %253 = arith.index_cast %252 : i32 to index
    %c0_93 = arith.constant 0 : index
    %254 = vector.load %arg10[%253, %c0_93] : memref<64x512xbf16, #tpu.memory_space<vmem>>, vector<8x512xbf16>
    %255 = arith.extf %254 : vector<8x512xbf16> to vector<8x512xf32>
    %256 = vector.broadcast %7 : vector<1x512xf32> to vector<8x512xf32>
    %257 = arith.addf %255, %256 : vector<8x512xf32>
    %258 = arith.truncf %244 : vector<8x128xf32> to vector<8x128xbf16>
    %cst_94 = arith.constant dense<0.000000e+00> : vector<8x512xf32>
    %259 = tpu.matmul %258, %5, %cst_94 {dimension_numbers = #tpu.dot_dimension_numbers<[1], [0], [0], [1], [0, 0, 1, 1], [], []>} : vector<8x128xbf16>, vector<128x512xbf16>, vector<8x512xf32> -> vector<8x512xf32>
    %260 = arith.addf %257, %259 : vector<8x512xf32>
    %261 = vector.extract_strided_slice %260 {offsets = [0, 0], sizes = [8, 128], strides = [1, 1]} : vector<8x512xf32> to vector<8x128xf32>
    %cst_95 = arith.constant 5.000000e-01 : f32
    %262 = vector.broadcast %cst_95 : f32 to vector<8x128xf32>
    %263 = arith.mulf %262, %261 : vector<8x128xf32>
    %264 = math.tanh %263 : vector<8x128xf32>
    %cst_96 = arith.constant 5.000000e-01 : f32
    %265 = vector.broadcast %cst_96 : f32 to vector<8x128xf32>
    %266 = arith.mulf %265, %264 : vector<8x128xf32>
    %cst_97 = arith.constant 5.000000e-01 : f32
    %267 = vector.broadcast %cst_97 : f32 to vector<8x128xf32>
    %268 = arith.addf %266, %267 : vector<8x128xf32>
    %269 = vector.extract_strided_slice %260 {offsets = [0, 128], sizes = [8, 128], strides = [1, 1]} : vector<8x512xf32> to vector<8x128xf32>
    %cst_98 = arith.constant 5.000000e-01 : f32
    %270 = vector.broadcast %cst_98 : f32 to vector<8x128xf32>
    %271 = arith.mulf %270, %269 : vector<8x128xf32>
    %272 = math.tanh %271 : vector<8x128xf32>
    %cst_99 = arith.constant 5.000000e-01 : f32
    %273 = vector.broadcast %cst_99 : f32 to vector<8x128xf32>
    %274 = arith.mulf %273, %272 : vector<8x128xf32>
    %cst_100 = arith.constant 5.000000e-01 : f32
    %275 = vector.broadcast %cst_100 : f32 to vector<8x128xf32>
    %276 = arith.addf %274, %275 : vector<8x128xf32>
    %277 = vector.extract_strided_slice %260 {offsets = [0, 256], sizes = [8, 128], strides = [1, 1]} : vector<8x512xf32> to vector<8x128xf32>
    %278 = math.tanh %277 : vector<8x128xf32>
    %279 = vector.extract_strided_slice %260 {offsets = [0, 384], sizes = [8, 128], strides = [1, 1]} : vector<8x512xf32> to vector<8x128xf32>
    %cst_101 = arith.constant 5.000000e-01 : f32
    %280 = vector.broadcast %cst_101 : f32 to vector<8x128xf32>
    %281 = arith.mulf %280, %279 : vector<8x128xf32>
    %282 = math.tanh %281 : vector<8x128xf32>
    %cst_102 = arith.constant 5.000000e-01 : f32
    %283 = vector.broadcast %cst_102 : f32 to vector<8x128xf32>
    %284 = arith.mulf %283, %282 : vector<8x128xf32>
    %cst_103 = arith.constant 5.000000e-01 : f32
    %285 = vector.broadcast %cst_103 : f32 to vector<8x128xf32>
    %286 = arith.addf %284, %285 : vector<8x128xf32>
    %287 = arith.mulf %276, %242 : vector<8x128xf32>
    %288 = arith.mulf %268, %278 : vector<8x128xf32>
    %289 = arith.addf %287, %288 : vector<8x128xf32>
    %290 = math.tanh %289 : vector<8x128xf32>
    %291 = arith.mulf %286, %290 : vector<8x128xf32>
    %c8_i32_104 = arith.constant 8 : i32
    %292 = arith.muli %c5_i32, %c8_i32_104 : i32
    %c0_i32_105 = arith.constant 0 : i32
    %293 = arith.addi %c0_i32_105, %292 : i32
    %294 = tpu.assume_multiple %293, 8 : i32
    %295 = arith.truncf %291 : vector<8x128xf32> to vector<8x128xbf16>
    %296 = arith.index_cast %294 : i32 to index
    %c0_106 = arith.constant 0 : index
    %297 = vector.load %arg11[%296, %c0_106] : memref<64x128xbf16, #tpu.memory_space<vmem>>, vector<8x128xbf16>
    tpu.vector_store %arg11[%296, %c0_106], %295 {strides = array<i32>} : memref<64x128xbf16, #tpu.memory_space<vmem>>, vector<8x128xbf16>,
    %c6_i32 = arith.constant 6 : i32
    %c8_i32_107 = arith.constant 8 : i32
    %298 = arith.muli %c6_i32, %c8_i32_107 : i32
    %299 = tpu.assume_multiple %298, 8 : i32
    %300 = arith.index_cast %299 : i32 to index
    %c0_108 = arith.constant 0 : index
    %301 = vector.load %arg10[%300, %c0_108] : memref<64x512xbf16, #tpu.memory_space<vmem>>, vector<8x512xbf16>
    %302 = arith.extf %301 : vector<8x512xbf16> to vector<8x512xf32>
    %303 = vector.broadcast %7 : vector<1x512xf32> to vector<8x512xf32>
    %304 = arith.addf %302, %303 : vector<8x512xf32>
    %305 = arith.truncf %291 : vector<8x128xf32> to vector<8x128xbf16>
    %cst_109 = arith.constant dense<0.000000e+00> : vector<8x512xf32>
    %306 = tpu.matmul %305, %5, %cst_109 {dimension_numbers = #tpu.dot_dimension_numbers<[1], [0], [0], [1], [0, 0, 1, 1], [], []>} : vector<8x128xbf16>, vector<128x512xbf16>, vector<8x512xf32> -> vector<8x512xf32>
    %307 = arith.addf %304, %306 : vector<8x512xf32>
    %308 = vector.extract_strided_slice %307 {offsets = [0, 0], sizes = [8, 128], strides = [1, 1]} : vector<8x512xf32> to vector<8x128xf32>
    %cst_110 = arith.constant 5.000000e-01 : f32
    %309 = vector.broadcast %cst_110 : f32 to vector<8x128xf32>
    %310 = arith.mulf %309, %308 : vector<8x128xf32>
    %311 = math.tanh %310 : vector<8x128xf32>
    %cst_111 = arith.constant 5.000000e-01 : f32
    %312 = vector.broadcast %cst_111 : f32 to vector<8x128xf32>
    %313 = arith.mulf %312, %311 : vector<8x128xf32>
    %cst_112 = arith.constant 5.000000e-01 : f32
    %314 = vector.broadcast %cst_112 : f32 to vector<8x128xf32>
    %315 = arith.addf %313, %314 : vector<8x128xf32>
    %316 = vector.extract_strided_slice %307 {offsets = [0, 128], sizes = [8, 128], strides = [1, 1]} : vector<8x512xf32> to vector<8x128xf32>
    %cst_113 = arith.constant 5.000000e-01 : f32
    %317 = vector.broadcast %cst_113 : f32 to vector<8x128xf32>
    %318 = arith.mulf %317, %316 : vector<8x128xf32>
    %319 = math.tanh %318 : vector<8x128xf32>
    %cst_114 = arith.constant 5.000000e-01 : f32
    %320 = vector.broadcast %cst_114 : f32 to vector<8x128xf32>
    %321 = arith.mulf %320, %319 : vector<8x128xf32>
    %cst_115 = arith.constant 5.000000e-01 : f32
    %322 = vector.broadcast %cst_115 : f32 to vector<8x128xf32>
    %323 = arith.addf %321, %322 : vector<8x128xf32>
    %324 = vector.extract_strided_slice %307 {offsets = [0, 256], sizes = [8, 128], strides = [1, 1]} : vector<8x512xf32> to vector<8x128xf32>
    %325 = math.tanh %324 : vector<8x128xf32>
    %326 = vector.extract_strided_slice %307 {offsets = [0, 384], sizes = [8, 128], strides = [1, 1]} : vector<8x512xf32> to vector<8x128xf32>
    %cst_116 = arith.constant 5.000000e-01 : f32
    %327 = vector.broadcast %cst_116 : f32 to vector<8x128xf32>
    %328 = arith.mulf %327, %326 : vector<8x128xf32>
    %329 = math.tanh %328 : vector<8x128xf32>
    %cst_117 = arith.constant 5.000000e-01 : f32
    %330 = vector.broadcast %cst_117 : f32 to vector<8x128xf32>
    %331 = arith.mulf %330, %329 : vector<8x128xf32>
    %cst_118 = arith.constant 5.000000e-01 : f32
    %332 = vector.broadcast %cst_118 : f32 to vector<8x128xf32>
    %333 = arith.addf %331, %332 : vector<8x128xf32>
    %334 = arith.mulf %323, %289 : vector<8x128xf32>
    %335 = arith.mulf %315, %325 : vector<8x128xf32>
    %336 = arith.addf %334, %335 : vector<8x128xf32>
    %337 = math.tanh %336 : vector<8x128xf32>
    %338 = arith.mulf %333, %337 : vector<8x128xf32>
    %c8_i32_119 = arith.constant 8 : i32
    %339 = arith.muli %c6_i32, %c8_i32_119 : i32
    %c0_i32_120 = arith.constant 0 : i32
    %340 = arith.addi %c0_i32_120, %339 : i32
    %341 = tpu.assume_multiple %340, 8 : i32
    %342 = arith.truncf %338 : vector<8x128xf32> to vector<8x128xbf16>
    %343 = arith.index_cast %341 : i32 to index
    %c0_121 = arith.constant 0 : index
    %344 = vector.load %arg11[%343, %c0_121] : memref<64x128xbf16, #tpu.memory_space<vmem>>, vector<8x128xbf16>
    tpu.vector_store %arg11[%343, %c0_121], %342 {strides = array<i32>} : memref<64x128xbf16, #tpu.memory_space<vmem>>, vector<8x128xbf16>,
    %c7_i32 = arith.constant 7 : i32
    %c8_i32_122 = arith.constant 8 : i32
    %345 = arith.muli %c7_i32, %c8_i32_122 : i32
    %346 = tpu.assume_multiple %345, 8 : i32
    %347 = arith.index_cast %346 : i32 to index
    %c0_123 = arith.constant 0 : index
    %348 = vector.load %arg10[%347, %c0_123] : memref<64x512xbf16, #tpu.memory_space<vmem>>, vector<8x512xbf16>
    %349 = arith.extf %348 : vector<8x512xbf16> to vector<8x512xf32>
    %350 = vector.broadcast %7 : vector<1x512xf32> to vector<8x512xf32>
    %351 = arith.addf %349, %350 : vector<8x512xf32>
    %352 = arith.truncf %338 : vector<8x128xf32> to vector<8x128xbf16>
    %cst_124 = arith.constant dense<0.000000e+00> : vector<8x512xf32>
    %353 = tpu.matmul %352, %5, %cst_124 {dimension_numbers = #tpu.dot_dimension_numbers<[1], [0], [0], [1], [0, 0, 1, 1], [], []>} : vector<8x128xbf16>, vector<128x512xbf16>, vector<8x512xf32> -> vector<8x512xf32>
    %354 = arith.addf %351, %353 : vector<8x512xf32>
    %355 = vector.extract_strided_slice %354 {offsets = [0, 0], sizes = [8, 128], strides = [1, 1]} : vector<8x512xf32> to vector<8x128xf32>
    %cst_125 = arith.constant 5.000000e-01 : f32
    %356 = vector.broadcast %cst_125 : f32 to vector<8x128xf32>
    %357 = arith.mulf %356, %355 : vector<8x128xf32>
    %358 = math.tanh %357 : vector<8x128xf32>
    %cst_126 = arith.constant 5.000000e-01 : f32
    %359 = vector.broadcast %cst_126 : f32 to vector<8x128xf32>
    %360 = arith.mulf %359, %358 : vector<8x128xf32>
    %cst_127 = arith.constant 5.000000e-01 : f32
    %361 = vector.broadcast %cst_127 : f32 to vector<8x128xf32>
    %362 = arith.addf %360, %361 : vector<8x128xf32>
    %363 = vector.extract_strided_slice %354 {offsets = [0, 128], sizes = [8, 128], strides = [1, 1]} : vector<8x512xf32> to vector<8x128xf32>
    %cst_128 = arith.constant 5.000000e-01 : f32
    %364 = vector.broadcast %cst_128 : f32 to vector<8x128xf32>
    %365 = arith.mulf %364, %363 : vector<8x128xf32>
    %366 = math.tanh %365 : vector<8x128xf32>
    %cst_129 = arith.constant 5.000000e-01 : f32
    %367 = vector.broadcast %cst_129 : f32 to vector<8x128xf32>
    %368 = arith.mulf %367, %366 : vector<8x128xf32>
    %cst_130 = arith.constant 5.000000e-01 : f32
    %369 = vector.broadcast %cst_130 : f32 to vector<8x128xf32>
    %370 = arith.addf %368, %369 : vector<8x128xf32>
    %371 = vector.extract_strided_slice %354 {offsets = [0, 256], sizes = [8, 128], strides = [1, 1]} : vector<8x512xf32> to vector<8x128xf32>
    %372 = math.tanh %371 : vector<8x128xf32>
    %373 = vector.extract_strided_slice %354 {offsets = [0, 384], sizes = [8, 128], strides = [1, 1]} : vector<8x512xf32> to vector<8x128xf32>
    %cst_131 = arith.constant 5.000000e-01 : f32
    %374 = vector.broadcast %cst_131 : f32 to vector<8x128xf32>
    %375 = arith.mulf %374, %373 : vector<8x128xf32>
    %376 = math.tanh %375 : vector<8x128xf32>
    %cst_132 = arith.constant 5.000000e-01 : f32
    %377 = vector.broadcast %cst_132 : f32 to vector<8x128xf32>
    %378 = arith.mulf %377, %376 : vector<8x128xf32>
    %cst_133 = arith.constant 5.000000e-01 : f32
    %379 = vector.broadcast %cst_133 : f32 to vector<8x128xf32>
    %380 = arith.addf %378, %379 : vector<8x128xf32>
    %381 = arith.mulf %370, %336 : vector<8x128xf32>
    %382 = arith.mulf %362, %372 : vector<8x128xf32>
    %383 = arith.addf %381, %382 : vector<8x128xf32>
    %384 = math.tanh %383 : vector<8x128xf32>
    %385 = arith.mulf %380, %384 : vector<8x128xf32>
    %c8_i32_134 = arith.constant 8 : i32
    %386 = arith.muli %c7_i32, %c8_i32_134 : i32
    %c0_i32_135 = arith.constant 0 : i32
    %387 = arith.addi %c0_i32_135, %386 : i32
    %388 = tpu.assume_multiple %387, 8 : i32
    %389 = arith.truncf %385 : vector<8x128xf32> to vector<8x128xbf16>
    %390 = arith.index_cast %388 : i32 to index
    %c0_136 = arith.constant 0 : index
    %391 = vector.load %arg11[%390, %c0_136] : memref<64x128xbf16, #tpu.memory_space<vmem>>, vector<8x128xbf16>
    tpu.vector_store %arg11[%390, %c0_136], %389 {strides = array<i32>} : memref<64x128xbf16, #tpu.memory_space<vmem>>, vector<8x128xbf16>,
    %c8_i32_137 = arith.constant 8 : i32
    %c1 = arith.constant 1 : index
    %c0_138 = arith.constant 0 : index
    %c0_139 = arith.constant 0 : index
    %392 = vector.load %arg5[%c1, %c0_138, %c0_139] : memref<2x128x512xbf16, #tpu.memory_space<vmem>>, vector<1x128x512xbf16>
    %393 = vector.shape_cast %392 : vector<1x128x512xbf16> to vector<128x512xbf16>
    %c1_140 = arith.constant 1 : index
    %c0_141 = arith.constant 0 : index
    %c0_142 = arith.constant 0 : index
    %394 = vector.load %arg6[%c1_140, %c0_141, %c0_142] : memref<2x1x512xf32, #tpu.memory_space<vmem>>, vector<1x1x512xf32>
    %395 = vector.shape_cast %394 : vector<1x1x512xf32> to vector<1x512xf32>
    %cst_143 = arith.constant 0.000000e+00 : f32
    %396 = vector.broadcast %cst_143 : f32 to vector<8x128xf32>
    %cst_144 = arith.constant 0.000000e+00 : f32
    %397 = vector.broadcast %cst_144 : f32 to vector<8x128xf32>
    %cst_145 = arith.constant 0.000000e+00 : f32
    %398 = vector.broadcast %cst_145 : f32 to vector<8x128xf32>
    %c0_146 = arith.constant 0 : index
    %c0_147 = arith.constant 0 : index
    %399 = vector.load %arg11[%c0_146, %c0_147] : memref<64x128xbf16, #tpu.memory_space<vmem>>, vector<64x128xbf16>
    %c0_148 = arith.constant 0 : index
    %c0_149 = arith.constant 0 : index
    %c0_150 = arith.constant 0 : index
    %400 = vector.load %arg4[%c0_148, %c0_149, %c0_150] : memref<1x128x512xbf16, #tpu.memory_space<vmem>>, vector<1x128x512xbf16>
    %401 = vector.shape_cast %400 : vector<1x128x512xbf16> to vector<128x512xbf16>
    %cst_151 = arith.constant dense<0.000000e+00> : vector<64x512xf32>
    %402 = tpu.matmul %399, %401, %cst_151 {dimension_numbers = #tpu.dot_dimension_numbers<[1], [0], [0], [1], [0, 0, 1, 1], [], []>} : vector<64x128xbf16>, vector<128x512xbf16>, vector<64x512xf32> -> vector<64x512xf32>
    %403 = arith.truncf %402 : vector<64x512xf32> to vector<64x512xbf16>
    %c0_152 = arith.constant 0 : index
    %c0_153 = arith.constant 0 : index
    %404 = vector.load %arg10[%c0_152, %c0_153] : memref<64x512xbf16, #tpu.memory_space<vmem>>, vector<64x512xbf16>
    tpu.vector_store %arg10[%c0_152, %c0_153], %403 {strides = array<i32>} : memref<64x512xbf16, #tpu.memory_space<vmem>>, vector<64x512xbf16>,
    %c0_i32_154 = arith.constant 0 : i32
    %c8_i32_155 = arith.constant 8 : i32
    %405 = arith.muli %c0_i32_154, %c8_i32_155 : i32
    %406 = tpu.assume_multiple %405, 8 : i32
    %407 = arith.index_cast %406 : i32 to index
    %c0_156 = arith.constant 0 : index
    %408 = vector.load %arg10[%407, %c0_156] : memref<64x512xbf16, #tpu.memory_space<vmem>>, vector<8x512xbf16>
    %409 = arith.extf %408 : vector<8x512xbf16> to vector<8x512xf32>
    %410 = vector.broadcast %395 : vector<1x512xf32> to vector<8x512xf32>
    %411 = arith.addf %409, %410 : vector<8x512xf32>
    %412 = arith.truncf %396 : vector<8x128xf32> to vector<8x128xbf16>
    %cst_157 = arith.constant dense<0.000000e+00> : vector<8x512xf32>
    %413 = tpu.matmul %412, %393, %cst_157 {dimension_numbers = #tpu.dot_dimension_numbers<[1], [0], [0], [1], [0, 0, 1, 1], [], []>} : vector<8x128xbf16>, vector<128x512xbf16>, vector<8x512xf32> -> vector<8x512xf32>
    %414 = arith.addf %411, %413 : vector<8x512xf32>
    %415 = vector.extract_strided_slice %414 {offsets = [0, 0], sizes = [8, 128], strides = [1, 1]} : vector<8x512xf32> to vector<8x128xf32>
    %cst_158 = arith.constant 5.000000e-01 : f32
    %416 = vector.broadcast %cst_158 : f32 to vector<8x128xf32>
    %417 = arith.mulf %416, %415 : vector<8x128xf32>
    %418 = math.tanh %417 : vector<8x128xf32>
    %cst_159 = arith.constant 5.000000e-01 : f32
    %419 = vector.broadcast %cst_159 : f32 to vector<8x128xf32>
    %420 = arith.mulf %419, %418 : vector<8x128xf32>
    %cst_160 = arith.constant 5.000000e-01 : f32
    %421 = vector.broadcast %cst_160 : f32 to vector<8x128xf32>
    %422 = arith.addf %420, %421 : vector<8x128xf32>
    %423 = vector.extract_strided_slice %414 {offsets = [0, 128], sizes = [8, 128], strides = [1, 1]} : vector<8x512xf32> to vector<8x128xf32>
    %cst_161 = arith.constant 5.000000e-01 : f32
    %424 = vector.broadcast %cst_161 : f32 to vector<8x128xf32>
    %425 = arith.mulf %424, %423 : vector<8x128xf32>
    %426 = math.tanh %425 : vector<8x128xf32>
    %cst_162 = arith.constant 5.000000e-01 : f32
    %427 = vector.broadcast %cst_162 : f32 to vector<8x128xf32>
    %428 = arith.mulf %427, %426 : vector<8x128xf32>
    %cst_163 = arith.constant 5.000000e-01 : f32
    %429 = vector.broadcast %cst_163 : f32 to vector<8x128xf32>
    %430 = arith.addf %428, %429 : vector<8x128xf32>
    %431 = vector.extract_strided_slice %414 {offsets = [0, 256], sizes = [8, 128], strides = [1, 1]} : vector<8x512xf32> to vector<8x128xf32>
    %432 = math.tanh %431 : vector<8x128xf32>
    %433 = vector.extract_strided_slice %414 {offsets = [0, 384], sizes = [8, 128], strides = [1, 1]} : vector<8x512xf32> to vector<8x128xf32>
    %cst_164 = arith.constant 5.000000e-01 : f32
    %434 = vector.broadcast %cst_164 : f32 to vector<8x128xf32>
    %435 = arith.mulf %434, %433 : vector<8x128xf32>
    %436 = math.tanh %435 : vector<8x128xf32>
    %cst_165 = arith.constant 5.000000e-01 : f32
    %437 = vector.broadcast %cst_165 : f32 to vector<8x128xf32>
    %438 = arith.mulf %437, %436 : vector<8x128xf32>
    %cst_166 = arith.constant 5.000000e-01 : f32
    %439 = vector.broadcast %cst_166 : f32 to vector<8x128xf32>
    %440 = arith.addf %438, %439 : vector<8x128xf32>
    %441 = arith.mulf %430, %397 : vector<8x128xf32>
    %442 = arith.mulf %422, %432 : vector<8x128xf32>
    %443 = arith.addf %441, %442 : vector<8x128xf32>
    %444 = math.tanh %443 : vector<8x128xf32>
    %445 = arith.mulf %440, %444 : vector<8x128xf32>
    %c0_i32_167 = arith.constant 0 : i32
    %446 = arith.addi %c0_i32_167, %c0_i32_154 : i32
    %447 = vector.broadcast %446 : i32 to vector<8x1xi32>
    %448 = arith.cmpi eq, %3, %447 : vector<8x1xi32>
    %449 = vector.shape_cast %448 : vector<8x1xi1> to vector<8x1xi1>
    %450 = vector.broadcast %449 : vector<8x1xi1> to vector<8x128xi1>
    %451 = arith.select %450, %445, %398 : vector<8x128xi1>, vector<8x128xf32>
    %c1_i32_168 = arith.constant 1 : i32
    %c8_i32_169 = arith.constant 8 : i32
    %452 = arith.muli %c1_i32_168, %c8_i32_169 : i32
    %453 = tpu.assume_multiple %452, 8 : i32
    %454 = arith.index_cast %453 : i32 to index
    %c0_170 = arith.constant 0 : index
    %455 = vector.load %arg10[%454, %c0_170] : memref<64x512xbf16, #tpu.memory_space<vmem>>, vector<8x512xbf16>
    %456 = arith.extf %455 : vector<8x512xbf16> to vector<8x512xf32>
    %457 = vector.broadcast %395 : vector<1x512xf32> to vector<8x512xf32>
    %458 = arith.addf %456, %457 : vector<8x512xf32>
    %459 = arith.truncf %445 : vector<8x128xf32> to vector<8x128xbf16>
    %cst_171 = arith.constant dense<0.000000e+00> : vector<8x512xf32>
    %460 = tpu.matmul %459, %393, %cst_171 {dimension_numbers = #tpu.dot_dimension_numbers<[1], [0], [0], [1], [0, 0, 1, 1], [], []>} : vector<8x128xbf16>, vector<128x512xbf16>, vector<8x512xf32> -> vector<8x512xf32>
    %461 = arith.addf %458, %460 : vector<8x512xf32>
    %462 = vector.extract_strided_slice %461 {offsets = [0, 0], sizes = [8, 128], strides = [1, 1]} : vector<8x512xf32> to vector<8x128xf32>
    %cst_172 = arith.constant 5.000000e-01 : f32
    %463 = vector.broadcast %cst_172 : f32 to vector<8x128xf32>
    %464 = arith.mulf %463, %462 : vector<8x128xf32>
    %465 = math.tanh %464 : vector<8x128xf32>
    %cst_173 = arith.constant 5.000000e-01 : f32
    %466 = vector.broadcast %cst_173 : f32 to vector<8x128xf32>
    %467 = arith.mulf %466, %465 : vector<8x128xf32>
    %cst_174 = arith.constant 5.000000e-01 : f32
    %468 = vector.broadcast %cst_174 : f32 to vector<8x128xf32>
    %469 = arith.addf %467, %468 : vector<8x128xf32>
    %470 = vector.extract_strided_slice %461 {offsets = [0, 128], sizes = [8, 128], strides = [1, 1]} : vector<8x512xf32> to vector<8x128xf32>
    %cst_175 = arith.constant 5.000000e-01 : f32
    %471 = vector.broadcast %cst_175 : f32 to vector<8x128xf32>
    %472 = arith.mulf %471, %470 : vector<8x128xf32>
    %473 = math.tanh %472 : vector<8x128xf32>
    %cst_176 = arith.constant 5.000000e-01 : f32
    %474 = vector.broadcast %cst_176 : f32 to vector<8x128xf32>
    %475 = arith.mulf %474, %473 : vector<8x128xf32>
    %cst_177 = arith.constant 5.000000e-01 : f32
    %476 = vector.broadcast %cst_177 : f32 to vector<8x128xf32>
    %477 = arith.addf %475, %476 : vector<8x128xf32>
    %478 = vector.extract_strided_slice %461 {offsets = [0, 256], sizes = [8, 128], strides = [1, 1]} : vector<8x512xf32> to vector<8x128xf32>
    %479 = math.tanh %478 : vector<8x128xf32>
    %480 = vector.extract_strided_slice %461 {offsets = [0, 384], sizes = [8, 128], strides = [1, 1]} : vector<8x512xf32> to vector<8x128xf32>
    %cst_178 = arith.constant 5.000000e-01 : f32
    %481 = vector.broadcast %cst_178 : f32 to vector<8x128xf32>
    %482 = arith.mulf %481, %480 : vector<8x128xf32>
    %483 = math.tanh %482 : vector<8x128xf32>
    %cst_179 = arith.constant 5.000000e-01 : f32
    %484 = vector.broadcast %cst_179 : f32 to vector<8x128xf32>
    %485 = arith.mulf %484, %483 : vector<8x128xf32>
    %cst_180 = arith.constant 5.000000e-01 : f32
    %486 = vector.broadcast %cst_180 : f32 to vector<8x128xf32>
    %487 = arith.addf %485, %486 : vector<8x128xf32>
    %488 = arith.mulf %477, %443 : vector<8x128xf32>
    %489 = arith.mulf %469, %479 : vector<8x128xf32>
    %490 = arith.addf %488, %489 : vector<8x128xf32>
    %491 = math.tanh %490 : vector<8x128xf32>
    %492 = arith.mulf %487, %491 : vector<8x128xf32>
    %c0_i32_181 = arith.constant 0 : i32
    %493 = arith.addi %c0_i32_181, %c1_i32_168 : i32
    %494 = vector.broadcast %493 : i32 to vector<8x1xi32>
    %495 = arith.cmpi eq, %3, %494 : vector<8x1xi32>
    %496 = vector.shape_cast %495 : vector<8x1xi1> to vector<8x1xi1>
    %497 = vector.broadcast %496 : vector<8x1xi1> to vector<8x128xi1>
    %498 = arith.select %497, %492, %451 : vector<8x128xi1>, vector<8x128xf32>
    %c2_i32_182 = arith.constant 2 : i32
    %c8_i32_183 = arith.constant 8 : i32
    %499 = arith.muli %c2_i32_182, %c8_i32_183 : i32
    %500 = tpu.assume_multiple %499, 8 : i32
    %501 = arith.index_cast %500 : i32 to index
    %c0_184 = arith.constant 0 : index
    %502 = vector.load %arg10[%501, %c0_184] : memref<64x512xbf16, #tpu.memory_space<vmem>>, vector<8x512xbf16>
    %503 = arith.extf %502 : vector<8x512xbf16> to vector<8x512xf32>
    %504 = vector.broadcast %395 : vector<1x512xf32> to vector<8x512xf32>
    %505 = arith.addf %503, %504 : vector<8x512xf32>
    %506 = arith.truncf %492 : vector<8x128xf32> to vector<8x128xbf16>
    %cst_185 = arith.constant dense<0.000000e+00> : vector<8x512xf32>
    %507 = tpu.matmul %506, %393, %cst_185 {dimension_numbers = #tpu.dot_dimension_numbers<[1], [0], [0], [1], [0, 0, 1, 1], [], []>} : vector<8x128xbf16>, vector<128x512xbf16>, vector<8x512xf32> -> vector<8x512xf32>
    %508 = arith.addf %505, %507 : vector<8x512xf32>
    %509 = vector.extract_strided_slice %508 {offsets = [0, 0], sizes = [8, 128], strides = [1, 1]} : vector<8x512xf32> to vector<8x128xf32>
    %cst_186 = arith.constant 5.000000e-01 : f32
    %510 = vector.broadcast %cst_186 : f32 to vector<8x128xf32>
    %511 = arith.mulf %510, %509 : vector<8x128xf32>
    %512 = math.tanh %511 : vector<8x128xf32>
    %cst_187 = arith.constant 5.000000e-01 : f32
    %513 = vector.broadcast %cst_187 : f32 to vector<8x128xf32>
    %514 = arith.mulf %513, %512 : vector<8x128xf32>
    %cst_188 = arith.constant 5.000000e-01 : f32
    %515 = vector.broadcast %cst_188 : f32 to vector<8x128xf32>
    %516 = arith.addf %514, %515 : vector<8x128xf32>
    %517 = vector.extract_strided_slice %508 {offsets = [0, 128], sizes = [8, 128], strides = [1, 1]} : vector<8x512xf32> to vector<8x128xf32>
    %cst_189 = arith.constant 5.000000e-01 : f32
    %518 = vector.broadcast %cst_189 : f32 to vector<8x128xf32>
    %519 = arith.mulf %518, %517 : vector<8x128xf32>
    %520 = math.tanh %519 : vector<8x128xf32>
    %cst_190 = arith.constant 5.000000e-01 : f32
    %521 = vector.broadcast %cst_190 : f32 to vector<8x128xf32>
    %522 = arith.mulf %521, %520 : vector<8x128xf32>
    %cst_191 = arith.constant 5.000000e-01 : f32
    %523 = vector.broadcast %cst_191 : f32 to vector<8x128xf32>
    %524 = arith.addf %522, %523 : vector<8x128xf32>
    %525 = vector.extract_strided_slice %508 {offsets = [0, 256], sizes = [8, 128], strides = [1, 1]} : vector<8x512xf32> to vector<8x128xf32>
    %526 = math.tanh %525 : vector<8x128xf32>
    %527 = vector.extract_strided_slice %508 {offsets = [0, 384], sizes = [8, 128], strides = [1, 1]} : vector<8x512xf32> to vector<8x128xf32>
    %cst_192 = arith.constant 5.000000e-01 : f32
    %528 = vector.broadcast %cst_192 : f32 to vector<8x128xf32>
    %529 = arith.mulf %528, %527 : vector<8x128xf32>
    %530 = math.tanh %529 : vector<8x128xf32>
    %cst_193 = arith.constant 5.000000e-01 : f32
    %531 = vector.broadcast %cst_193 : f32 to vector<8x128xf32>
    %532 = arith.mulf %531, %530 : vector<8x128xf32>
    %cst_194 = arith.constant 5.000000e-01 : f32
    %533 = vector.broadcast %cst_194 : f32 to vector<8x128xf32>
    %534 = arith.addf %532, %533 : vector<8x128xf32>
    %535 = arith.mulf %524, %490 : vector<8x128xf32>
    %536 = arith.mulf %516, %526 : vector<8x128xf32>
    %537 = arith.addf %535, %536 : vector<8x128xf32>
    %538 = math.tanh %537 : vector<8x128xf32>
    %539 = arith.mulf %534, %538 : vector<8x128xf32>
    %c0_i32_195 = arith.constant 0 : i32
    %540 = arith.addi %c0_i32_195, %c2_i32_182 : i32
    %541 = vector.broadcast %540 : i32 to vector<8x1xi32>
    %542 = arith.cmpi eq, %3, %541 : vector<8x1xi32>
    %543 = vector.shape_cast %542 : vector<8x1xi1> to vector<8x1xi1>
    %544 = vector.broadcast %543 : vector<8x1xi1> to vector<8x128xi1>
    %545 = arith.select %544, %539, %498 : vector<8x128xi1>, vector<8x128xf32>
    %c3_i32_196 = arith.constant 3 : i32
    %c8_i32_197 = arith.constant 8 : i32
    %546 = arith.muli %c3_i32_196, %c8_i32_197 : i32
    %547 = tpu.assume_multiple %546, 8 : i32
    %548 = arith.index_cast %547 : i32 to index
    %c0_198 = arith.constant 0 : index
    %549 = vector.load %arg10[%548, %c0_198] : memref<64x512xbf16, #tpu.memory_space<vmem>>, vector<8x512xbf16>
    %550 = arith.extf %549 : vector<8x512xbf16> to vector<8x512xf32>
    %551 = vector.broadcast %395 : vector<1x512xf32> to vector<8x512xf32>
    %552 = arith.addf %550, %551 : vector<8x512xf32>
    %553 = arith.truncf %539 : vector<8x128xf32> to vector<8x128xbf16>
    %cst_199 = arith.constant dense<0.000000e+00> : vector<8x512xf32>
    %554 = tpu.matmul %553, %393, %cst_199 {dimension_numbers = #tpu.dot_dimension_numbers<[1], [0], [0], [1], [0, 0, 1, 1], [], []>} : vector<8x128xbf16>, vector<128x512xbf16>, vector<8x512xf32> -> vector<8x512xf32>
    %555 = arith.addf %552, %554 : vector<8x512xf32>
    %556 = vector.extract_strided_slice %555 {offsets = [0, 0], sizes = [8, 128], strides = [1, 1]} : vector<8x512xf32> to vector<8x128xf32>
    %cst_200 = arith.constant 5.000000e-01 : f32
    %557 = vector.broadcast %cst_200 : f32 to vector<8x128xf32>
    %558 = arith.mulf %557, %556 : vector<8x128xf32>
    %559 = math.tanh %558 : vector<8x128xf32>
    %cst_201 = arith.constant 5.000000e-01 : f32
    %560 = vector.broadcast %cst_201 : f32 to vector<8x128xf32>
    %561 = arith.mulf %560, %559 : vector<8x128xf32>
    %cst_202 = arith.constant 5.000000e-01 : f32
    %562 = vector.broadcast %cst_202 : f32 to vector<8x128xf32>
    %563 = arith.addf %561, %562 : vector<8x128xf32>
    %564 = vector.extract_strided_slice %555 {offsets = [0, 128], sizes = [8, 128], strides = [1, 1]} : vector<8x512xf32> to vector<8x128xf32>
    %cst_203 = arith.constant 5.000000e-01 : f32
    %565 = vector.broadcast %cst_203 : f32 to vector<8x128xf32>
    %566 = arith.mulf %565, %564 : vector<8x128xf32>
    %567 = math.tanh %566 : vector<8x128xf32>
    %cst_204 = arith.constant 5.000000e-01 : f32
    %568 = vector.broadcast %cst_204 : f32 to vector<8x128xf32>
    %569 = arith.mulf %568, %567 : vector<8x128xf32>
    %cst_205 = arith.constant 5.000000e-01 : f32
    %570 = vector.broadcast %cst_205 : f32 to vector<8x128xf32>
    %571 = arith.addf %569, %570 : vector<8x128xf32>
    %572 = vector.extract_strided_slice %555 {offsets = [0, 256], sizes = [8, 128], strides = [1, 1]} : vector<8x512xf32> to vector<8x128xf32>
    %573 = math.tanh %572 : vector<8x128xf32>
    %574 = vector.extract_strided_slice %555 {offsets = [0, 384], sizes = [8, 128], strides = [1, 1]} : vector<8x512xf32> to vector<8x128xf32>
    %cst_206 = arith.constant 5.000000e-01 : f32
    %575 = vector.broadcast %cst_206 : f32 to vector<8x128xf32>
    %576 = arith.mulf %575, %574 : vector<8x128xf32>
    %577 = math.tanh %576 : vector<8x128xf32>
    %cst_207 = arith.constant 5.000000e-01 : f32
    %578 = vector.broadcast %cst_207 : f32 to vector<8x128xf32>
    %579 = arith.mulf %578, %577 : vector<8x128xf32>
    %cst_208 = arith.constant 5.000000e-01 : f32
    %580 = vector.broadcast %cst_208 : f32 to vector<8x128xf32>
    %581 = arith.addf %579, %580 : vector<8x128xf32>
    %582 = arith.mulf %571, %537 : vector<8x128xf32>
    %583 = arith.mulf %563, %573 : vector<8x128xf32>
    %584 = arith.addf %582, %583 : vector<8x128xf32>
    %585 = math.tanh %584 : vector<8x128xf32>
    %586 = arith.mulf %581, %585 : vector<8x128xf32>
    %c0_i32_209 = arith.constant 0 : i32
    %587 = arith.addi %c0_i32_209, %c3_i32_196 : i32
    %588 = vector.broadcast %587 : i32 to vector<8x1xi32>
    %589 = arith.cmpi eq, %3, %588 : vector<8x1xi32>
    %590 = vector.shape_cast %589 : vector<8x1xi1> to vector<8x1xi1>
    %591 = vector.broadcast %590 : vector<8x1xi1> to vector<8x128xi1>
    %592 = arith.select %591, %586, %545 : vector<8x128xi1>, vector<8x128xf32>
    %c4_i32_210 = arith.constant 4 : i32
    %c8_i32_211 = arith.constant 8 : i32
    %593 = arith.muli %c4_i32_210, %c8_i32_211 : i32
    %594 = tpu.assume_multiple %593, 8 : i32
    %595 = arith.index_cast %594 : i32 to index
    %c0_212 = arith.constant 0 : index
    %596 = vector.load %arg10[%595, %c0_212] : memref<64x512xbf16, #tpu.memory_space<vmem>>, vector<8x512xbf16>
    %597 = arith.extf %596 : vector<8x512xbf16> to vector<8x512xf32>
    %598 = vector.broadcast %395 : vector<1x512xf32> to vector<8x512xf32>
    %599 = arith.addf %597, %598 : vector<8x512xf32>
    %600 = arith.truncf %586 : vector<8x128xf32> to vector<8x128xbf16>
    %cst_213 = arith.constant dense<0.000000e+00> : vector<8x512xf32>
    %601 = tpu.matmul %600, %393, %cst_213 {dimension_numbers = #tpu.dot_dimension_numbers<[1], [0], [0], [1], [0, 0, 1, 1], [], []>} : vector<8x128xbf16>, vector<128x512xbf16>, vector<8x512xf32> -> vector<8x512xf32>
    %602 = arith.addf %599, %601 : vector<8x512xf32>
    %603 = vector.extract_strided_slice %602 {offsets = [0, 0], sizes = [8, 128], strides = [1, 1]} : vector<8x512xf32> to vector<8x128xf32>
    %cst_214 = arith.constant 5.000000e-01 : f32
    %604 = vector.broadcast %cst_214 : f32 to vector<8x128xf32>
    %605 = arith.mulf %604, %603 : vector<8x128xf32>
    %606 = math.tanh %605 : vector<8x128xf32>
    %cst_215 = arith.constant 5.000000e-01 : f32
    %607 = vector.broadcast %cst_215 : f32 to vector<8x128xf32>
    %608 = arith.mulf %607, %606 : vector<8x128xf32>
    %cst_216 = arith.constant 5.000000e-01 : f32
    %609 = vector.broadcast %cst_216 : f32 to vector<8x128xf32>
    %610 = arith.addf %608, %609 : vector<8x128xf32>
    %611 = vector.extract_strided_slice %602 {offsets = [0, 128], sizes = [8, 128], strides = [1, 1]} : vector<8x512xf32> to vector<8x128xf32>
    %cst_217 = arith.constant 5.000000e-01 : f32
    %612 = vector.broadcast %cst_217 : f32 to vector<8x128xf32>
    %613 = arith.mulf %612, %611 : vector<8x128xf32>
    %614 = math.tanh %613 : vector<8x128xf32>
    %cst_218 = arith.constant 5.000000e-01 : f32
    %615 = vector.broadcast %cst_218 : f32 to vector<8x128xf32>
    %616 = arith.mulf %615, %614 : vector<8x128xf32>
    %cst_219 = arith.constant 5.000000e-01 : f32
    %617 = vector.broadcast %cst_219 : f32 to vector<8x128xf32>
    %618 = arith.addf %616, %617 : vector<8x128xf32>
    %619 = vector.extract_strided_slice %602 {offsets = [0, 256], sizes = [8, 128], strides = [1, 1]} : vector<8x512xf32> to vector<8x128xf32>
    %620 = math.tanh %619 : vector<8x128xf32>
    %621 = vector.extract_strided_slice %602 {offsets = [0, 384], sizes = [8, 128], strides = [1, 1]} : vector<8x512xf32> to vector<8x128xf32>
    %cst_220 = arith.constant 5.000000e-01 : f32
    %622 = vector.broadcast %cst_220 : f32 to vector<8x128xf32>
    %623 = arith.mulf %622, %621 : vector<8x128xf32>
    %624 = math.tanh %623 : vector<8x128xf32>
    %cst_221 = arith.constant 5.000000e-01 : f32
    %625 = vector.broadcast %cst_221 : f32 to vector<8x128xf32>
    %626 = arith.mulf %625, %624 : vector<8x128xf32>
    %cst_222 = arith.constant 5.000000e-01 : f32
    %627 = vector.broadcast %cst_222 : f32 to vector<8x128xf32>
    %628 = arith.addf %626, %627 : vector<8x128xf32>
    %629 = arith.mulf %618, %584 : vector<8x128xf32>
    %630 = arith.mulf %610, %620 : vector<8x128xf32>
    %631 = arith.addf %629, %630 : vector<8x128xf32>
    %632 = math.tanh %631 : vector<8x128xf32>
    %633 = arith.mulf %628, %632 : vector<8x128xf32>
    %c0_i32_223 = arith.constant 0 : i32
    %634 = arith.addi %c0_i32_223, %c4_i32_210 : i32
    %635 = vector.broadcast %634 : i32 to vector<8x1xi32>
    %636 = arith.cmpi eq, %3, %635 : vector<8x1xi32>
    %637 = vector.shape_cast %636 : vector<8x1xi1> to vector<8x1xi1>
    %638 = vector.broadcast %637 : vector<8x1xi1> to vector<8x128xi1>
    %639 = arith.select %638, %633, %592 : vector<8x128xi1>, vector<8x128xf32>
    %c5_i32_224 = arith.constant 5 : i32
    %c8_i32_225 = arith.constant 8 : i32
    %640 = arith.muli %c5_i32_224, %c8_i32_225 : i32
    %641 = tpu.assume_multiple %640, 8 : i32
    %642 = arith.index_cast %641 : i32 to index
    %c0_226 = arith.constant 0 : index
    %643 = vector.load %arg10[%642, %c0_226] : memref<64x512xbf16, #tpu.memory_space<vmem>>, vector<8x512xbf16>
    %644 = arith.extf %643 : vector<8x512xbf16> to vector<8x512xf32>
    %645 = vector.broadcast %395 : vector<1x512xf32> to vector<8x512xf32>
    %646 = arith.addf %644, %645 : vector<8x512xf32>
    %647 = arith.truncf %633 : vector<8x128xf32> to vector<8x128xbf16>
    %cst_227 = arith.constant dense<0.000000e+00> : vector<8x512xf32>
    %648 = tpu.matmul %647, %393, %cst_227 {dimension_numbers = #tpu.dot_dimension_numbers<[1], [0], [0], [1], [0, 0, 1, 1], [], []>} : vector<8x128xbf16>, vector<128x512xbf16>, vector<8x512xf32> -> vector<8x512xf32>
    %649 = arith.addf %646, %648 : vector<8x512xf32>
    %650 = vector.extract_strided_slice %649 {offsets = [0, 0], sizes = [8, 128], strides = [1, 1]} : vector<8x512xf32> to vector<8x128xf32>
    %cst_228 = arith.constant 5.000000e-01 : f32
    %651 = vector.broadcast %cst_228 : f32 to vector<8x128xf32>
    %652 = arith.mulf %651, %650 : vector<8x128xf32>
    %653 = math.tanh %652 : vector<8x128xf32>
    %cst_229 = arith.constant 5.000000e-01 : f32
    %654 = vector.broadcast %cst_229 : f32 to vector<8x128xf32>
    %655 = arith.mulf %654, %653 : vector<8x128xf32>
    %cst_230 = arith.constant 5.000000e-01 : f32
    %656 = vector.broadcast %cst_230 : f32 to vector<8x128xf32>
    %657 = arith.addf %655, %656 : vector<8x128xf32>
    %658 = vector.extract_strided_slice %649 {offsets = [0, 128], sizes = [8, 128], strides = [1, 1]} : vector<8x512xf32> to vector<8x128xf32>
    %cst_231 = arith.constant 5.000000e-01 : f32
    %659 = vector.broadcast %cst_231 : f32 to vector<8x128xf32>
    %660 = arith.mulf %659, %658 : vector<8x128xf32>
    %661 = math.tanh %660 : vector<8x128xf32>
    %cst_232 = arith.constant 5.000000e-01 : f32
    %662 = vector.broadcast %cst_232 : f32 to vector<8x128xf32>
    %663 = arith.mulf %662, %661 : vector<8x128xf32>
    %cst_233 = arith.constant 5.000000e-01 : f32
    %664 = vector.broadcast %cst_233 : f32 to vector<8x128xf32>
    %665 = arith.addf %663, %664 : vector<8x128xf32>
    %666 = vector.extract_strided_slice %649 {offsets = [0, 256], sizes = [8, 128], strides = [1, 1]} : vector<8x512xf32> to vector<8x128xf32>
    %667 = math.tanh %666 : vector<8x128xf32>
    %668 = vector.extract_strided_slice %649 {offsets = [0, 384], sizes = [8, 128], strides = [1, 1]} : vector<8x512xf32> to vector<8x128xf32>
    %cst_234 = arith.constant 5.000000e-01 : f32
    %669 = vector.broadcast %cst_234 : f32 to vector<8x128xf32>
    %670 = arith.mulf %669, %668 : vector<8x128xf32>
    %671 = math.tanh %670 : vector<8x128xf32>
    %cst_235 = arith.constant 5.000000e-01 : f32
    %672 = vector.broadcast %cst_235 : f32 to vector<8x128xf32>
    %673 = arith.mulf %672, %671 : vector<8x128xf32>
    %cst_236 = arith.constant 5.000000e-01 : f32
    %674 = vector.broadcast %cst_236 : f32 to vector<8x128xf32>
    %675 = arith.addf %673, %674 : vector<8x128xf32>
    %676 = arith.mulf %665, %631 : vector<8x128xf32>
    %677 = arith.mulf %657, %667 : vector<8x128xf32>
    %678 = arith.addf %676, %677 : vector<8x128xf32>
    %679 = math.tanh %678 : vector<8x128xf32>
    %680 = arith.mulf %675, %679 : vector<8x128xf32>
    %c0_i32_237 = arith.constant 0 : i32
    %681 = arith.addi %c0_i32_237, %c5_i32_224 : i32
    %682 = vector.broadcast %681 : i32 to vector<8x1xi32>
    %683 = arith.cmpi eq, %3, %682 : vector<8x1xi32>
    %684 = vector.shape_cast %683 : vector<8x1xi1> to vector<8x1xi1>
    %685 = vector.broadcast %684 : vector<8x1xi1> to vector<8x128xi1>
    %686 = arith.select %685, %680, %639 : vector<8x128xi1>, vector<8x128xf32>
    %c6_i32_238 = arith.constant 6 : i32
    %c8_i32_239 = arith.constant 8 : i32
    %687 = arith.muli %c6_i32_238, %c8_i32_239 : i32
    %688 = tpu.assume_multiple %687, 8 : i32
    %689 = arith.index_cast %688 : i32 to index
    %c0_240 = arith.constant 0 : index
    %690 = vector.load %arg10[%689, %c0_240] : memref<64x512xbf16, #tpu.memory_space<vmem>>, vector<8x512xbf16>
    %691 = arith.extf %690 : vector<8x512xbf16> to vector<8x512xf32>
    %692 = vector.broadcast %395 : vector<1x512xf32> to vector<8x512xf32>
    %693 = arith.addf %691, %692 : vector<8x512xf32>
    %694 = arith.truncf %680 : vector<8x128xf32> to vector<8x128xbf16>
    %cst_241 = arith.constant dense<0.000000e+00> : vector<8x512xf32>
    %695 = tpu.matmul %694, %393, %cst_241 {dimension_numbers = #tpu.dot_dimension_numbers<[1], [0], [0], [1], [0, 0, 1, 1], [], []>} : vector<8x128xbf16>, vector<128x512xbf16>, vector<8x512xf32> -> vector<8x512xf32>
    %696 = arith.addf %693, %695 : vector<8x512xf32>
    %697 = vector.extract_strided_slice %696 {offsets = [0, 0], sizes = [8, 128], strides = [1, 1]} : vector<8x512xf32> to vector<8x128xf32>
    %cst_242 = arith.constant 5.000000e-01 : f32
    %698 = vector.broadcast %cst_242 : f32 to vector<8x128xf32>
    %699 = arith.mulf %698, %697 : vector<8x128xf32>
    %700 = math.tanh %699 : vector<8x128xf32>
    %cst_243 = arith.constant 5.000000e-01 : f32
    %701 = vector.broadcast %cst_243 : f32 to vector<8x128xf32>
    %702 = arith.mulf %701, %700 : vector<8x128xf32>
    %cst_244 = arith.constant 5.000000e-01 : f32
    %703 = vector.broadcast %cst_244 : f32 to vector<8x128xf32>
    %704 = arith.addf %702, %703 : vector<8x128xf32>
    %705 = vector.extract_strided_slice %696 {offsets = [0, 128], sizes = [8, 128], strides = [1, 1]} : vector<8x512xf32> to vector<8x128xf32>
    %cst_245 = arith.constant 5.000000e-01 : f32
    %706 = vector.broadcast %cst_245 : f32 to vector<8x128xf32>
    %707 = arith.mulf %706, %705 : vector<8x128xf32>
    %708 = math.tanh %707 : vector<8x128xf32>
    %cst_246 = arith.constant 5.000000e-01 : f32
    %709 = vector.broadcast %cst_246 : f32 to vector<8x128xf32>
    %710 = arith.mulf %709, %708 : vector<8x128xf32>
    %cst_247 = arith.constant 5.000000e-01 : f32
    %711 = vector.broadcast %cst_247 : f32 to vector<8x128xf32>
    %712 = arith.addf %710, %711 : vector<8x128xf32>
    %713 = vector.extract_strided_slice %696 {offsets = [0, 256], sizes = [8, 128], strides = [1, 1]} : vector<8x512xf32> to vector<8x128xf32>
    %714 = math.tanh %713 : vector<8x128xf32>
    %715 = vector.extract_strided_slice %696 {offsets = [0, 384], sizes = [8, 128], strides = [1, 1]} : vector<8x512xf32> to vector<8x128xf32>
    %cst_248 = arith.constant 5.000000e-01 : f32
    %716 = vector.broadcast %cst_248 : f32 to vector<8x128xf32>
    %717 = arith.mulf %716, %715 : vector<8x128xf32>
    %718 = math.tanh %717 : vector<8x128xf32>
    %cst_249 = arith.constant 5.000000e-01 : f32
    %719 = vector.broadcast %cst_249 : f32 to vector<8x128xf32>
    %720 = arith.mulf %719, %718 : vector<8x128xf32>
    %cst_250 = arith.constant 5.000000e-01 : f32
    %721 = vector.broadcast %cst_250 : f32 to vector<8x128xf32>
    %722 = arith.addf %720, %721 : vector<8x128xf32>
    %723 = arith.mulf %712, %678 : vector<8x128xf32>
    %724 = arith.mulf %704, %714 : vector<8x128xf32>
    %725 = arith.addf %723, %724 : vector<8x128xf32>
    %726 = math.tanh %725 : vector<8x128xf32>
    %727 = arith.mulf %722, %726 : vector<8x128xf32>
    %c0_i32_251 = arith.constant 0 : i32
    %728 = arith.addi %c0_i32_251, %c6_i32_238 : i32
    %729 = vector.broadcast %728 : i32 to vector<8x1xi32>
    %730 = arith.cmpi eq, %3, %729 : vector<8x1xi32>
    %731 = vector.shape_cast %730 : vector<8x1xi1> to vector<8x1xi1>
    %732 = vector.broadcast %731 : vector<8x1xi1> to vector<8x128xi1>
    %733 = arith.select %732, %727, %686 : vector<8x128xi1>, vector<8x128xf32>
    %c7_i32_252 = arith.constant 7 : i32
    %c8_i32_253 = arith.constant 8 : i32
    %734 = arith.muli %c7_i32_252, %c8_i32_253 : i32
    %735 = tpu.assume_multiple %734, 8 : i32
    %736 = arith.index_cast %735 : i32 to index
    %c0_254 = arith.constant 0 : index
    %737 = vector.load %arg10[%736, %c0_254] : memref<64x512xbf16, #tpu.memory_space<vmem>>, vector<8x512xbf16>
    %738 = arith.extf %737 : vector<8x512xbf16> to vector<8x512xf32>
    %739 = vector.broadcast %395 : vector<1x512xf32> to vector<8x512xf32>
    %740 = arith.addf %738, %739 : vector<8x512xf32>
    %741 = arith.truncf %727 : vector<8x128xf32> to vector<8x128xbf16>
    %cst_255 = arith.constant dense<0.000000e+00> : vector<8x512xf32>
    %742 = tpu.matmul %741, %393, %cst_255 {dimension_numbers = #tpu.dot_dimension_numbers<[1], [0], [0], [1], [0, 0, 1, 1], [], []>} : vector<8x128xbf16>, vector<128x512xbf16>, vector<8x512xf32> -> vector<8x512xf32>
    %743 = arith.addf %740, %742 : vector<8x512xf32>
    %744 = vector.extract_strided_slice %743 {offsets = [0, 0], sizes = [8, 128], strides = [1, 1]} : vector<8x512xf32> to vector<8x128xf32>
    %cst_256 = arith.constant 5.000000e-01 : f32
    %745 = vector.broadcast %cst_256 : f32 to vector<8x128xf32>
    %746 = arith.mulf %745, %744 : vector<8x128xf32>
    %747 = math.tanh %746 : vector<8x128xf32>
    %cst_257 = arith.constant 5.000000e-01 : f32
    %748 = vector.broadcast %cst_257 : f32 to vector<8x128xf32>
    %749 = arith.mulf %748, %747 : vector<8x128xf32>
    %cst_258 = arith.constant 5.000000e-01 : f32
    %750 = vector.broadcast %cst_258 : f32 to vector<8x128xf32>
    %751 = arith.addf %749, %750 : vector<8x128xf32>
    %752 = vector.extract_strided_slice %743 {offsets = [0, 128], sizes = [8, 128], strides = [1, 1]} : vector<8x512xf32> to vector<8x128xf32>
    %cst_259 = arith.constant 5.000000e-01 : f32
    %753 = vector.broadcast %cst_259 : f32 to vector<8x128xf32>
    %754 = arith.mulf %753, %752 : vector<8x128xf32>
    %755 = math.tanh %754 : vector<8x128xf32>
    %cst_260 = arith.constant 5.000000e-01 : f32
    %756 = vector.broadcast %cst_260 : f32 to vector<8x128xf32>
    %757 = arith.mulf %756, %755 : vector<8x128xf32>
    %cst_261 = arith.constant 5.000000e-01 : f32
    %758 = vector.broadcast %cst_261 : f32 to vector<8x128xf32>
    %759 = arith.addf %757, %758 : vector<8x128xf32>
    %760 = vector.extract_strided_slice %743 {offsets = [0, 256], sizes = [8, 128], strides = [1, 1]} : vector<8x512xf32> to vector<8x128xf32>
    %761 = math.tanh %760 : vector<8x128xf32>
    %762 = vector.extract_strided_slice %743 {offsets = [0, 384], sizes = [8, 128], strides = [1, 1]} : vector<8x512xf32> to vector<8x128xf32>
    %cst_262 = arith.constant 5.000000e-01 : f32
    %763 = vector.broadcast %cst_262 : f32 to vector<8x128xf32>
    %764 = arith.mulf %763, %762 : vector<8x128xf32>
    %765 = math.tanh %764 : vector<8x128xf32>
    %cst_263 = arith.constant 5.000000e-01 : f32
    %766 = vector.broadcast %cst_263 : f32 to vector<8x128xf32>
    %767 = arith.mulf %766, %765 : vector<8x128xf32>
    %cst_264 = arith.constant 5.000000e-01 : f32
    %768 = vector.broadcast %cst_264 : f32 to vector<8x128xf32>
    %769 = arith.addf %767, %768 : vector<8x128xf32>
    %770 = arith.mulf %759, %725 : vector<8x128xf32>
    %771 = arith.mulf %751, %761 : vector<8x128xf32>
    %772 = arith.addf %770, %771 : vector<8x128xf32>
    %773 = math.tanh %772 : vector<8x128xf32>
    %774 = arith.mulf %769, %773 : vector<8x128xf32>
    %c0_i32_265 = arith.constant 0 : i32
    %775 = arith.addi %c0_i32_265, %c7_i32_252 : i32
    %776 = vector.broadcast %775 : i32 to vector<8x1xi32>
    %777 = arith.cmpi eq, %3, %776 : vector<8x1xi32>
    %778 = vector.shape_cast %777 : vector<8x1xi1> to vector<8x1xi1>
    %779 = vector.broadcast %778 : vector<8x1xi1> to vector<8x128xi1>
    %780 = arith.select %779, %774, %733 : vector<8x128xi1>, vector<8x128xf32>
    %c8_i32_266 = arith.constant 8 : i32
    %781 = arith.truncf %780 : vector<8x128xf32> to vector<8x128xbf16>
    %c0_267 = arith.constant 0 : index
    %c0_268 = arith.constant 0 : index
    %782 = vector.load %arg7[%c0_267, %c0_268] : memref<128x128xbf16, #tpu.memory_space<vmem>>, vector<128x128xbf16>
    %cst_269 = arith.constant dense<0.000000e+00> : vector<8x128xf32>
    %783 = tpu.matmul %781, %782, %cst_269 {dimension_numbers = #tpu.dot_dimension_numbers<[1], [0], [0], [1], [0, 0, 1, 1], [], []>} : vector<8x128xbf16>, vector<128x128xbf16>, vector<8x128xf32> -> vector<8x128xf32>
    %c0_270 = arith.constant 0 : index
    %c0_271 = arith.constant 0 : index
    %784 = vector.load %arg8[%c0_270, %c0_271] : memref<1x128xf32, #tpu.memory_space<vmem>>, vector<1x128xf32>
    %785 = vector.broadcast %784 : vector<1x128xf32> to vector<8x128xf32>
    %786 = arith.addf %783, %785 : vector<8x128xf32>
    %cst_272 = arith.constant dense<0xFF800000> : vector<8xf32>
    %787 = vector.multi_reduction <maximumf>, %786, %cst_272 [1] : vector<8x128xf32> to vector<8xf32>
    %788 = vector.shape_cast %787 : vector<8xf32> to vector<8x1xf32>
    %789 = vector.broadcast %788 : vector<8x1xf32> to vector<8x128xf32>
    %790 = arith.subf %786, %789 : vector<8x128xf32>
    %791 = math.exp %790 : vector<8x128xf32>
    %cst_273 = arith.constant dense<0.000000e+00> : vector<8xf32>
    %792 = vector.multi_reduction <add>, %791, %cst_273 [1] : vector<8x128xf32> to vector<8xf32>
    %793 = vector.shape_cast %792 : vector<8xf32> to vector<8x1xf32>
    %794 = vector.broadcast %793 : vector<8x1xf32> to vector<8x128xf32>
    %795 = arith.divf %791, %794 : vector<8x128xf32>
    %c0_274 = arith.constant 0 : index
    %c0_275 = arith.constant 0 : index
    %c0_276 = arith.constant 0 : index
    %796 = vector.load %arg9[%c0_274, %c0_275, %c0_276] : memref<1x8x128xf32, #tpu.memory_space<vmem>>, vector<1x8x128xf32>
    %797 = vector.shape_cast %796 : vector<1x8x128xf32> to vector<8x128xf32>
    %798 = vector.shape_cast %795 : vector<8x128xf32> to vector<1x8x128xf32>
    tpu.vector_store %arg9[%c0_274, %c0_275, %c0_276], %798 {strides = array<i32>} : memref<1x8x128xf32, #tpu.memory_space<vmem>>, vector<1x8x128xf32>,
    return
  }
  func.func @transform_0(%arg0: i32) -> (i32, i32, i32) {
    %c0_i32 = arith.constant 0 : i32
    %c0_i32_0 = arith.constant 0 : i32
    %c0_i32_1 = arith.constant 0 : i32
    return %arg0, %c0_i32, %c0_i32_0 : i32, i32, i32
  }
  func.func @transform_1(%arg0: i32) -> (i32, i32, i32) {
    %c0_i32 = arith.constant 0 : i32
    %c0_i32_0 = arith.constant 0 : i32
    %c0_i32_1 = arith.constant 0 : i32
    return %arg0, %c0_i32, %c0_i32_0 : i32, i32, i32
  }
  func.func @transform_2(%arg0: i32) -> (i32, i32) {
    %c0_i32 = arith.constant 0 : i32
    %c0_i32_0 = arith.constant 0 : i32
    %c0_i32_1 = arith.constant 0 : i32
    return %c0_i32, %c0_i32_0 : i32, i32
  }
  func.func @transform_3(%arg0: i32) -> (i32, i32, i32) {
    %c0_i32 = arith.constant 0 : i32
    %c0_i32_0 = arith.constant 0 : i32
    %c0_i32_1 = arith.constant 0 : i32
    %c0_i32_2 = arith.constant 0 : i32
    return %c0_i32, %c0_i32_0, %c0_i32_1 : i32, i32, i32
  }
  func.func @transform_4(%arg0: i32) -> (i32, i32, i32) {
    %c0_i32 = arith.constant 0 : i32
    %c0_i32_0 = arith.constant 0 : i32
    %c0_i32_1 = arith.constant 0 : i32
    %c0_i32_2 = arith.constant 0 : i32
    return %c0_i32, %c0_i32_0, %c0_i32_1 : i32, i32, i32
  }
  func.func @transform_5(%arg0: i32) -> (i32, i32, i32) {
    %c0_i32 = arith.constant 0 : i32
    %c0_i32_0 = arith.constant 0 : i32
    %c0_i32_1 = arith.constant 0 : i32
    %c0_i32_2 = arith.constant 0 : i32
    return %c0_i32, %c0_i32_0, %c0_i32_1 : i32, i32, i32
  }
  func.func @transform_6(%arg0: i32) -> (i32, i32) {
    %c0_i32 = arith.constant 0 : i32
    %c0_i32_0 = arith.constant 0 : i32
    %c0_i32_1 = arith.constant 0 : i32
    return %c0_i32, %c0_i32_0 : i32, i32
  }
  func.func @transform_7(%arg0: i32) -> (i32, i32) {
    %c0_i32 = arith.constant 0 : i32
    %c0_i32_0 = arith.constant 0 : i32
    %c0_i32_1 = arith.constant 0 : i32
    return %c0_i32, %c0_i32_0 : i32, i32
  }
  func.func @transform_8(%arg0: i32) -> (i32, i32, i32) {
    %c0_i32 = arith.constant 0 : i32
    %c0_i32_0 = arith.constant 0 : i32
    %c0_i32_1 = arith.constant 0 : i32
    return %arg0, %c0_i32, %c0_i32_0 : i32, i32, i32
  }
}

</mosaic_0001>

<llo_original>
// kernel: tpu_custom_call.1
$region0: #{tpu_custom_call.1}
  #allocation0 [shape = 'u32[]', space=smem, size = 0x4, offset = 0x4, fixed_abs, tag = 'smem constant byte address 0x4 - core index']
  #allocation1 [shape = 'u32[72,128]{1,0:T(1,128)}', space=vmem, size = 0x9000, scoped, tag = 'internal scratch']
  #allocation2 [shape = 'bf16[64,512]{1,0:T(8,128)(2,1)}', space=vmem, size = 0x10000, scoped, tag = 'scratch operand']
  #allocation3 [shape = 'bf16[64,128]{1,0:T(8,128)(2,1)}', space=vmem, size = 0x4000, scoped, tag = 'scratch operand']
  %s0 = inlined_call_operand.hbm [shape: bf16[1,64,128], index: 0, kind: input, shape index: {}]
  %s1 = inlined_call_operand.vmem [shape: s32[1,8,1], index: 1, kind: input, shape index: {}]
  %s2 = inlined_call_operand.hbm [shape: bf16[128,512], index: 2, kind: input, shape index: {}]
  %s3 = inlined_call_operand.hbm [shape: bf16[1,128,512], index: 3, kind: input, shape index: {}]
  %s4 = inlined_call_operand.hbm [shape: bf16[2,128,512], index: 4, kind: input, shape index: {}]
  %s5 = inlined_call_operand.vmem [shape: f32[2,1,512], index: 5, kind: input, shape index: {}]
  %s6 = inlined_call_operand.hbm [shape: bf16[128,128], index: 6, kind: input, shape index: {}]
  %s7 = inlined_call_operand.vmem [shape: f32[1,128], index: 7, kind: input, shape index: {}]
  %s8 = inlined_call_operand.hbm [shape: f32[1,8,128], index: 8, kind: output, shape index: {}]
  %s9 = sld [smem:[#allocation0]]
  $region62: #{tpu_custom_call.1} parent=0
    _
  %s11 = ssub.s32 1, %s9
  %s12 = scalar_select 0, %s11, %s9
  $region1: #{tpu_custom_call.1} parent=0
    #allocation4 [shape = 'u8[16384]{0}', space=vmem, size = 0x4000, scoped, tag = 'input window, operand 0, single buffered']
    #allocation5 [shape = 's32[1]{0}', space=sflag, size = 0x4, scoped, tag = 'scoped memory for tpu_custom_call.1']
    #allocation6 [shape = 's32[1]{0}', space=sflag, size = 0x4, scoped, tag = 'scoped memory for tpu_custom_call.1']
    #allocation7 [shape = 'u8[131072]{0}', space=vmem, size = 0x20000, scoped, tag = 'input window, operand 2, single buffered']
    #allocation8 [shape = 's32[1]{0}', space=sflag, size = 0x4, scoped, tag = 'scoped memory for tpu_custom_call.1']
    #allocation9 [shape = 'u8[131072]{0}', space=vmem, size = 0x20000, scoped, tag = 'input window, operand 3, single buffered']
    #allocation10 [shape = 'u8[262144]{0}', space=vmem, size = 0x40000, scoped, tag = 'input window, operand 4, single buffered']
    #allocation11 [shape = 's32[1]{0}', space=sflag, size = 0x4, scoped, tag = 'scoped memory for tpu_custom_call.1']
    #allocation12 [shape = 'u8[32768]{0}', space=vmem, size = 0x8000, scoped, tag = 'input window, operand 6, single buffered']
    #allocation13 [shape = 'u8[4096]{0}', space=vmem, size = 0x1000, scoped, tag = 'output window, operand 0, single buffered']
    %13 = vsyncpa [#allocation5], 0
    %14 = vsyncpa [#allocation8], 0
    %15 = vsyncpa [#allocation11], 0
    %16 = vsyncpa [#allocation6], 0
    // Predicated region
    $region2: #{tpu_custom_call.1} parent=1 // pred_check
      _
    $region3: #{tpu_custom_call.1} parent=1 // pred_check_branch
      %18 = sbr.rel (0) target = $region5
    $region4: #{tpu_custom_call.1} parent=1 // pred_region
      %20 = vsyncadd [#allocation5], 0
      %s21 = sshll.u32 %s0, 4
      %s22 = int_to_ptr.hbm [resolvable:$true] %s21
      %s23 = sshll.u32 [#allocation4], 4
      %s24 = int_to_ptr.vmem [resolvable:$true] %s23
      %29 = dma.hbm_to_vmem [thread:$0]  %s22, 512, %s24, [#allocation5], 64, 64, 4
    $region5: #{tpu_custom_call.1} parent=1 // pred_fallthru
      _
    // Predicated region
    $region6: #{tpu_custom_call.1} parent=1 // pred_check
      _
    $region7: #{tpu_custom_call.1} parent=1 // pred_check_branch
      %31 = sbr.rel (0) target = $region9
    $region8: #{tpu_custom_call.1} parent=1 // pred_region
      _
    $region9: #{tpu_custom_call.1} parent=1 // pred_fallthru
      _
    // Predicated region
    $region10: #{tpu_custom_call.1} parent=1 // pred_check
      _
    $region11: #{tpu_custom_call.1} parent=1 // pred_check_branch
      %33 = sbr.rel (0) target = $region13
    $region12: #{tpu_custom_call.1} parent=1 // pred_region
      %35 = vsyncadd [#allocation8], 0
      %s36 = sshll.u32 %s2, 4
      %s37 = int_to_ptr.hbm [resolvable:$true] %s36
      %s38 = sshll.u32 [#allocation7], 4
      %s39 = int_to_ptr.vmem [resolvable:$true] %s38
      %44 = dma.hbm_to_vmem [thread:$0]  %s37, 4096, %s39, [#allocation8], 256, 256, 16
    $region13: #{tpu_custom_call.1} parent=1 // pred_fallthru
      _
    // Predicated region
    $region14: #{tpu_custom_call.1} parent=1 // pred_check
      _
    $region15: #{tpu_custom_call.1} parent=1 // pred_check_branch
      %46 = sbr.rel (0) target = $region17
    $region16: #{tpu_custom_call.1} parent=1 // pred_region
      %48 = vsyncadd [#allocation8], 0
      %s49 = sshll.u32 %s3, 4
      %s50 = int_to_ptr.hbm [resolvable:$true] %s49
      %s51 = sshll.u32 [#allocation9], 4
      %s52 = int_to_ptr.vmem [resolvable:$true] %s51
      %57 = dma.hbm_to_vmem [thread:$0]  %s50, 4096, %s52, [#allocation8], 256, 256, 16
    $region17: #{tpu_custom_call.1} parent=1 // pred_fallthru
      _
    // Predicated region
    $region18: #{tpu_custom_call.1} parent=1 // pred_check
      _
    $region19: #{tpu_custom_call.1} parent=1 // pred_check_branch
      %59 = sbr.rel (0) target = $region21
    $region20: #{tpu_custom_call.1} parent=1 // pred_region
      %61 = vsyncadd [#allocation11], 0
      %s62 = sshll.u32 %s4, 4
      %s63 = int_to_ptr.hbm [resolvable:$true] %s62
      %s64 = sshll.u32 [#allocation10], 4
      %s65 = int_to_ptr.vmem [resolvable:$true] %s64
      %70 = dma.hbm_to_vmem [thread:$0]  %s63, 8192, %s65, [#allocation11], 256, 256, 16
    $region21: #{tpu_custom_call.1} parent=1 // pred_fallthru
      _
    // Predicated region
    $region22: #{tpu_custom_call.1} parent=1 // pred_check
      _
    $region23: #{tpu_custom_call.1} parent=1 // pred_check_branch
      %72 = sbr.rel (0) target = $region25
    $region24: #{tpu_custom_call.1} parent=1 // pred_region
      _
    $region25: #{tpu_custom_call.1} parent=1 // pred_fallthru
      _
    // Predicated region
    $region26: #{tpu_custom_call.1} parent=1 // pred_check
      _
    $region27: #{tpu_custom_call.1} parent=1 // pred_check_branch
      %74 = sbr.rel (0) target = $region29
    $region28: #{tpu_custom_call.1} parent=1 // pred_region
      %76 = vsyncadd [#allocation11], 0
      %s77 = sshll.u32 %s6, 4
      %s78 = int_to_ptr.hbm [resolvable:$true] %s77
      %s79 = sshll.u32 [#allocation12], 4
      %s80 = int_to_ptr.vmem [resolvable:$true] %s79
      %85 = dma.hbm_to_vmem [thread:$0]  %s78, 1024, %s80, [#allocation11], 64, 64, 4
    $region29: #{tpu_custom_call.1} parent=1 // pred_fallthru
      _
    // Predicated region
    $region30: #{tpu_custom_call.1} parent=1 // pred_check
      _
    $region31: #{tpu_custom_call.1} parent=1 // pred_check_branch
      %87 = sbr.rel (0) target = $region33
    $region32: #{tpu_custom_call.1} parent=1 // pred_region
      _
    $region33: #{tpu_custom_call.1} parent=1 // pred_fallthru
      _
    // Predicated region
    $region34: #{tpu_custom_call.1} parent=1 // pred_check
      _
    $region35: #{tpu_custom_call.1} parent=1 // pred_check_branch
      %89 = sbr.rel (0) target = $region37
    $region36: #{tpu_custom_call.1} parent=1 // pred_region
      %91 = dma.done [#allocation5], 512
    $region37: #{tpu_custom_call.1} parent=1 // pred_fallthru
      _
    // Predicated region
    $region38: #{tpu_custom_call.1} parent=1 // pred_check
      _
    $region39: #{tpu_custom_call.1} parent=1 // pred_check_branch
      %93 = sbr.rel (0) target = $region41
    $region40: #{tpu_custom_call.1} parent=1 // pred_region
      %95 = dma.done [#allocation8], 4096
    $region41: #{tpu_custom_call.1} parent=1 // pred_fallthru
      _
    // Predicated region
    $region42: #{tpu_custom_call.1} parent=1 // pred_check
      _
    $region43: #{tpu_custom_call.1} parent=1 // pred_check_branch
      %97 = sbr.rel (0) target = $region45
    $region44: #{tpu_custom_call.1} parent=1 // pred_region
      %99 = dma.done [#allocation8], 4096
    $region45: #{tpu_custom_call.1} parent=1 // pred_fallthru
      _
    // Predicated region
    $region46: #{tpu_custom_call.1} parent=1 // pred_check
      _
    $region47: #{tpu_custom_call.1} parent=1 // pred_check_branch
      %101 = sbr.rel (0) target = $region49
    $region48: #{tpu_custom_call.1} parent=1 // pred_region
      %103 = dma.done [#allocation11], 8192
    $region49: #{tpu_custom_call.1} parent=1 // pred_fallthru
      _
    // Predicated region
    $region50: #{tpu_custom_call.1} parent=1 // pred_check
      _
    $region51: #{tpu_custom_call.1} parent=1 // pred_check_branch
      %105 = sbr.rel (0) target = $region53
    $region52: #{tpu_custom_call.1} parent=1 // pred_region
      %107 = dma.done [#allocation11], 1024
    $region53: #{tpu_custom_call.1} parent=1 // pred_fallthru
      _
    %v109 = vld [vmem:[%s1] sm:$0xff]
    %v110 = vsub.s32 %v109, 1
    %v111 = vld [vmem:[#allocation10] sm:$0xff]
    %v112 = vld [vmem:[#allocation10 + $0x8] sm:$0xff]
    %v113 = vld [vmem:[#allocation10 + $0x10] sm:$0xff]
    %v114 = vld [vmem:[#allocation10 + $0x18] sm:$0xff]
    %v115 = vld [vmem:[#allocation10 + $0x20] sm:$0xff]
    %v116 = vld [vmem:[#allocation10 + $0x28] sm:$0xff]
    %v117 = vld [vmem:[#allocation10 + $0x30] sm:$0xff]
    %v118 = vld [vmem:[#allocation10 + $0x38] sm:$0xff]
    %v119 = vld [vmem:[#allocation10 + $0x40] sm:$0xff]
    %v120 = vld [vmem:[#allocation10 + $0x48] sm:$0xff]
    %v121 = vld [vmem:[#allocation10 + $0x50] sm:$0xff]
    %v122 = vld [vmem:[#allocation10 + $0x58] sm:$0xff]
    %v123 = vld [vmem:[#allocation10 + $0x60] sm:$0xff]
    %v124 = vld [vmem:[#allocation10 + $0x68] sm:$0xff]
    %v125 = vld [vmem:[#allocation10 + $0x70] sm:$0xff]
    %v126 = vld [vmem:[#allocation10 + $0x78] sm:$0xff]
    %v127 = vld [vmem:[#allocation10 + $0x80] sm:$0xff]
    %v128 = vld [vmem:[#allocation10 + $0x88] sm:$0xff]
    %v129 = vld [vmem:[#allocation10 + $0x90] sm:$0xff]
    %v130 = vld [vmem:[#allocation10 + $0x98] sm:$0xff]
    %v131 = vld [vmem:[#allocation10 + $0xa0] sm:$0xff]
    %v132 = vld [vmem:[#allocation10 + $0xa8] sm:$0xff]
    %v133 = vld [vmem:[#allocation10 + $0xb0] sm:$0xff]
    %v134 = vld [vmem:[#allocation10 + $0xb8] sm:$0xff]
    %v135 = vld [vmem:[#allocation10 + $0xc0] sm:$0xff]
    %v136 = vld [vmem:[#allocation10 + $0xc8] sm:$0xff]
    %v137 = vld [vmem:[#allocation10 + $0xd0] sm:$0xff]
    %v138 = vld [vmem:[#allocation10 + $0xd8] sm:$0xff]
    %v139 = vld [vmem:[#allocation10 + $0xe0] sm:$0xff]
    %v140 = vld [vmem:[#allocation10 + $0xe8] sm:$0xff]
    %v141 = vld [vmem:[#allocation10 + $0xf0] sm:$0xff]
    %v142 = vld [vmem:[#allocation10 + $0xf8] sm:$0xff]
    %v143 = vld [vmem:[%s5] sm:$0xf]
    %v144 = vld [vmem:[#allocation4] sm:$0xf]
    %v145 = vld [vmem:[#allocation4 + $0x4] sm:$0xf]
    %v146 = vld [vmem:[#allocation4 + $0x8] sm:$0xf]
    %v147 = vld [vmem:[#allocation4 + $0xc] sm:$0xf]
    %v148 = vld [vmem:[#allocation4 + $0x10] sm:$0xf]
    %v149 = vld [vmem:[#allocation4 + $0x14] sm:$0xf]
    %v150 = vld [vmem:[#allocation4 + $0x18] sm:$0xf]
    %v151 = vld [vmem:[#allocation4 + $0x1c] sm:$0xf]
    %v152 = vld [vmem:[#allocation7] sm:$0xff]
    %v153 = vld [vmem:[#allocation7 + $0x8] sm:$0xff]
    %v154 = vld [vmem:[#allocation7 + $0x10] sm:$0xff]
    %v155 = vld [vmem:[#allocation7 + $0x18] sm:$0xff]
    %v156 = vld [vmem:[#allocation7 + $0x20] sm:$0xff]
    %v157 = vld [vmem:[#allocation7 + $0x28] sm:$0xff]
    %v158 = vld [vmem:[#allocation7 + $0x30] sm:$0xff]
    %v159 = vld [vmem:[#allocation7 + $0x38] sm:$0xff]
    %v160 = vld [vmem:[#allocation7 + $0x40] sm:$0xff]
    %v161 = vld [vmem:[#allocation7 + $0x48] sm:$0xff]
    %v162 = vld [vmem:[#allocation7 + $0x50] sm:$0xff]
    %v163 = vld [vmem:[#allocation7 + $0x58] sm:$0xff]
    %v164 = vld [vmem:[#allocation7 + $0x60] sm:$0xff]
    %v165 = vld [vmem:[#allocation7 + $0x68] sm:$0xff]
    %v166 = vld [vmem:[#allocation7 + $0x70] sm:$0xff]
    %v167 = vld [vmem:[#allocation7 + $0x78] sm:$0xff]
    %v168 = vld [vmem:[#allocation7 + $0x80] sm:$0xff]
    %v169 = vld [vmem:[#allocation7 + $0x88] sm:$0xff]
    %v170 = vld [vmem:[#allocation7 + $0x90] sm:$0xff]
    %v171 = vld [vmem:[#allocation7 + $0x98] sm:$0xff]
    %v172 = vld [vmem:[#allocation7 + $0xa0] sm:$0xff]
    %v173 = vld [vmem:[#allocation7 + $0xa8] sm:$0xff]
    %v174 = vld [vmem:[#allocation7 + $0xb0] sm:$0xff]
    %v175 = vld [vmem:[#allocation7 + $0xb8] sm:$0xff]
    %v176 = vld [vmem:[#allocation7 + $0xc0] sm:$0xff]
    %v177 = vld [vmem:[#allocation7 + $0xc8] sm:$0xff]
    %v178 = vld [vmem:[#allocation7 + $0xd0] sm:$0xff]
    %v179 = vld [vmem:[#allocation7 + $0xd8] sm:$0xff]
    %v180 = vld [vmem:[#allocation7 + $0xe0] sm:$0xff]
    %v181 = vld [vmem:[#allocation7 + $0xe8] sm:$0xff]
    %v182 = vld [vmem:[#allocation7 + $0xf0] sm:$0xff]
    %v183 = vld [vmem:[#allocation7 + $0xf8] sm:$0xff]
    %v192 = vunpack.c.l.b16 %v144
    %v193 = vunpack.c.l.b16 %v145
    %v194 = vunpack.c.l.b16 %v146
    %v195 = vunpack.c.l.b16 %v147
    %v196 = vunpack.c.l.b16 %v148
    %v197 = vunpack.c.l.b16 %v149
    %v198 = vunpack.c.l.b16 %v150
    %v199 = vunpack.c.l.b16 %v151
    %v200 = vpack.c.b16 %v193, %v192
    %v201 = vpack.c.b16 %v195, %v194
    %v202 = vpack.c.b16 %v197, %v196
    %v203 = vpack.c.b16 %v199, %v198
    %v240 = vunpack.c.l.b16 %v152
    %v241 = vunpack.c.h.b16 %v152
    %v242 = vunpack.c.l.b16 %v153
    %v243 = vunpack.c.h.b16 %v153
    %v244 = vunpack.c.l.b16 %v154
    %v245 = vunpack.c.h.b16 %v154
    %v246 = vunpack.c.l.b16 %v155
    %v247 = vunpack.c.h.b16 %v155
    %v248 = vunpack.c.l.b16 %v156
    %v249 = vunpack.c.h.b16 %v156
    %v250 = vunpack.c.l.b16 %v157
    %v251 = vunpack.c.h.b16 %v157
    %v252 = vunpack.c.l.b16 %v158
    %v253 = vunpack.c.h.b16 %v158
    %v254 = vunpack.c.l.b16 %v159
    %v255 = vunpack.c.h.b16 %v159
    %v256 = vunpack.c.l.b16 %v160
    %v257 = vunpack.c.h.b16 %v160
    %v258 = vunpack.c.l.b16 %v161
    %v259 = vunpack.c.h.b16 %v161
    %v260 = vunpack.c.l.b16 %v162
    %v261 = vunpack.c.h.b16 %v162
    %v262 = vunpack.c.l.b16 %v163
    %v263 = vunpack.c.h.b16 %v163
    %v264 = vunpack.c.l.b16 %v164
    %v265 = vunpack.c.h.b16 %v164
    %v266 = vunpack.c.l.b16 %v165
    %v267 = vunpack.c.h.b16 %v165
    %v268 = vunpack.c.l.b16 %v166
    %v269 = vunpack.c.h.b16 %v166
    %v270 = vunpack.c.l.b16 %v167
    %v271 = vunpack.c.h.b16 %v167
    %v272 = vunpack.c.l.b16 %v168
    %v273 = vunpack.c.h.b16 %v168
    %v274 = vunpack.c.l.b16 %v169
    %v275 = vunpack.c.h.b16 %v169
    %v276 = vunpack.c.l.b16 %v170
    %v277 = vunpack.c.h.b16 %v170
    %v278 = vunpack.c.l.b16 %v171
    %v279 = vunpack.c.h.b16 %v171
    %v280 = vunpack.c.l.b16 %v172
    %v281 = vunpack.c.h.b16 %v172
    %v282 = vunpack.c.l.b16 %v173
    %v283 = vunpack.c.h.b16 %v173
    %v284 = vunpack.c.l.b16 %v174
    %v285 = vunpack.c.h.b16 %v174
    %v286 = vunpack.c.l.b16 %v175
    %v287 = vunpack.c.h.b16 %v175
    %v288 = vunpack.c.l.b16 %v176
    %v289 = vunpack.c.h.b16 %v176
    %v290 = vunpack.c.l.b16 %v177
    %v291 = vunpack.c.h.b16 %v177
    %v292 = vunpack.c.l.b16 %v178
    %v293 = vunpack.c.h.b16 %v178
    %v294 = vunpack.c.l.b16 %v179
    %v295 = vunpack.c.h.b16 %v179
    %v296 = vunpack.c.l.b16 %v180
    %v297 = vunpack.c.h.b16 %v180
    %v298 = vunpack.c.l.b16 %v181
    %v299 = vunpack.c.h.b16 %v181
    %v300 = vunpack.c.l.b16 %v182
    %v301 = vunpack.c.h.b16 %v182
    %v302 = vunpack.c.l.b16 %v183
    %v303 = vunpack.c.h.b16 %v183
    %v304 = vpack.c.b16 %v244, %v240
    %v305 = vpack.c.b16 %v245, %v241
    %v306 = vpack.c.b16 %v246, %v242
    %v307 = vpack.c.b16 %v247, %v243
    %v308 = vpack.c.b16 %v252, %v248
    %v309 = vpack.c.b16 %v253, %v249
    %v310 = vpack.c.b16 %v254, %v250
    %v311 = vpack.c.b16 %v255, %v251
    %v312 = vpack.c.b16 %v260, %v256
    %v313 = vpack.c.b16 %v261, %v257
    %v314 = vpack.c.b16 %v262, %v258
    %v315 = vpack.c.b16 %v263, %v259
    %v316 = vpack.c.b16 %v268, %v264
    %v317 = vpack.c.b16 %v269, %v265
    %v318 = vpack.c.b16 %v270, %v266
    %v319 = vpack.c.b16 %v271, %v267
    %v320 = vpack.c.b16 %v276, %v272
    %v321 = vpack.c.b16 %v277, %v273
    %v322 = vpack.c.b16 %v278, %v274
    %v323 = vpack.c.b16 %v279, %v275
    %v324 = vpack.c.b16 %v284, %v280
    %v325 = vpack.c.b16 %v285, %v281
    %v326 = vpack.c.b16 %v286, %v282
    %v327 = vpack.c.b16 %v287, %v283
    %v328 = vpack.c.b16 %v292, %v288
    %v329 = vpack.c.b16 %v293, %v289
    %v330 = vpack.c.b16 %v294, %v290
    %v331 = vpack.c.b16 %v295, %v291
    %v332 = vpack.c.b16 %v300, %v296
    %v333 = vpack.c.b16 %v301, %v297
    %v334 = vpack.c.b16 %v302, %v298
    %v335 = vpack.c.b16 %v303, %v299
    %368 = vmatpush.bf16.msra.mxu0 %v332
    %369 = vmatpush.bf16.msra.mxu0 %v328
    %370 = vmatpush.bf16.msra.mxu0 %v324
    %371 = vmatpush.bf16.msra.mxu0 %v320
    %372 = vmatpush.bf16.msra.mxu0 %v316
    %373 = vmatpush.bf16.msra.mxu0 %v312
    %374 = vmatpush.bf16.msra.mxu0 %v308
    %375 = vmatpush.bf16.msra.mxu0 %v304
    %376 = vmatmul.bf16.gmra.mxu0 %v200
    %v377 = vpop.f32.mrf.mxu0
    %v378 = vadd.f32 0.0, %v377
    %v379 = vpop.f32.mrf.mxu0
    %v380 = vadd.f32 0.0, %v379
    %381 = vmatmul.bf16.gmra.mxu0 %v201
    %v382 = vpop.f32.mrf.mxu0
    %v383 = vadd.f32 0.0, %v382
    %v384 = vpop.f32.mrf.mxu0
    %v385 = vadd.f32 0.0, %v384
    %386 = vmatmul.bf16.gmra.mxu0 %v202
    %v387 = vpop.f32.mrf.mxu0
    %v388 = vadd.f32 0.0, %v387
    %v389 = vpop.f32.mrf.mxu0
    %v390 = vadd.f32 0.0, %v389
    %391 = vmatmul.bf16.gmra.mxu0 %v203
    %v392 = vpop.f32.mrf.mxu0
    %v393 = vadd.f32 0.0, %v392
    %v394 = vpop.f32.mrf.mxu0
    %v395 = vadd.f32 0.0, %v394
    %396 = vdwg.mxu0
    %397 = vmatpush.bf16.msra.mxu0 %v333
    %398 = vmatpush.bf16.msra.mxu0 %v329
    %399 = vmatpush.bf16.msra.mxu0 %v325
    %400 = vmatpush.bf16.msra.mxu0 %v321
    %401 = vmatpush.bf16.msra.mxu0 %v317
    %402 = vmatpush.bf16.msra.mxu0 %v313
    %403 = vmatpush.bf16.msra.mxu0 %v309
    %404 = vmatpush.bf16.msra.mxu0 %v305
    %405 = vmatmul.bf16.gmra.mxu0 %v200
    %v406 = vpop.f32.mrf.mxu0
    %v407 = vadd.f32 0.0, %v406
    %v408 = vpop.f32.mrf.mxu0
    %v409 = vadd.f32 0.0, %v408
    %410 = vmatmul.bf16.gmra.mxu0 %v201
    %v411 = vpop.f32.mrf.mxu0
    %v412 = vadd.f32 0.0, %v411
    %v413 = vpop.f32.mrf.mxu0
    %v414 = vadd.f32 0.0, %v413
    %415 = vmatmul.bf16.gmra.mxu0 %v202
    %v416 = vpop.f32.mrf.mxu0
    %v417 = vadd.f32 0.0, %v416
    %v418 = vpop.f32.mrf.mxu0
    %v419 = vadd.f32 0.0, %v418
    %420 = vmatmul.bf16.gmra.mxu0 %v203
    %v421 = vpop.f32.mrf.mxu0
    %v422 = vadd.f32 0.0, %v421
    %v423 = vpop.f32.mrf.mxu0
    %v424 = vadd.f32 0.0, %v423
    %425 = vdwg.mxu0
    %426 = vmatpush.bf16.msra.mxu0 %v334
    %427 = vmatpush.bf16.msra.mxu0 %v330
    %428 = vmatpush.bf16.msra.mxu0 %v326
    %429 = vmatpush.bf16.msra.mxu0 %v322
    %430 = vmatpush.bf16.msra.mxu0 %v318
    %431 = vmatpush.bf16.msra.mxu0 %v314
    %432 = vmatpush.bf16.msra.mxu0 %v310
    %433 = vmatpush.bf16.msra.mxu0 %v306
    %434 = vmatmul.bf16.gmra.mxu0 %v200
    %v435 = vpop.f32.mrf.mxu0
    %v436 = vadd.f32 0.0, %v435
    %v437 = vpop.f32.mrf.mxu0
    %v438 = vadd.f32 0.0, %v437
    %439 = vmatmul.bf16.gmra.mxu0 %v201
    %v440 = vpop.f32.mrf.mxu0
    %v441 = vadd.f32 0.0, %v440
    %v442 = vpop.f32.mrf.mxu0
    %v443 = vadd.f32 0.0, %v442
    %444 = vmatmul.bf16.gmra.mxu0 %v202
    %v445 = vpop.f32.mrf.mxu0
    %v446 = vadd.f32 0.0, %v445
    %v447 = vpop.f32.mrf.mxu0
    %v448 = vadd.f32 0.0, %v447
    %449 = vmatmul.bf16.gmra.mxu0 %v203
    %v450 = vpop.f32.mrf.mxu0
    %v451 = vadd.f32 0.0, %v450
    %v452 = vpop.f32.mrf.mxu0
    %v453 = vadd.f32 0.0, %v452
    %454 = vdwg.mxu0
    %455 = vmatpush.bf16.msra.mxu0 %v335
    %456 = vmatpush.bf16.msra.mxu0 %v331
    %457 = vmatpush.bf16.msra.mxu0 %v327
    %458 = vmatpush.bf16.msra.mxu0 %v323
    %459 = vmatpush.bf16.msra.mxu0 %v319
    %460 = vmatpush.bf16.msra.mxu0 %v315
    %461 = vmatpush.bf16.msra.mxu0 %v311
    %462 = vmatpush.bf16.msra.mxu0 %v307
    %463 = vmatmul.bf16.gmra.mxu0 %v200
    %v464 = vpop.f32.mrf.mxu0
    %v465 = vadd.f32 0.0, %v464
    %v466 = vpop.f32.mrf.mxu0
    %v467 = vadd.f32 0.0, %v466
    %468 = vmatmul.bf16.gmra.mxu0 %v201
    %v469 = vpop.f32.mrf.mxu0
    %v470 = vadd.f32 0.0, %v469
    %v471 = vpop.f32.mrf.mxu0
    %v472 = vadd.f32 0.0, %v471
    %473 = vmatmul.bf16.gmra.mxu0 %v202
    %v474 = vpop.f32.mrf.mxu0
    %v475 = vadd.f32 0.0, %v474
    %v476 = vpop.f32.mrf.mxu0
    %v477 = vadd.f32 0.0, %v476
    %478 = vmatmul.bf16.gmra.mxu0 %v203
    %v479 = vpop.f32.mrf.mxu0
    %v480 = vadd.f32 0.0, %v479
    %v481 = vpop.f32.mrf.mxu0
    %v482 = vadd.f32 0.0, %v481
    %483 = vdwg.mxu0
    %v484 = vpack.c.bf16 %v407, %v378
    %v485 = vpack.c.bf16 %v465, %v436
    %v486 = vpack.c.bf16 %v409, %v380
    %v487 = vpack.c.bf16 %v467, %v438
    %v488 = vpack.c.bf16 %v412, %v383
    %v489 = vpack.c.bf16 %v470, %v441
    %v490 = vpack.c.bf16 %v414, %v385
    %v491 = vpack.c.bf16 %v472, %v443
    %v492 = vpack.c.bf16 %v417, %v388
    %v493 = vpack.c.bf16 %v475, %v446
    %v494 = vpack.c.bf16 %v419, %v390
    %v495 = vpack.c.bf16 %v477, %v448
    %v496 = vpack.c.bf16 %v422, %v393
    %v497 = vpack.c.bf16 %v480, %v451
    %v498 = vpack.c.bf16 %v424, %v395
    %v499 = vpack.c.bf16 %v482, %v453
    %500 = vst [vmem:[#allocation2] sm:$0xff] %v484
    %501 = vst [vmem:[#allocation2 + $0x8] sm:$0xff] %v485
    %502 = vst [vmem:[#allocation2 + $0x10] sm:$0xff] %v486
    %503 = vst [vmem:[#allocation2 + $0x18] sm:$0xff] %v487
    %504 = vst [vmem:[#allocation2 + $0x20] sm:$0xff] %v488
    %505 = vst [vmem:[#allocation2 + $0x28] sm:$0xff] %v489
    %506 = vst [vmem:[#allocation2 + $0x30] sm:$0xff] %v490
    %507 = vst [vmem:[#allocation2 + $0x38] sm:$0xff] %v491
    %508 = vst [vmem:[#allocation2 + $0x40] sm:$0xff] %v492
    %509 = vst [vmem:[#allocation2 + $0x48] sm:$0xff] %v493
    %510 = vst [vmem:[#allocation2 + $0x50] sm:$0xff] %v494
    %511 = vst [vmem:[#allocation2 + $0x58] sm:$0xff] %v495
    %512 = vst [vmem:[#allocation2 + $0x60] sm:$0xff] %v496
    %513 = vst [vmem:[#allocation2 + $0x68] sm:$0xff] %v497
    %514 = vst [vmem:[#allocation2 + $0x70] sm:$0xff] %v498
    %515 = vst [vmem:[#allocation2 + $0x78] sm:$0xff] %v499
    %s516 = smul.u32 0, 4
    %s517 = smul.addr %s516, 4
    %s518 = scalar_lea.vmem [#allocation2], %s517
    %v519 = vld [vmem:[%s518] sm:$0xff]
    %v520 = vld [vmem:[%s518 + $0x8] sm:$0xff]
    %v521 = vunpack.c.l.bf16 %v519
    %v522 = vunpack.c.h.bf16 %v519
    %v523 = vunpack.c.l.bf16 %v520
    %v524 = vunpack.c.h.bf16 %v520
    %v526 = vperm.slane %v143, 0
    %v527 = vperm.slane %v143, 1
    %v528 = vperm.slane %v143, 2
    %v529 = vperm.slane %v143, 3
    %v534 = vadd.f32 %v521, %v526
    %v535 = vadd.f32 %v522, %v527
    %v536 = vadd.f32 %v523, %v528
    %v537 = vadd.f32 %v524, %v529
    %v570 = vunpack.c.l.b16 %v111
    %v571 = vunpack.c.h.b16 %v111
    %v572 = vunpack.c.l.b16 %v112
    %v573 = vunpack.c.h.b16 %v112
    %v574 = vunpack.c.l.b16 %v113
    %v575 = vunpack.c.h.b16 %v113
    %v576 = vunpack.c.l.b16 %v114
    %v577 = vunpack.c.h.b16 %v114
    %v578 = vunpack.c.l.b16 %v115
    %v579 = vunpack.c.h.b16 %v115
    %v580 = vunpack.c.l.b16 %v116
    %v581 = vunpack.c.h.b16 %v116
    %v582 = vunpack.c.l.b16 %v117
    %v583 = vunpack.c.h.b16 %v117
    %v584 = vunpack.c.l.b16 %v118
    %v585 = vunpack.c.h.b16 %v118
    %v586 = vunpack.c.l.b16 %v119
    %v587 = vunpack.c.h.b16 %v119
    %v588 = vunpack.c.l.b16 %v120
    %v589 = vunpack.c.h.b16 %v120
    %v590 = vunpack.c.l.b16 %v121
    %v591 = vunpack.c.h.b16 %v121
    %v592 = vunpack.c.l.b16 %v122
    %v593 = vunpack.c.h.b16 %v122
    %v594 = vunpack.c.l.b16 %v123
    %v595 = vunpack.c.h.b16 %v123
    %v596 = vunpack.c.l.b16 %v124
    %v597 = vunpack.c.h.b16 %v124
    %v598 = vunpack.c.l.b16 %v125
    %v599 = vunpack.c.h.b16 %v125
    %v600 = vunpack.c.l.b16 %v126
    %v601 = vunpack.c.h.b16 %v126
    %v602 = vunpack.c.l.b16 %v127
    %v603 = vunpack.c.h.b16 %v127
    %v604 = vunpack.c.l.b16 %v128
    %v605 = vunpack.c.h.b16 %v128
    %v606 = vunpack.c.l.b16 %v129
    %v607 = vunpack.c.h.b16 %v129
    %v608 = vunpack.c.l.b16 %v130
    %v609 = vunpack.c.h.b16 %v130
    %v610 = vunpack.c.l.b16 %v131
    %v611 = vunpack.c.h.b16 %v131
    %v612 = vunpack.c.l.b16 %v132
    %v613 = vunpack.c.h.b16 %v132
    %v614 = vunpack.c.l.b16 %v133
    %v615 = vunpack.c.h.b16 %v133
    %v616 = vunpack.c.l.b16 %v134
    %v617 = vunpack.c.h.b16 %v134
    %v618 = vunpack.c.l.b16 %v135
    %v619 = vunpack.c.h.b16 %v135
    %v620 = vunpack.c.l.b16 %v136
    %v621 = vunpack.c.h.b16 %v136
    %v622 = vunpack.c.l.b16 %v137
    %v623 = vunpack.c.h.b16 %v137
    %v624 = vunpack.c.l.b16 %v138
    %v625 = vunpack.c.h.b16 %v138
    %v626 = vunpack.c.l.b16 %v139
    %v627 = vunpack.c.h.b16 %v139
    %v628 = vunpack.c.l.b16 %v140
    %v629 = vunpack.c.h.b16 %v140
    %v630 = vunpack.c.l.b16 %v141
    %v631 = vunpack.c.h.b16 %v141
    %v632 = vunpack.c.l.b16 %v142
    %v633 = vunpack.c.h.b16 %v142
    %v634 = vpack.c.b16 %v574, %v570
    %v635 = vpack.c.b16 %v575, %v571
    %v636 = vpack.c.b16 %v576, %v572
    %v637 = vpack.c.b16 %v577, %v573
    %v638 = vpack.c.b16 %v582, %v578
    %v639 = vpack.c.b16 %v583, %v579
    %v640 = vpack.c.b16 %v584, %v580
    %v641 = vpack.c.b16 %v585, %v581
    %v642 = vpack.c.b16 %v590, %v586
    %v643 = vpack.c.b16 %v591, %v587
    %v644 = vpack.c.b16 %v592, %v588
    %v645 = vpack.c.b16 %v593, %v589
    %v646 = vpack.c.b16 %v598, %v594
    %v647 = vpack.c.b16 %v599, %v595
    %v648 = vpack.c.b16 %v600, %v596
    %v649 = vpack.c.b16 %v601, %v597
    %v650 = vpack.c.b16 %v606, %v602
    %v651 = vpack.c.b16 %v607, %v603
    %v652 = vpack.c.b16 %v608, %v604
    %v653 = vpack.c.b16 %v609, %v605
    %v654 = vpack.c.b16 %v614, %v610
    %v655 = vpack.c.b16 %v615, %v611
    %v656 = vpack.c.b16 %v616, %v612
    %v657 = vpack.c.b16 %v617, %v613
    %v658 = vpack.c.b16 %v622, %v618
    %v659 = vpack.c.b16 %v623, %v619
    %v660 = vpack.c.b16 %v624, %v620
    %v661 = vpack.c.b16 %v625, %v621
    %v662 = vpack.c.b16 %v630, %v626
    %v663 = vpack.c.b16 %v631, %v627
    %v664 = vpack.c.b16 %v632, %v628
    %v665 = vpack.c.b16 %v633, %v629
    %698 = vmatpush.bf16.msra.mxu0 %v662
    %699 = vmatpush.bf16.msra.mxu0 %v658
    %700 = vmatpush.bf16.msra.mxu0 %v654
    %701 = vmatpush.bf16.msra.mxu0 %v650
    %702 = vmatpush.bf16.msra.mxu0 %v646
    %703 = vmatpush.bf16.msra.mxu0 %v642
    %704 = vmatpush.bf16.msra.mxu0 %v638
    %705 = vmatpush.bf16.msra.mxu0 %v634
    %706 = vmatmul.bf16.gmra.mxu0 0
    %v707 = vpop.f32.mrf.mxu0
    %v708 = vadd.f32 0.0, %v707
    %v709 = vpop.f32.mrf.mxu0
    %710 = vdwg.mxu0
    %711 = vmatpush.bf16.msra.mxu0 %v663
    %712 = vmatpush.bf16.msra.mxu0 %v659
    %713 = vmatpush.bf16.msra.mxu0 %v655
    %714 = vmatpush.bf16.msra.mxu0 %v651
    %715 = vmatpush.bf16.msra.mxu0 %v647
    %716 = vmatpush.bf16.msra.mxu0 %v643
    %717 = vmatpush.bf16.msra.mxu0 %v639
    %718 = vmatpush.bf16.msra.mxu0 %v635
    %719 = vmatmul.bf16.gmra.mxu0 0
    %v720 = vpop.f32.mrf.mxu0
    %v721 = vadd.f32 0.0, %v720
    %v722 = vpop.f32.mrf.mxu0
    %723 = vdwg.mxu0
    %724 = vmatpush.bf16.msra.mxu0 %v664
    %725 = vmatpush.bf16.msra.mxu0 %v660
    %726 = vmatpush.bf16.msra.mxu0 %v656
    %727 = vmatpush.bf16.msra.mxu0 %v652
    %728 = vmatpush.bf16.msra.mxu0 %v648
    %729 = vmatpush.bf16.msra.mxu0 %v644
    %730 = vmatpush.bf16.msra.mxu0 %v640
    %731 = vmatpush.bf16.msra.mxu0 %v636
    %732 = vmatmul.bf16.gmra.mxu0 0
    %v733 = vpop.f32.mrf.mxu0
    %v734 = vadd.f32 0.0, %v733
    %v735 = vpop.f32.mrf.mxu0
    %736 = vdwg.mxu0
    %737 = vmatpush.bf16.msra.mxu0 %v665
    %738 = vmatpush.bf16.msra.mxu0 %v661
    %739 = vmatpush.bf16.msra.mxu0 %v657
    %740 = vmatpush.bf16.msra.mxu0 %v653
    %741 = vmatpush.bf16.msra.mxu0 %v649
    %742 = vmatpush.bf16.msra.mxu0 %v645
    %743 = vmatpush.bf16.msra.mxu0 %v641
    %744 = vmatpush.bf16.msra.mxu0 %v637
    %745 = vmatmul.bf16.gmra.mxu0 0
    %v746 = vpop.f32.mrf.mxu0
    %v747 = vadd.f32 0.0, %v746
    %v748 = vpop.f32.mrf.mxu0
    %749 = vdwg.mxu0
    %v750 = vadd.f32 %v534, %v708
    %v751 = vadd.f32 %v535, %v721
    %v752 = vadd.f32 %v536, %v734
    %v753 = vadd.f32 %v537, %v747
    %v754 = vmul.f32 %v750, 0.5
    %v755 = vtanh.pop %v754
    %v756 = vmul.f32 %v755, 0.5
    %v757 = vadd.f32 %v756, 0.5
    %v758 = vmul.f32 %v751, 0.5
    %v759 = vtanh.pop %v758
    %v760 = vmul.f32 %v759, 0.5
    %v761 = vadd.f32 %v760, 0.5
    %v762 = vtanh.pop %v752
    %v763 = vmul.f32 %v753, 0.5
    %v764 = vtanh.pop %v763
    %v765 = vmul.f32 %v764, 0.5
    %v766 = vadd.f32 %v765, 0.5
    %v767 = vmul.f32 %v761, 0.0
    %v768 = vmul.f32 %v757, %v762
    %v769 = vadd.f32 %v767, %v768
    %v770 = vtanh.pop %v769
    %v771 = vmul.f32 %v766, %v770
    %v772 = vpack.c.bf16 %v771, %v771
    %773 = vst [vmem:[#allocation3] sm:$0xf] %v772
    %s774 = smul.u32 1, 4
    %s775 = smul.addr %s774, 4
    %s776 = scalar_lea.vmem [#allocation2], %s775
    %v777 = vld [vmem:[%s776] sm:$0xff]
    %v778 = vld [vmem:[%s776 + $0x8] sm:$0xff]
    %v779 = vunpack.c.l.bf16 %v777
    %v780 = vunpack.c.h.bf16 %v777
    %v781 = vunpack.c.l.bf16 %v778
    %v782 = vunpack.c.h.bf16 %v778
    %v783 = vadd.f32 %v779, %v526
    %v784 = vadd.f32 %v780, %v527
    %v785 = vadd.f32 %v781, %v528
    %v786 = vadd.f32 %v782, %v529
    %787 = vmatpush.bf16.msra.mxu0 %v662
    %788 = vmatpush.bf16.msra.mxu0 %v658
    %789 = vmatpush.bf16.msra.mxu0 %v654
    %790 = vmatpush.bf16.msra.mxu0 %v650
    %791 = vmatpush.bf16.msra.mxu0 %v646
    %792 = vmatpush.bf16.msra.mxu0 %v642
    %793 = vmatpush.bf16.msra.mxu0 %v638
    %794 = vmatpush.bf16.msra.mxu0 %v634
    %795 = vmatmul.bf16.gmra.mxu0 %v772
    %v796 = vpop.f32.mrf.mxu0
    %v797 = vadd.f32 0.0, %v796
    %v798 = vpop.f32.mrf.mxu0
    %799 = vdwg.mxu0
    %800 = vmatpush.bf16.msra.mxu0 %v663
    %801 = vmatpush.bf16.msra.mxu0 %v659
    %802 = vmatpush.bf16.msra.mxu0 %v655
    %803 = vmatpush.bf16.msra.mxu0 %v651
    %804 = vmatpush.bf16.msra.mxu0 %v647
    %805 = vmatpush.bf16.msra.mxu0 %v643
    %806 = vmatpush.bf16.msra.mxu0 %v639
    %807 = vmatpush.bf16.msra.mxu0 %v635
    %808 = vmatmul.bf16.gmra.mxu0 %v772
    %v809 = vpop.f32.mrf.mxu0
    %v810 = vadd.f32 0.0, %v809
    %v811 = vpop.f32.mrf.mxu0
    %812 = vdwg.mxu0
    %813 = vmatpush.bf16.msra.mxu0 %v664
    %814 = vmatpush.bf16.msra.mxu0 %v660
    %815 = vmatpush.bf16.msra.mxu0 %v656
    %816 = vmatpush.bf16.msra.mxu0 %v652
    %817 = vmatpush.bf16.msra.mxu0 %v648
    %818 = vmatpush.bf16.msra.mxu0 %v644
    %819 = vmatpush.bf16.msra.mxu0 %v640
    %820 = vmatpush.bf16.msra.mxu0 %v636
    %821 = vmatmul.bf16.gmra.mxu0 %v772
    %v822 = vpop.f32.mrf.mxu0
    %v823 = vadd.f32 0.0, %v822
    %v824 = vpop.f32.mrf.mxu0
    %825 = vdwg.mxu0
    %826 = vmatpush.bf16.msra.mxu0 %v665
    %827 = vmatpush.bf16.msra.mxu0 %v661
    %828 = vmatpush.bf16.msra.mxu0 %v657
    %829 = vmatpush.bf16.msra.mxu0 %v653
    %830 = vmatpush.bf16.msra.mxu0 %v649
    %831 = vmatpush.bf16.msra.mxu0 %v645
    %832 = vmatpush.bf16.msra.mxu0 %v641
    %833 = vmatpush.bf16.msra.mxu0 %v637
    %834 = vmatmul.bf16.gmra.mxu0 %v772
    %v835 = vpop.f32.mrf.mxu0
    %v836 = vadd.f32 0.0, %v835
    %v837 = vpop.f32.mrf.mxu0
    %838 = vdwg.mxu0
    %v839 = vadd.f32 %v783, %v797
    %v840 = vadd.f32 %v784, %v810
    %v841 = vadd.f32 %v785, %v823
    %v842 = vadd.f32 %v786, %v836
    %v843 = vmul.f32 %v839, 0.5
    %v844 = vtanh.pop %v843
    %v845 = vmul.f32 %v844, 0.5
    %v846 = vadd.f32 %v845, 0.5
    %v847 = vmul.f32 %v840, 0.5
    %v848 = vtanh.pop %v847
    %v849 = vmul.f32 %v848, 0.5
    %v850 = vadd.f32 %v849, 0.5
    %v851 = vtanh.pop %v841
    %v852 = vmul.f32 %v842, 0.5
    %v853 = vtanh.pop %v852
    %v854 = vmul.f32 %v853, 0.5
    %v855 = vadd.f32 %v854, 0.5
    %v856 = vmul.f32 %v850, %v769
    %v857 = vmul.f32 %v846, %v851
    %v858 = vadd.f32 %v856, %v857
    %v859 = vtanh.pop %v858
    %v860 = vmul.f32 %v855, %v859
    %v861 = vpack.c.bf16 %v860, %v860
    %s862 = scalar_lea.vmem [#allocation3], 4
    %863 = vst [vmem:[%s862] sm:$0xf] %v861
    %s864 = smul.u32 2, 4
    %s865 = smul.addr %s864, 4
    %s866 = scalar_lea.vmem [#allocation2], %s865
    %v867 = vld [vmem:[%s866] sm:$0xff]
    %v868 = vld [vmem:[%s866 + $0x8] sm:$0xff]
    %v869 = vunpack.c.l.bf16 %v867
    %v870 = vunpack.c.h.bf16 %v867
    %v871 = vunpack.c.l.bf16 %v868
    %v872 = vunpack.c.h.bf16 %v868
    %v873 = vadd.f32 %v869, %v526
    %v874 = vadd.f32 %v870, %v527
    %v875 = vadd.f32 %v871, %v528
    %v876 = vadd.f32 %v872, %v529
    %877 = vmatpush.bf16.msra.mxu0 %v662
    %878 = vmatpush.bf16.msra.mxu0 %v658
    %879 = vmatpush.bf16.msra.mxu0 %v654
    %880 = vmatpush.bf16.msra.mxu0 %v650
    %881 = vmatpush.bf16.msra.mxu0 %v646
    %882 = vmatpush.bf16.msra.mxu0 %v642
    %883 = vmatpush.bf16.msra.mxu0 %v638
    %884 = vmatpush.bf16.msra.mxu0 %v634
    %885 = vmatmul.bf16.gmra.mxu0 %v861
    %v886 = vpop.f32.mrf.mxu0
    %v887 = vadd.f32 0.0, %v886
    %v888 = vpop.f32.mrf.mxu0
    %889 = vdwg.mxu0
    %890 = vmatpush.bf16.msra.mxu0 %v663
    %891 = vmatpush.bf16.msra.mxu0 %v659
    %892 = vmatpush.bf16.msra.mxu0 %v655
    %893 = vmatpush.bf16.msra.mxu0 %v651
    %894 = vmatpush.bf16.msra.mxu0 %v647
    %895 = vmatpush.bf16.msra.mxu0 %v643
    %896 = vmatpush.bf16.msra.mxu0 %v639
    %897 = vmatpush.bf16.msra.mxu0 %v635
    %898 = vmatmul.bf16.gmra.mxu0 %v861
    %v899 = vpop.f32.mrf.mxu0
    %v900 = vadd.f32 0.0, %v899
    %v901 = vpop.f32.mrf.mxu0
    %902 = vdwg.mxu0
    %903 = vmatpush.bf16.msra.mxu0 %v664
    %904 = vmatpush.bf16.msra.mxu0 %v660
    %905 = vmatpush.bf16.msra.mxu0 %v656
    %906 = vmatpush.bf16.msra.mxu0 %v652
    %907 = vmatpush.bf16.msra.mxu0 %v648
    %908 = vmatpush.bf16.msra.mxu0 %v644
    %909 = vmatpush.bf16.msra.mxu0 %v640
    %910 = vmatpush.bf16.msra.mxu0 %v636
    %911 = vmatmul.bf16.gmra.mxu0 %v861
    %v912 = vpop.f32.mrf.mxu0
    %v913 = vadd.f32 0.0, %v912
    %v914 = vpop.f32.mrf.mxu0
    %915 = vdwg.mxu0
    %916 = vmatpush.bf16.msra.mxu0 %v665
    %917 = vmatpush.bf16.msra.mxu0 %v661
    %918 = vmatpush.bf16.msra.mxu0 %v657
    %919 = vmatpush.bf16.msra.mxu0 %v653
    %920 = vmatpush.bf16.msra.mxu0 %v649
    %921 = vmatpush.bf16.msra.mxu0 %v645
    %922 = vmatpush.bf16.msra.mxu0 %v641
    %923 = vmatpush.bf16.msra.mxu0 %v637
    %924 = vmatmul.bf16.gmra.mxu0 %v861
    %v925 = vpop.f32.mrf.mxu0
    %v926 = vadd.f32 0.0, %v925
    %v927 = vpop.f32.mrf.mxu0
    %928 = vdwg.mxu0
    %v929 = vadd.f32 %v873, %v887
    %v930 = vadd.f32 %v874, %v900
    %v931 = vadd.f32 %v875, %v913
    %v932 = vadd.f32 %v876, %v926
    %v933 = vmul.f32 %v929, 0.5
    %v934 = vtanh.pop %v933
    %v935 = vmul.f32 %v934, 0.5
    %v936 = vadd.f32 %v935, 0.5
    %v937 = vmul.f32 %v930, 0.5
    %v938 = vtanh.pop %v937
    %v939 = vmul.f32 %v938, 0.5
    %v940 = vadd.f32 %v939, 0.5
    %v941 = vtanh.pop %v931
    %v942 = vmul.f32 %v932, 0.5
    %v943 = vtanh.pop %v942
    %v944 = vmul.f32 %v943, 0.5
    %v945 = vadd.f32 %v944, 0.5
    %v946 = vmul.f32 %v940, %v858
    %v947 = vmul.f32 %v936, %v941
    %v948 = vadd.f32 %v946, %v947
    %v949 = vtanh.pop %v948
    %v950 = vmul.f32 %v945, %v949
    %v951 = vpack.c.bf16 %v950, %v950
    %s952 = scalar_lea.vmem [#allocation3], 8
    %953 = vst [vmem:[%s952] sm:$0xf] %v951
    %s954 = smul.u32 3, 4
    %s955 = smul.addr %s954, 4
    %s956 = scalar_lea.vmem [#allocation2], %s955
    %v957 = vld [vmem:[%s956] sm:$0xff]
    %v958 = vld [vmem:[%s956 + $0x8] sm:$0xff]
    %v959 = vunpack.c.l.bf16 %v957
    %v960 = vunpack.c.h.bf16 %v957
    %v961 = vunpack.c.l.bf16 %v958
    %v962 = vunpack.c.h.bf16 %v958
    %v963 = vadd.f32 %v959, %v526
    %v964 = vadd.f32 %v960, %v527
    %v965 = vadd.f32 %v961, %v528
    %v966 = vadd.f32 %v962, %v529
    %967 = vmatpush.bf16.msra.mxu0 %v662
    %968 = vmatpush.bf16.msra.mxu0 %v658
    %969 = vmatpush.bf16.msra.mxu0 %v654
    %970 = vmatpush.bf16.msra.mxu0 %v650
    %971 = vmatpush.bf16.msra.mxu0 %v646
    %972 = vmatpush.bf16.msra.mxu0 %v642
    %973 = vmatpush.bf16.msra.mxu0 %v638
    %974 = vmatpush.bf16.msra.mxu0 %v634
    %975 = vmatmul.bf16.gmra.mxu0 %v951
    %v976 = vpop.f32.mrf.mxu0
    %v977 = vadd.f32 0.0, %v976
    %v978 = vpop.f32.mrf.mxu0
    %979 = vdwg.mxu0
    %980 = vmatpush.bf16.msra.mxu0 %v663
    %981 = vmatpush.bf16.msra.mxu0 %v659
    %982 = vmatpush.bf16.msra.mxu0 %v655
    %983 = vmatpush.bf16.msra.mxu0 %v651
    %984 = vmatpush.bf16.msra.mxu0 %v647
    %985 = vmatpush.bf16.msra.mxu0 %v643
    %986 = vmatpush.bf16.msra.mxu0 %v639
    %987 = vmatpush.bf16.msra.mxu0 %v635
    %988 = vmatmul.bf16.gmra.mxu0 %v951
    %v989 = vpop.f32.mrf.mxu0
    %v990 = vadd.f32 0.0, %v989
    %v991 = vpop.f32.mrf.mxu0
    %992 = vdwg.mxu0
    %993 = vmatpush.bf16.msra.mxu0 %v664
    %994 = vmatpush.bf16.msra.mxu0 %v660
    %995 = vmatpush.bf16.msra.mxu0 %v656
    %996 = vmatpush.bf16.msra.mxu0 %v652
    %997 = vmatpush.bf16.msra.mxu0 %v648
    %998 = vmatpush.bf16.msra.mxu0 %v644
    %999 = vmatpush.bf16.msra.mxu0 %v640
    %1000 = vmatpush.bf16.msra.mxu0 %v636
    %1001 = vmatmul.bf16.gmra.mxu0 %v951
    %v1002 = vpop.f32.mrf.mxu0
    %v1003 = vadd.f32 0.0, %v1002
    %v1004 = vpop.f32.mrf.mxu0
    %1005 = vdwg.mxu0
    %1006 = vmatpush.bf16.msra.mxu0 %v665
    %1007 = vmatpush.bf16.msra.mxu0 %v661
    %1008 = vmatpush.bf16.msra.mxu0 %v657
    %1009 = vmatpush.bf16.msra.mxu0 %v653
    %1010 = vmatpush.bf16.msra.mxu0 %v649
    %1011 = vmatpush.bf16.msra.mxu0 %v645
    %1012 = vmatpush.bf16.msra.mxu0 %v641
    %1013 = vmatpush.bf16.msra.mxu0 %v637
    %1014 = vmatmul.bf16.gmra.mxu0 %v951
    %v1015 = vpop.f32.mrf.mxu0
    %v1016 = vadd.f32 0.0, %v1015
    %v1017 = vpop.f32.mrf.mxu0
    %1018 = vdwg.mxu0
    %v1019 = vadd.f32 %v963, %v977
    %v1020 = vadd.f32 %v964, %v990
    %v1021 = vadd.f32 %v965, %v1003
    %v1022 = vadd.f32 %v966, %v1016
    %v1023 = vmul.f32 %v1019, 0.5
    %v1024 = vtanh.pop %v1023
    %v1025 = vmul.f32 %v1024, 0.5
    %v1026 = vadd.f32 %v1025, 0.5
    %v1027 = vmul.f32 %v1020, 0.5
    %v1028 = vtanh.pop %v1027
    %v1029 = vmul.f32 %v1028, 0.5
    %v1030 = vadd.f32 %v1029, 0.5
    %v1031 = vtanh.pop %v1021
    %v1032 = vmul.f32 %v1022, 0.5
    %v1033 = vtanh.pop %v1032
    %v1034 = vmul.f32 %v1033, 0.5
    %v1035 = vadd.f32 %v1034, 0.5
    %v1036 = vmul.f32 %v1030, %v948
    %v1037 = vmul.f32 %v1026, %v1031
    %v1038 = vadd.f32 %v1036, %v1037
    %v1039 = vtanh.pop %v1038
    %v1040 = vmul.f32 %v1035, %v1039
    %v1041 = vpack.c.bf16 %v1040, %v1040
    %s1042 = scalar_lea.vmem [#allocation3], 12
    %1043 = vst [vmem:[%s1042] sm:$0xf] %v1041
    %s1044 = smul.u32 4, 4
    %s1045 = smul.addr %s1044, 4
    %s1046 = scalar_lea.vmem [#allocation2], %s1045
    %v1047 = vld [vmem:[%s1046] sm:$0xff]
    %v1048 = vld [vmem:[%s1046 + $0x8] sm:$0xff]
    %v1049 = vunpack.c.l.bf16 %v1047
    %v1050 = vunpack.c.h.bf16 %v1047
    %v1051 = vunpack.c.l.bf16 %v1048
    %v1052 = vunpack.c.h.bf16 %v1048
    %v1053 = vadd.f32 %v1049, %v526
    %v1054 = vadd.f32 %v1050, %v527
    %v1055 = vadd.f32 %v1051, %v528
    %v1056 = vadd.f32 %v1052, %v529
    %1057 = vmatpush.bf16.msra.mxu0 %v662
    %1058 = vmatpush.bf16.msra.mxu0 %v658
    %1059 = vmatpush.bf16.msra.mxu0 %v654
    %1060 = vmatpush.bf16.msra.mxu0 %v650
    %1061 = vmatpush.bf16.msra.mxu0 %v646
    %1062 = vmatpush.bf16.msra.mxu0 %v642
    %1063 = vmatpush.bf16.msra.mxu0 %v638
    %1064 = vmatpush.bf16.msra.mxu0 %v634
    %1065 = vmatmul.bf16.gmra.mxu0 %v1041
    %v1066 = vpop.f32.mrf.mxu0
    %v1067 = vadd.f32 0.0, %v1066
    %v1068 = vpop.f32.mrf.mxu0
    %1069 = vdwg.mxu0
    %1070 = vmatpush.bf16.msra.mxu0 %v663
    %1071 = vmatpush.bf16.msra.mxu0 %v659
    %1072 = vmatpush.bf16.msra.mxu0 %v655
    %1073 = vmatpush.bf16.msra.mxu0 %v651
    %1074 = vmatpush.bf16.msra.mxu0 %v647
    %1075 = vmatpush.bf16.msra.mxu0 %v643
    %1076 = vmatpush.bf16.msra.mxu0 %v639
    %1077 = vmatpush.bf16.msra.mxu0 %v635
    %1078 = vmatmul.bf16.gmra.mxu0 %v1041
    %v1079 = vpop.f32.mrf.mxu0
    %v1080 = vadd.f32 0.0, %v1079
    %v1081 = vpop.f32.mrf.mxu0
    %1082 = vdwg.mxu0
    %1083 = vmatpush.bf16.msra.mxu0 %v664
    %1084 = vmatpush.bf16.msra.mxu0 %v660
    %1085 = vmatpush.bf16.msra.mxu0 %v656
    %1086 = vmatpush.bf16.msra.mxu0 %v652
    %1087 = vmatpush.bf16.msra.mxu0 %v648
    %1088 = vmatpush.bf16.msra.mxu0 %v644
    %1089 = vmatpush.bf16.msra.mxu0 %v640
    %1090 = vmatpush.bf16.msra.mxu0 %v636
    %1091 = vmatmul.bf16.gmra.mxu0 %v1041
    %v1092 = vpop.f32.mrf.mxu0
    %v1093 = vadd.f32 0.0, %v1092
    %v1094 = vpop.f32.mrf.mxu0
    %1095 = vdwg.mxu0
    %1096 = vmatpush.bf16.msra.mxu0 %v665
    %1097 = vmatpush.bf16.msra.mxu0 %v661
    %1098 = vmatpush.bf16.msra.mxu0 %v657
    %1099 = vmatpush.bf16.msra.mxu0 %v653
    %1100 = vmatpush.bf16.msra.mxu0 %v649
    %1101 = vmatpush.bf16.msra.mxu0 %v645
    %1102 = vmatpush.bf16.msra.mxu0 %v641
    %1103 = vmatpush.bf16.msra.mxu0 %v637
    %1104 = vmatmul.bf16.gmra.mxu0 %v1041
    %v1105 = vpop.f32.mrf.mxu0
    %v1106 = vadd.f32 0.0, %v1105
    %v1107 = vpop.f32.mrf.mxu0
    %1108 = vdwg.mxu0
    %v1109 = vadd.f32 %v1053, %v1067
    %v1110 = vadd.f32 %v1054, %v1080
    %v1111 = vadd.f32 %v1055, %v1093
    %v1112 = vadd.f32 %v1056, %v1106
    %v1113 = vmul.f32 %v1109, 0.5
    %v1114 = vtanh.pop %v1113
    %v1115 = vmul.f32 %v1114, 0.5
    %v1116 = vadd.f32 %v1115, 0.5
    %v1117 = vmul.f32 %v1110, 0.5
    %v1118 = vtanh.pop %v1117
    %v1119 = vmul.f32 %v1118, 0.5
    %v1120 = vadd.f32 %v1119, 0.5
    %v1121 = vtanh.pop %v1111
    %v1122 = vmul.f32 %v1112, 0.5
    %v1123 = vtanh.pop %v1122
    %v1124 = vmul.f32 %v1123, 0.5
    %v1125 = vadd.f32 %v1124, 0.5
    %v1126 = vmul.f32 %v1120, %v1038
    %v1127 = vmul.f32 %v1116, %v1121
    %v1128 = vadd.f32 %v1126, %v1127
    %v1129 = vtanh.pop %v1128
    %v1130 = vmul.f32 %v1125, %v1129
    %v1131 = vpack.c.bf16 %v1130, %v1130
    %s1132 = scalar_lea.vmem [#allocation3], 16
    %1133 = vst [vmem:[%s1132] sm:$0xf] %v1131
    %s1134 = smul.u32 5, 4
    %s1135 = smul.addr %s1134, 4
    %s1136 = scalar_lea.vmem [#allocation2], %s1135
    %v1137 = vld [vmem:[%s1136] sm:$0xff]
    %v1138 = vld [vmem:[%s1136 + $0x8] sm:$0xff]
    %v1139 = vunpack.c.l.bf16 %v1137
    %v1140 = vunpack.c.h.bf16 %v1137
    %v1141 = vunpack.c.l.bf16 %v1138
    %v1142 = vunpack.c.h.bf16 %v1138
    %v1143 = vadd.f32 %v1139, %v526
    %v1144 = vadd.f32 %v1140, %v527
    %v1145 = vadd.f32 %v1141, %v528
    %v1146 = vadd.f32 %v1142, %v529
    %1147 = vmatpush.bf16.msra.mxu0 %v662
    %1148 = vmatpush.bf16.msra.mxu0 %v658
    %1149 = vmatpush.bf16.msra.mxu0 %v654
    %1150 = vmatpush.bf16.msra.mxu0 %v650
    %1151 = vmatpush.bf16.msra.mxu0 %v646
    %1152 = vmatpush.bf16.msra.mxu0 %v642
    %1153 = vmatpush.bf16.msra.mxu0 %v638
    %1154 = vmatpush.bf16.msra.mxu0 %v634
    %1155 = vmatmul.bf16.gmra.mxu0 %v1131
    %v1156 = vpop.f32.mrf.mxu0
    %v1157 = vadd.f32 0.0, %v1156
    %v1158 = vpop.f32.mrf.mxu0
    %1159 = vdwg.mxu0
    %1160 = vmatpush.bf16.msra.mxu0 %v663
    %1161 = vmatpush.bf16.msra.mxu0 %v659
    %1162 = vmatpush.bf16.msra.mxu0 %v655
    %1163 = vmatpush.bf16.msra.mxu0 %v651
    %1164 = vmatpush.bf16.msra.mxu0 %v647
    %1165 = vmatpush.bf16.msra.mxu0 %v643
    %1166 = vmatpush.bf16.msra.mxu0 %v639
    %1167 = vmatpush.bf16.msra.mxu0 %v635
    %1168 = vmatmul.bf16.gmra.mxu0 %v1131
    %v1169 = vpop.f32.mrf.mxu0
    %v1170 = vadd.f32 0.0, %v1169
    %v1171 = vpop.f32.mrf.mxu0
    %1172 = vdwg.mxu0
    %1173 = vmatpush.bf16.msra.mxu0 %v664
    %1174 = vmatpush.bf16.msra.mxu0 %v660
    %1175 = vmatpush.bf16.msra.mxu0 %v656
    %1176 = vmatpush.bf16.msra.mxu0 %v652
    %1177 = vmatpush.bf16.msra.mxu0 %v648
    %1178 = vmatpush.bf16.msra.mxu0 %v644
    %1179 = vmatpush.bf16.msra.mxu0 %v640
    %1180 = vmatpush.bf16.msra.mxu0 %v636
    %1181 = vmatmul.bf16.gmra.mxu0 %v1131
    %v1182 = vpop.f32.mrf.mxu0
    %v1183 = vadd.f32 0.0, %v1182
    %v1184 = vpop.f32.mrf.mxu0
    %1185 = vdwg.mxu0
    %1186 = vmatpush.bf16.msra.mxu0 %v665
    %1187 = vmatpush.bf16.msra.mxu0 %v661
    %1188 = vmatpush.bf16.msra.mxu0 %v657
    %1189 = vmatpush.bf16.msra.mxu0 %v653
    %1190 = vmatpush.bf16.msra.mxu0 %v649
    %1191 = vmatpush.bf16.msra.mxu0 %v645
    %1192 = vmatpush.bf16.msra.mxu0 %v641
    %1193 = vmatpush.bf16.msra.mxu0 %v637
    %1194 = vmatmul.bf16.gmra.mxu0 %v1131
    %v1195 = vpop.f32.mrf.mxu0
    %v1196 = vadd.f32 0.0, %v1195
    %v1197 = vpop.f32.mrf.mxu0
    %1198 = vdwg.mxu0
    %v1199 = vadd.f32 %v1143, %v1157
    %v1200 = vadd.f32 %v1144, %v1170
    %v1201 = vadd.f32 %v1145, %v1183
    %v1202 = vadd.f32 %v1146, %v1196
    %v1203 = vmul.f32 %v1199, 0.5
    %v1204 = vtanh.pop %v1203
    %v1205 = vmul.f32 %v1204, 0.5
    %v1206 = vadd.f32 %v1205, 0.5
    %v1207 = vmul.f32 %v1200, 0.5
    %v1208 = vtanh.pop %v1207
    %v1209 = vmul.f32 %v1208, 0.5
    %v1210 = vadd.f32 %v1209, 0.5
    %v1211 = vtanh.pop %v1201
    %v1212 = vmul.f32 %v1202, 0.5
    %v1213 = vtanh.pop %v1212
    %v1214 = vmul.f32 %v1213, 0.5
    %v1215 = vadd.f32 %v1214, 0.5
    %v1216 = vmul.f32 %v1210, %v1128
    %v1217 = vmul.f32 %v1206, %v1211
    %v1218 = vadd.f32 %v1216, %v1217
    %v1219 = vtanh.pop %v1218
    %v1220 = vmul.f32 %v1215, %v1219
    %v1221 = vpack.c.bf16 %v1220, %v1220
    %s1222 = scalar_lea.vmem [#allocation3], 20
    %1223 = vst [vmem:[%s1222] sm:$0xf] %v1221
    %s1224 = smul.u32 6, 4
    %s1225 = smul.addr %s1224, 4
    %s1226 = scalar_lea.vmem [#allocation2], %s1225
    %v1227 = vld [vmem:[%s1226] sm:$0xff]
    %v1228 = vld [vmem:[%s1226 + $0x8] sm:$0xff]
    %v1229 = vunpack.c.l.bf16 %v1227
    %v1230 = vunpack.c.h.bf16 %v1227
    %v1231 = vunpack.c.l.bf16 %v1228
    %v1232 = vunpack.c.h.bf16 %v1228
    %v1233 = vadd.f32 %v1229, %v526
    %v1234 = vadd.f32 %v1230, %v527
    %v1235 = vadd.f32 %v1231, %v528
    %v1236 = vadd.f32 %v1232, %v529
    %1237 = vmatpush.bf16.msra.mxu0 %v662
    %1238 = vmatpush.bf16.msra.mxu0 %v658
    %1239 = vmatpush.bf16.msra.mxu0 %v654
    %1240 = vmatpush.bf16.msra.mxu0 %v650
    %1241 = vmatpush.bf16.msra.mxu0 %v646
    %1242 = vmatpush.bf16.msra.mxu0 %v642
    %1243 = vmatpush.bf16.msra.mxu0 %v638
    %1244 = vmatpush.bf16.msra.mxu0 %v634
    %1245 = vmatmul.bf16.gmra.mxu0 %v1221
    %v1246 = vpop.f32.mrf.mxu0
    %v1247 = vadd.f32 0.0, %v1246
    %v1248 = vpop.f32.mrf.mxu0
    %1249 = vdwg.mxu0
    %1250 = vmatpush.bf16.msra.mxu0 %v663
    %1251 = vmatpush.bf16.msra.mxu0 %v659
    %1252 = vmatpush.bf16.msra.mxu0 %v655
    %1253 = vmatpush.bf16.msra.mxu0 %v651
    %1254 = vmatpush.bf16.msra.mxu0 %v647
    %1255 = vmatpush.bf16.msra.mxu0 %v643
    %1256 = vmatpush.bf16.msra.mxu0 %v639
    %1257 = vmatpush.bf16.msra.mxu0 %v635
    %1258 = vmatmul.bf16.gmra.mxu0 %v1221
    %v1259 = vpop.f32.mrf.mxu0
    %v1260 = vadd.f32 0.0, %v1259
    %v1261 = vpop.f32.mrf.mxu0
    %1262 = vdwg.mxu0
    %1263 = vmatpush.bf16.msra.mxu0 %v664
    %1264 = vmatpush.bf16.msra.mxu0 %v660
    %1265 = vmatpush.bf16.msra.mxu0 %v656
    %1266 = vmatpush.bf16.msra.mxu0 %v652
    %1267 = vmatpush.bf16.msra.mxu0 %v648
    %1268 = vmatpush.bf16.msra.mxu0 %v644
    %1269 = vmatpush.bf16.msra.mxu0 %v640
    %1270 = vmatpush.bf16.msra.mxu0 %v636
    %1271 = vmatmul.bf16.gmra.mxu0 %v1221
    %v1272 = vpop.f32.mrf.mxu0
    %v1273 = vadd.f32 0.0, %v1272
    %v1274 = vpop.f32.mrf.mxu0
    %1275 = vdwg.mxu0
    %1276 = vmatpush.bf16.msra.mxu0 %v665
    %1277 = vmatpush.bf16.msra.mxu0 %v661
    %1278 = vmatpush.bf16.msra.mxu0 %v657
    %1279 = vmatpush.bf16.msra.mxu0 %v653
    %1280 = vmatpush.bf16.msra.mxu0 %v649
    %1281 = vmatpush.bf16.msra.mxu0 %v645
    %1282 = vmatpush.bf16.msra.mxu0 %v641
    %1283 = vmatpush.bf16.msra.mxu0 %v637
    %1284 = vmatmul.bf16.gmra.mxu0 %v1221
    %v1285 = vpop.f32.mrf.mxu0
    %v1286 = vadd.f32 0.0, %v1285
    %v1287 = vpop.f32.mrf.mxu0
    %1288 = vdwg.mxu0
    %v1289 = vadd.f32 %v1233, %v1247
    %v1290 = vadd.f32 %v1234, %v1260
    %v1291 = vadd.f32 %v1235, %v1273
    %v1292 = vadd.f32 %v1236, %v1286
    %v1293 = vmul.f32 %v1289, 0.5
    %v1294 = vtanh.pop %v1293
    %v1295 = vmul.f32 %v1294, 0.5
    %v1296 = vadd.f32 %v1295, 0.5
    %v1297 = vmul.f32 %v1290, 0.5
    %v1298 = vtanh.pop %v1297
    %v1299 = vmul.f32 %v1298, 0.5
    %v1300 = vadd.f32 %v1299, 0.5
    %v1301 = vtanh.pop %v1291
    %v1302 = vmul.f32 %v1292, 0.5
    %v1303 = vtanh.pop %v1302
    %v1304 = vmul.f32 %v1303, 0.5
    %v1305 = vadd.f32 %v1304, 0.5
    %v1306 = vmul.f32 %v1300, %v1218
    %v1307 = vmul.f32 %v1296, %v1301
    %v1308 = vadd.f32 %v1306, %v1307
    %v1309 = vtanh.pop %v1308
    %v1310 = vmul.f32 %v1305, %v1309
    %v1311 = vpack.c.bf16 %v1310, %v1310
    %s1312 = scalar_lea.vmem [#allocation3], 24
    %1313 = vst [vmem:[%s1312] sm:$0xf] %v1311
    %s1314 = smul.u32 7, 4
    %s1315 = smul.addr %s1314, 4
    %s1316 = scalar_lea.vmem [#allocation2], %s1315
    %v1317 = vld [vmem:[%s1316] sm:$0xff]
    %v1318 = vld [vmem:[%s1316 + $0x8] sm:$0xff]
    %v1319 = vunpack.c.l.bf16 %v1317
    %v1320 = vunpack.c.h.bf16 %v1317
    %v1321 = vunpack.c.l.bf16 %v1318
    %v1322 = vunpack.c.h.bf16 %v1318
    %v1323 = vadd.f32 %v1319, %v526
    %v1324 = vadd.f32 %v1320, %v527
    %v1325 = vadd.f32 %v1321, %v528
    %v1326 = vadd.f32 %v1322, %v529
    %1327 = vmatpush.bf16.msra.mxu0 %v662
    %1328 = vmatpush.bf16.msra.mxu0 %v658
    %1329 = vmatpush.bf16.msra.mxu0 %v654
    %1330 = vmatpush.bf16.msra.mxu0 %v650
    %1331 = vmatpush.bf16.msra.mxu0 %v646
    %1332 = vmatpush.bf16.msra.mxu0 %v642
    %1333 = vmatpush.bf16.msra.mxu0 %v638
    %1334 = vmatpush.bf16.msra.mxu0 %v634
    %1335 = vmatmul.bf16.gmra.mxu0 %v1311
    %v1336 = vpop.f32.mrf.mxu0
    %v1337 = vadd.f32 0.0, %v1336
    %v1338 = vpop.f32.mrf.mxu0
    %1339 = vdwg.mxu0
    %1340 = vmatpush.bf16.msra.mxu0 %v663
    %1341 = vmatpush.bf16.msra.mxu0 %v659
    %1342 = vmatpush.bf16.msra.mxu0 %v655
    %1343 = vmatpush.bf16.msra.mxu0 %v651
    %1344 = vmatpush.bf16.msra.mxu0 %v647
    %1345 = vmatpush.bf16.msra.mxu0 %v643
    %1346 = vmatpush.bf16.msra.mxu0 %v639
    %1347 = vmatpush.bf16.msra.mxu0 %v635
    %1348 = vmatmul.bf16.gmra.mxu0 %v1311
    %v1349 = vpop.f32.mrf.mxu0
    %v1350 = vadd.f32 0.0, %v1349
    %v1351 = vpop.f32.mrf.mxu0
    %1352 = vdwg.mxu0
    %1353 = vmatpush.bf16.msra.mxu0 %v664
    %1354 = vmatpush.bf16.msra.mxu0 %v660
    %1355 = vmatpush.bf16.msra.mxu0 %v656
    %1356 = vmatpush.bf16.msra.mxu0 %v652
    %1357 = vmatpush.bf16.msra.mxu0 %v648
    %1358 = vmatpush.bf16.msra.mxu0 %v644
    %1359 = vmatpush.bf16.msra.mxu0 %v640
    %1360 = vmatpush.bf16.msra.mxu0 %v636
    %1361 = vmatmul.bf16.gmra.mxu0 %v1311
    %v1362 = vpop.f32.mrf.mxu0
    %v1363 = vadd.f32 0.0, %v1362
    %v1364 = vpop.f32.mrf.mxu0
    %1365 = vdwg.mxu0
    %1366 = vmatpush.bf16.msra.mxu0 %v665
    %1367 = vmatpush.bf16.msra.mxu0 %v661
    %1368 = vmatpush.bf16.msra.mxu0 %v657
    %1369 = vmatpush.bf16.msra.mxu0 %v653
    %1370 = vmatpush.bf16.msra.mxu0 %v649
    %1371 = vmatpush.bf16.msra.mxu0 %v645
    %1372 = vmatpush.bf16.msra.mxu0 %v641
    %1373 = vmatpush.bf16.msra.mxu0 %v637
    %1374 = vmatmul.bf16.gmra.mxu0 %v1311
    %v1375 = vpop.f32.mrf.mxu0
    %v1376 = vadd.f32 0.0, %v1375
    %v1377 = vpop.f32.mrf.mxu0
    %1378 = vdwg.mxu0
    %v1379 = vadd.f32 %v1323, %v1337
    %v1380 = vadd.f32 %v1324, %v1350
    %v1381 = vadd.f32 %v1325, %v1363
    %v1382 = vadd.f32 %v1326, %v1376
    %v1383 = vmul.f32 %v1379, 0.5
    %v1384 = vtanh.pop %v1383
    %v1385 = vmul.f32 %v1384, 0.5
    %v1386 = vadd.f32 %v1385, 0.5
    %v1387 = vmul.f32 %v1380, 0.5
    %v1388 = vtanh.pop %v1387
    %v1389 = vmul.f32 %v1388, 0.5
    %v1390 = vadd.f32 %v1389, 0.5
    %v1391 = vtanh.pop %v1381
    %v1392 = vmul.f32 %v1382, 0.5
    %v1393 = vtanh.pop %v1392
    %v1394 = vmul.f32 %v1393, 0.5
    %v1395 = vadd.f32 %v1394, 0.5
    %v1396 = vmul.f32 %v1390, %v1308
    %v1397 = vmul.f32 %v1386, %v1391
    %v1398 = vadd.f32 %v1396, %v1397
    %v1399 = vtanh.pop %v1398
    %v1400 = vmul.f32 %v1395, %v1399
    %v1401 = vpack.c.bf16 %v1400, %v1400
    %s1402 = scalar_lea.vmem [#allocation3], 28
    %1403 = vst [vmem:[%s1402] sm:$0xf] %v1401
    %s1404 = scalar_lea.vmem [#allocation10], 256
    %v1405 = vld [vmem:[%s1404] sm:$0xff]
    %v1406 = vld [vmem:[%s1404 + $0x8] sm:$0xff]
    %v1407 = vld [vmem:[%s1404 + $0x10] sm:$0xff]
    %v1408 = vld [vmem:[%s1404 + $0x18] sm:$0xff]
    %v1409 = vld [vmem:[%s1404 + $0x20] sm:$0xff]
    %v1410 = vld [vmem:[%s1404 + $0x28] sm:$0xff]
    %v1411 = vld [vmem:[%s1404 + $0x30] sm:$0xff]
    %v1412 = vld [vmem:[%s1404 + $0x38] sm:$0xff]
    %v1413 = vld [vmem:[%s1404 + $0x40] sm:$0xff]
    %v1414 = vld [vmem:[%s1404 + $0x48] sm:$0xff]
    %v1415 = vld [vmem:[%s1404 + $0x50] sm:$0xff]
    %v1416 = vld [vmem:[%s1404 + $0x58] sm:$0xff]
    %v1417 = vld [vmem:[%s1404 + $0x60] sm:$0xff]
    %v1418 = vld [vmem:[%s1404 + $0x68] sm:$0xff]
    %v1419 = vld [vmem:[%s1404 + $0x70] sm:$0xff]
    %v1420 = vld [vmem:[%s1404 + $0x78] sm:$0xff]
    %v1421 = vld [vmem:[%s1404 + $0x80] sm:$0xff]
    %v1422 = vld [vmem:[%s1404 + $0x88] sm:$0xff]
    %v1423 = vld [vmem:[%s1404 + $0x90] sm:$0xff]
    %v1424 = vld [vmem:[%s1404 + $0x98] sm:$0xff]
    %v1425 = vld [vmem:[%s1404 + $0xa0] sm:$0xff]
    %v1426 = vld [vmem:[%s1404 + $0xa8] sm:$0xff]
    %v1427 = vld [vmem:[%s1404 + $0xb0] sm:$0xff]
    %v1428 = vld [vmem:[%s1404 + $0xb8] sm:$0xff]
    %v1429 = vld [vmem:[%s1404 + $0xc0] sm:$0xff]
    %v1430 = vld [vmem:[%s1404 + $0xc8] sm:$0xff]
    %v1431 = vld [vmem:[%s1404 + $0xd0] sm:$0xff]
    %v1432 = vld [vmem:[%s1404 + $0xd8] sm:$0xff]
    %v1433 = vld [vmem:[%s1404 + $0xe0] sm:$0xff]
    %v1434 = vld [vmem:[%s1404 + $0xe8] sm:$0xff]
    %v1435 = vld [vmem:[%s1404 + $0xf0] sm:$0xff]
    %v1436 = vld [vmem:[%s1404 + $0xf8] sm:$0xff]
    %s1437 = scalar_lea.vmem %s5, 4
    %v1438 = vld [vmem:[%s1437] sm:$0xf]
    %v1439 = vld [vmem:[#allocation3] sm:$0xf]
    %v1440 = vld [vmem:[#allocation3 + $0x4] sm:$0xf]
    %v1441 = vld [vmem:[#allocation3 + $0x8] sm:$0xf]
    %v1442 = vld [vmem:[#allocation3 + $0xc] sm:$0xf]
    %v1443 = vld [vmem:[#allocation3 + $0x10] sm:$0xf]
    %v1444 = vld [vmem:[#allocation3 + $0x14] sm:$0xf]
    %v1445 = vld [vmem:[#allocation3 + $0x18] sm:$0xf]
    %v1446 = vld [vmem:[#allocation3 + $0x1c] sm:$0xf]
    %v1447 = vld [vmem:[#allocation9] sm:$0xff]
    %v1448 = vld [vmem:[#allocation9 + $0x8] sm:$0xff]
    %v1449 = vld [vmem:[#allocation9 + $0x10] sm:$0xff]
    %v1450 = vld [vmem:[#allocation9 + $0x18] sm:$0xff]
    %v1451 = vld [vmem:[#allocation9 + $0x20] sm:$0xff]
    %v1452 = vld [vmem:[#allocation9 + $0x28] sm:$0xff]
    %v1453 = vld [vmem:[#allocation9 + $0x30] sm:$0xff]
    %v1454 = vld [vmem:[#allocation9 + $0x38] sm:$0xff]
    %v1455 = vld [vmem:[#allocation9 + $0x40] sm:$0xff]
    %v1456 = vld [vmem:[#allocation9 + $0x48] sm:$0xff]
    %v1457 = vld [vmem:[#allocation9 + $0x50] sm:$0xff]
    %v1458 = vld [vmem:[#allocation9 + $0x58] sm:$0xff]
    %v1459 = vld [vmem:[#allocation9 + $0x60] sm:$0xff]
    %v1460 = vld [vmem:[#allocation9 + $0x68] sm:$0xff]
    %v1461 = vld [vmem:[#allocation9 + $0x70] sm:$0xff]
    %v1462 = vld [vmem:[#allocation9 + $0x78] sm:$0xff]
    %v1463 = vld [vmem:[#allocation9 + $0x80] sm:$0xff]
    %v1464 = vld [vmem:[#allocation9 + $0x88] sm:$0xff]
    %v1465 = vld [vmem:[#allocation9 + $0x90] sm:$0xff]
    %v1466 = vld [vmem:[#allocation9 + $0x98] sm:$0xff]
    %v1467 = vld [vmem:[#allocation9 + $0xa0] sm:$0xff]
    %v1468 = vld [vmem:[#allocation9 + $0xa8] sm:$0xff]
    %v1469 = vld [vmem:[#allocation9 + $0xb0] sm:$0xff]
    %v1470 = vld [vmem:[#allocation9 + $0xb8] sm:$0xff]
    %v1471 = vld [vmem:[#allocation9 + $0xc0] sm:$0xff]
    %v1472 = vld [vmem:[#allocation9 + $0xc8] sm:$0xff]
    %v1473 = vld [vmem:[#allocation9 + $0xd0] sm:$0xff]
    %v1474 = vld [vmem:[#allocation9 + $0xd8] sm:$0xff]
    %v1475 = vld [vmem:[#allocation9 + $0xe0] sm:$0xff]
    %v1476 = vld [vmem:[#allocation9 + $0xe8] sm:$0xff]
    %v1477 = vld [vmem:[#allocation9 + $0xf0] sm:$0xff]
    %v1478 = vld [vmem:[#allocation9 + $0xf8] sm:$0xff]
    %v1487 = vunpack.c.l.b16 %v1439
    %v1488 = vunpack.c.l.b16 %v1440
    %v1489 = vunpack.c.l.b16 %v1441
    %v1490 = vunpack.c.l.b16 %v1442
    %v1491 = vunpack.c.l.b16 %v1443
    %v1492 = vunpack.c.l.b16 %v1444
    %v1493 = vunpack.c.l.b16 %v1445
    %v1494 = vunpack.c.l.b16 %v1446
    %v1495 = vpack.c.b16 %v1488, %v1487
    %v1496 = vpack.c.b16 %v1490, %v1489
    %v1497 = vpack.c.b16 %v1492, %v1491
    %v1498 = vpack.c.b16 %v1494, %v1493
    %v1535 = vunpack.c.l.b16 %v1447
    %v1536 = vunpack.c.h.b16 %v1447
    %v1537 = vunpack.c.l.b16 %v1448
    %v1538 = vunpack.c.h.b16 %v1448
    %v1539 = vunpack.c.l.b16 %v1449
    %v1540 = vunpack.c.h.b16 %v1449
    %v1541 = vunpack.c.l.b16 %v1450
    %v1542 = vunpack.c.h.b16 %v1450
    %v1543 = vunpack.c.l.b16 %v1451
    %v1544 = vunpack.c.h.b16 %v1451
    %v1545 = vunpack.c.l.b16 %v1452
    %v1546 = vunpack.c.h.b16 %v1452
    %v1547 = vunpack.c.l.b16 %v1453
    %v1548 = vunpack.c.h.b16 %v1453
    %v1549 = vunpack.c.l.b16 %v1454
    %v1550 = vunpack.c.h.b16 %v1454
    %v1551 = vunpack.c.l.b16 %v1455
    %v1552 = vunpack.c.h.b16 %v1455
    %v1553 = vunpack.c.l.b16 %v1456
    %v1554 = vunpack.c.h.b16 %v1456
    %v1555 = vunpack.c.l.b16 %v1457
    %v1556 = vunpack.c.h.b16 %v1457
    %v1557 = vunpack.c.l.b16 %v1458
    %v1558 = vunpack.c.h.b16 %v1458
    %v1559 = vunpack.c.l.b16 %v1459
    %v1560 = vunpack.c.h.b16 %v1459
    %v1561 = vunpack.c.l.b16 %v1460
    %v1562 = vunpack.c.h.b16 %v1460
    %v1563 = vunpack.c.l.b16 %v1461
    %v1564 = vunpack.c.h.b16 %v1461
    %v1565 = vunpack.c.l.b16 %v1462
    %v1566 = vunpack.c.h.b16 %v1462
    %v1567 = vunpack.c.l.b16 %v1463
    %v1568 = vunpack.c.h.b16 %v1463
    %v1569 = vunpack.c.l.b16 %v1464
    %v1570 = vunpack.c.h.b16 %v1464
    %v1571 = vunpack.c.l.b16 %v1465
    %v1572 = vunpack.c.h.b16 %v1465
    %v1573 = vunpack.c.l.b16 %v1466
    %v1574 = vunpack.c.h.b16 %v1466
    %v1575 = vunpack.c.l.b16 %v1467
    %v1576 = vunpack.c.h.b16 %v1467
    %v1577 = vunpack.c.l.b16 %v1468
    %v1578 = vunpack.c.h.b16 %v1468
    %v1579 = vunpack.c.l.b16 %v1469
    %v1580 = vunpack.c.h.b16 %v1469
    %v1581 = vunpack.c.l.b16 %v1470
    %v1582 = vunpack.c.h.b16 %v1470
    %v1583 = vunpack.c.l.b16 %v1471
    %v1584 = vunpack.c.h.b16 %v1471
    %v1585 = vunpack.c.l.b16 %v1472
    %v1586 = vunpack.c.h.b16 %v1472
    %v1587 = vunpack.c.l.b16 %v1473
    %v1588 = vunpack.c.h.b16 %v1473
    %v1589 = vunpack.c.l.b16 %v1474
    %v1590 = vunpack.c.h.b16 %v1474
    %v1591 = vunpack.c.l.b16 %v1475
    %v1592 = vunpack.c.h.b16 %v1475
    %v1593 = vunpack.c.l.b16 %v1476
    %v1594 = vunpack.c.h.b16 %v1476
    %v1595 = vunpack.c.l.b16 %v1477
    %v1596 = vunpack.c.h.b16 %v1477
    %v1597 = vunpack.c.l.b16 %v1478
    %v1598 = vunpack.c.h.b16 %v1478
    %v1599 = vpack.c.b16 %v1539, %v1535
    %v1600 = vpack.c.b16 %v1540, %v1536
    %v1601 = vpack.c.b16 %v1541, %v1537
    %v1602 = vpack.c.b16 %v1542, %v1538
    %v1603 = vpack.c.b16 %v1547, %v1543
    %v1604 = vpack.c.b16 %v1548, %v1544
    %v1605 = vpack.c.b16 %v1549, %v1545
    %v1606 = vpack.c.b16 %v1550, %v1546
    %v1607 = vpack.c.b16 %v1555, %v1551
    %v1608 = vpack.c.b16 %v1556, %v1552
    %v1609 = vpack.c.b16 %v1557, %v1553
    %v1610 = vpack.c.b16 %v1558, %v1554
    %v1611 = vpack.c.b16 %v1563, %v1559
    %v1612 = vpack.c.b16 %v1564, %v1560
    %v1613 = vpack.c.b16 %v1565, %v1561
    %v1614 = vpack.c.b16 %v1566, %v1562
    %v1615 = vpack.c.b16 %v1571, %v1567
    %v1616 = vpack.c.b16 %v1572, %v1568
    %v1617 = vpack.c.b16 %v1573, %v1569
    %v1618 = vpack.c.b16 %v1574, %v1570
    %v1619 = vpack.c.b16 %v1579, %v1575
    %v1620 = vpack.c.b16 %v1580, %v1576
    %v1621 = vpack.c.b16 %v1581, %v1577
    %v1622 = vpack.c.b16 %v1582, %v1578
    %v1623 = vpack.c.b16 %v1587, %v1583
    %v1624 = vpack.c.b16 %v1588, %v1584
    %v1625 = vpack.c.b16 %v1589, %v1585
    %v1626 = vpack.c.b16 %v1590, %v1586
    %v1627 = vpack.c.b16 %v1595, %v1591
    %v1628 = vpack.c.b16 %v1596, %v1592
    %v1629 = vpack.c.b16 %v1597, %v1593
    %v1630 = vpack.c.b16 %v1598, %v1594
    %1663 = vmatpush.bf16.msra.mxu0 %v1627
    %1664 = vmatpush.bf16.msra.mxu0 %v1623
    %1665 = vmatpush.bf16.msra.mxu0 %v1619
    %1666 = vmatpush.bf16.msra.mxu0 %v1615
    %1667 = vmatpush.bf16.msra.mxu0 %v1611
    %1668 = vmatpush.bf16.msra.mxu0 %v1607
    %1669 = vmatpush.bf16.msra.mxu0 %v1603
    %1670 = vmatpush.bf16.msra.mxu0 %v1599
    %1671 = vmatmul.bf16.gmra.mxu0 %v1495
    %v1672 = vpop.f32.mrf.mxu0
    %v1673 = vadd.f32 0.0, %v1672
    %v1674 = vpop.f32.mrf.mxu0
    %v1675 = vadd.f32 0.0, %v1674
    %1676 = vmatmul.bf16.gmra.mxu0 %v1496
    %v1677 = vpop.f32.mrf.mxu0
    %v1678 = vadd.f32 0.0, %v1677
    %v1679 = vpop.f32.mrf.mxu0
    %v1680 = vadd.f32 0.0, %v1679
    %1681 = vmatmul.bf16.gmra.mxu0 %v1497
    %v1682 = vpop.f32.mrf.mxu0
    %v1683 = vadd.f32 0.0, %v1682
    %v1684 = vpop.f32.mrf.mxu0
    %v1685 = vadd.f32 0.0, %v1684
    %1686 = vmatmul.bf16.gmra.mxu0 %v1498
    %v1687 = vpop.f32.mrf.mxu0
    %v1688 = vadd.f32 0.0, %v1687
    %v1689 = vpop.f32.mrf.mxu0
    %v1690 = vadd.f32 0.0, %v1689
    %1691 = vdwg.mxu0
    %1692 = vmatpush.bf16.msra.mxu0 %v1628
    %1693 = vmatpush.bf16.msra.mxu0 %v1624
    %1694 = vmatpush.bf16.msra.mxu0 %v1620
    %1695 = vmatpush.bf16.msra.mxu0 %v1616
    %1696 = vmatpush.bf16.msra.mxu0 %v1612
    %1697 = vmatpush.bf16.msra.mxu0 %v1608
    %1698 = vmatpush.bf16.msra.mxu0 %v1604
    %1699 = vmatpush.bf16.msra.mxu0 %v1600
    %1700 = vmatmul.bf16.gmra.mxu0 %v1495
    %v1701 = vpop.f32.mrf.mxu0
    %v1702 = vadd.f32 0.0, %v1701
    %v1703 = vpop.f32.mrf.mxu0
    %v1704 = vadd.f32 0.0, %v1703
    %1705 = vmatmul.bf16.gmra.mxu0 %v1496
    %v1706 = vpop.f32.mrf.mxu0
    %v1707 = vadd.f32 0.0, %v1706
    %v1708 = vpop.f32.mrf.mxu0
    %v1709 = vadd.f32 0.0, %v1708
    %1710 = vmatmul.bf16.gmra.mxu0 %v1497
    %v1711 = vpop.f32.mrf.mxu0
    %v1712 = vadd.f32 0.0, %v1711
    %v1713 = vpop.f32.mrf.mxu0
    %v1714 = vadd.f32 0.0, %v1713
    %1715 = vmatmul.bf16.gmra.mxu0 %v1498
    %v1716 = vpop.f32.mrf.mxu0
    %v1717 = vadd.f32 0.0, %v1716
    %v1718 = vpop.f32.mrf.mxu0
    %v1719 = vadd.f32 0.0, %v1718
    %1720 = vdwg.mxu0
    %1721 = vmatpush.bf16.msra.mxu0 %v1629
    %1722 = vmatpush.bf16.msra.mxu0 %v1625
    %1723 = vmatpush.bf16.msra.mxu0 %v1621
    %1724 = vmatpush.bf16.msra.mxu0 %v1617
    %1725 = vmatpush.bf16.msra.mxu0 %v1613
    %1726 = vmatpush.bf16.msra.mxu0 %v1609
    %1727 = vmatpush.bf16.msra.mxu0 %v1605
    %1728 = vmatpush.bf16.msra.mxu0 %v1601
    %1729 = vmatmul.bf16.gmra.mxu0 %v1495
    %v1730 = vpop.f32.mrf.mxu0
    %v1731 = vadd.f32 0.0, %v1730
    %v1732 = vpop.f32.mrf.mxu0
    %v1733 = vadd.f32 0.0, %v1732
    %1734 = vmatmul.bf16.gmra.mxu0 %v1496
    %v1735 = vpop.f32.mrf.mxu0
    %v1736 = vadd.f32 0.0, %v1735
    %v1737 = vpop.f32.mrf.mxu0
    %v1738 = vadd.f32 0.0, %v1737
    %1739 = vmatmul.bf16.gmra.mxu0 %v1497
    %v1740 = vpop.f32.mrf.mxu0
    %v1741 = vadd.f32 0.0, %v1740
    %v1742 = vpop.f32.mrf.mxu0
    %v1743 = vadd.f32 0.0, %v1742
    %1744 = vmatmul.bf16.gmra.mxu0 %v1498
    %v1745 = vpop.f32.mrf.mxu0
    %v1746 = vadd.f32 0.0, %v1745
    %v1747 = vpop.f32.mrf.mxu0
    %v1748 = vadd.f32 0.0, %v1747
    %1749 = vdwg.mxu0
    %1750 = vmatpush.bf16.msra.mxu0 %v1630
    %1751 = vmatpush.bf16.msra.mxu0 %v1626
    %1752 = vmatpush.bf16.msra.mxu0 %v1622
    %1753 = vmatpush.bf16.msra.mxu0 %v1618
    %1754 = vmatpush.bf16.msra.mxu0 %v1614
    %1755 = vmatpush.bf16.msra.mxu0 %v1610
    %1756 = vmatpush.bf16.msra.mxu0 %v1606
    %1757 = vmatpush.bf16.msra.mxu0 %v1602
    %1758 = vmatmul.bf16.gmra.mxu0 %v1495
    %v1759 = vpop.f32.mrf.mxu0
    %v1760 = vadd.f32 0.0, %v1759
    %v1761 = vpop.f32.mrf.mxu0
    %v1762 = vadd.f32 0.0, %v1761
    %1763 = vmatmul.bf16.gmra.mxu0 %v1496
    %v1764 = vpop.f32.mrf.mxu0
    %v1765 = vadd.f32 0.0, %v1764
    %v1766 = vpop.f32.mrf.mxu0
    %v1767 = vadd.f32 0.0, %v1766
    %1768 = vmatmul.bf16.gmra.mxu0 %v1497
    %v1769 = vpop.f32.mrf.mxu0
    %v1770 = vadd.f32 0.0, %v1769
    %v1771 = vpop.f32.mrf.mxu0
    %v1772 = vadd.f32 0.0, %v1771
    %1773 = vmatmul.bf16.gmra.mxu0 %v1498
    %v1774 = vpop.f32.mrf.mxu0
    %v1775 = vadd.f32 0.0, %v1774
    %v1776 = vpop.f32.mrf.mxu0
    %v1777 = vadd.f32 0.0, %v1776
    %1778 = vdwg.mxu0
    %v1779 = vpack.c.bf16 %v1702, %v1673
    %v1780 = vpack.c.bf16 %v1760, %v1731
    %v1781 = vpack.c.bf16 %v1704, %v1675
    %v1782 = vpack.c.bf16 %v1762, %v1733
    %v1783 = vpack.c.bf16 %v1707, %v1678
    %v1784 = vpack.c.bf16 %v1765, %v1736
    %v1785 = vpack.c.bf16 %v1709, %v1680
    %v1786 = vpack.c.bf16 %v1767, %v1738
    %v1787 = vpack.c.bf16 %v1712, %v1683
    %v1788 = vpack.c.bf16 %v1770, %v1741
    %v1789 = vpack.c.bf16 %v1714, %v1685
    %v1790 = vpack.c.bf16 %v1772, %v1743
    %v1791 = vpack.c.bf16 %v1717, %v1688
    %v1792 = vpack.c.bf16 %v1775, %v1746
    %v1793 = vpack.c.bf16 %v1719, %v1690
    %v1794 = vpack.c.bf16 %v1777, %v1748
    %1795 = vst [vmem:[#allocation2] sm:$0xff] %v1779
    %1796 = vst [vmem:[#allocation2 + $0x8] sm:$0xff] %v1780
    %1797 = vst [vmem:[#allocation2 + $0x10] sm:$0xff] %v1781
    %1798 = vst [vmem:[#allocation2 + $0x18] sm:$0xff] %v1782
    %1799 = vst [vmem:[#allocation2 + $0x20] sm:$0xff] %v1783
    %1800 = vst [vmem:[#allocation2 + $0x28] sm:$0xff] %v1784
    %1801 = vst [vmem:[#allocation2 + $0x30] sm:$0xff] %v1785
    %1802 = vst [vmem:[#allocation2 + $0x38] sm:$0xff] %v1786
    %1803 = vst [vmem:[#allocation2 + $0x40] sm:$0xff] %v1787
    %1804 = vst [vmem:[#allocation2 + $0x48] sm:$0xff] %v1788
    %1805 = vst [vmem:[#allocation2 + $0x50] sm:$0xff] %v1789
    %1806 = vst [vmem:[#allocation2 + $0x58] sm:$0xff] %v1790
    %1807 = vst [vmem:[#allocation2 + $0x60] sm:$0xff] %v1791
    %1808 = vst [vmem:[#allocation2 + $0x68] sm:$0xff] %v1792
    %1809 = vst [vmem:[#allocation2 + $0x70] sm:$0xff] %v1793
    %1810 = vst [vmem:[#allocation2 + $0x78] sm:$0xff] %v1794
    %v1811 = vld [vmem:[%s518] sm:$0xff]
    %v1812 = vld [vmem:[%s518 + $0x8] sm:$0xff]
    %v1813 = vunpack.c.l.bf16 %v1811
    %v1814 = vunpack.c.h.bf16 %v1811
    %v1815 = vunpack.c.l.bf16 %v1812
    %v1816 = vunpack.c.h.bf16 %v1812
    %v1818 = vperm.slane %v1438, 0
    %v1819 = vperm.slane %v1438, 1
    %v1820 = vperm.slane %v1438, 2
    %v1821 = vperm.slane %v1438, 3
    %v1826 = vadd.f32 %v1813, %v1818
    %v1827 = vadd.f32 %v1814, %v1819
    %v1828 = vadd.f32 %v1815, %v1820
    %v1829 = vadd.f32 %v1816, %v1821
    %v1862 = vunpack.c.l.b16 %v1405
    %v1863 = vunpack.c.h.b16 %v1405
    %v1864 = vunpack.c.l.b16 %v1406
    %v1865 = vunpack.c.h.b16 %v1406
    %v1866 = vunpack.c.l.b16 %v1407
    %v1867 = vunpack.c.h.b16 %v1407
    %v1868 = vunpack.c.l.b16 %v1408
    %v1869 = vunpack.c.h.b16 %v1408
    %v1870 = vunpack.c.l.b16 %v1409
    %v1871 = vunpack.c.h.b16 %v1409
    %v1872 = vunpack.c.l.b16 %v1410
    %v1873 = vunpack.c.h.b16 %v1410
    %v1874 = vunpack.c.l.b16 %v1411
    %v1875 = vunpack.c.h.b16 %v1411
    %v1876 = vunpack.c.l.b16 %v1412
    %v1877 = vunpack.c.h.b16 %v1412
    %v1878 = vunpack.c.l.b16 %v1413
    %v1879 = vunpack.c.h.b16 %v1413
    %v1880 = vunpack.c.l.b16 %v1414
    %v1881 = vunpack.c.h.b16 %v1414
    %v1882 = vunpack.c.l.b16 %v1415
    %v1883 = vunpack.c.h.b16 %v1415
    %v1884 = vunpack.c.l.b16 %v1416
    %v1885 = vunpack.c.h.b16 %v1416
    %v1886 = vunpack.c.l.b16 %v1417
    %v1887 = vunpack.c.h.b16 %v1417
    %v1888 = vunpack.c.l.b16 %v1418
    %v1889 = vunpack.c.h.b16 %v1418
    %v1890 = vunpack.c.l.b16 %v1419
    %v1891 = vunpack.c.h.b16 %v1419
    %v1892 = vunpack.c.l.b16 %v1420
    %v1893 = vunpack.c.h.b16 %v1420
    %v1894 = vunpack.c.l.b16 %v1421
    %v1895 = vunpack.c.h.b16 %v1421
    %v1896 = vunpack.c.l.b16 %v1422
    %v1897 = vunpack.c.h.b16 %v1422
    %v1898 = vunpack.c.l.b16 %v1423
    %v1899 = vunpack.c.h.b16 %v1423
    %v1900 = vunpack.c.l.b16 %v1424
    %v1901 = vunpack.c.h.b16 %v1424
    %v1902 = vunpack.c.l.b16 %v1425
    %v1903 = vunpack.c.h.b16 %v1425
    %v1904 = vunpack.c.l.b16 %v1426
    %v1905 = vunpack.c.h.b16 %v1426
    %v1906 = vunpack.c.l.b16 %v1427
    %v1907 = vunpack.c.h.b16 %v1427
    %v1908 = vunpack.c.l.b16 %v1428
    %v1909 = vunpack.c.h.b16 %v1428
    %v1910 = vunpack.c.l.b16 %v1429
    %v1911 = vunpack.c.h.b16 %v1429
    %v1912 = vunpack.c.l.b16 %v1430
    %v1913 = vunpack.c.h.b16 %v1430
    %v1914 = vunpack.c.l.b16 %v1431
    %v1915 = vunpack.c.h.b16 %v1431
    %v1916 = vunpack.c.l.b16 %v1432
    %v1917 = vunpack.c.h.b16 %v1432
    %v1918 = vunpack.c.l.b16 %v1433
    %v1919 = vunpack.c.h.b16 %v1433
    %v1920 = vunpack.c.l.b16 %v1434
    %v1921 = vunpack.c.h.b16 %v1434
    %v1922 = vunpack.c.l.b16 %v1435
    %v1923 = vunpack.c.h.b16 %v1435
    %v1924 = vunpack.c.l.b16 %v1436
    %v1925 = vunpack.c.h.b16 %v1436
    %v1926 = vpack.c.b16 %v1866, %v1862
    %v1927 = vpack.c.b16 %v1867, %v1863
    %v1928 = vpack.c.b16 %v1868, %v1864
    %v1929 = vpack.c.b16 %v1869, %v1865
    %v1930 = vpack.c.b16 %v1874, %v1870
    %v1931 = vpack.c.b16 %v1875, %v1871
    %v1932 = vpack.c.b16 %v1876, %v1872
    %v1933 = vpack.c.b16 %v1877, %v1873
    %v1934 = vpack.c.b16 %v1882, %v1878
    %v1935 = vpack.c.b16 %v1883, %v1879
    %v1936 = vpack.c.b16 %v1884, %v1880
    %v1937 = vpack.c.b16 %v1885, %v1881
    %v1938 = vpack.c.b16 %v1890, %v1886
    %v1939 = vpack.c.b16 %v1891, %v1887
    %v1940 = vpack.c.b16 %v1892, %v1888
    %v1941 = vpack.c.b16 %v1893, %v1889
    %v1942 = vpack.c.b16 %v1898, %v1894
    %v1943 = vpack.c.b16 %v1899, %v1895
    %v1944 = vpack.c.b16 %v1900, %v1896
    %v1945 = vpack.c.b16 %v1901, %v1897
    %v1946 = vpack.c.b16 %v1906, %v1902
    %v1947 = vpack.c.b16 %v1907, %v1903
    %v1948 = vpack.c.b16 %v1908, %v1904
    %v1949 = vpack.c.b16 %v1909, %v1905
    %v1950 = vpack.c.b16 %v1914, %v1910
    %v1951 = vpack.c.b16 %v1915, %v1911
    %v1952 = vpack.c.b16 %v1916, %v1912
    %v1953 = vpack.c.b16 %v1917, %v1913
    %v1954 = vpack.c.b16 %v1922, %v1918
    %v1955 = vpack.c.b16 %v1923, %v1919
    %v1956 = vpack.c.b16 %v1924, %v1920
    %v1957 = vpack.c.b16 %v1925, %v1921
    %1990 = vmatpush.bf16.msra.mxu0 %v1954
    %1991 = vmatpush.bf16.msra.mxu0 %v1950
    %1992 = vmatpush.bf16.msra.mxu0 %v1946
    %1993 = vmatpush.bf16.msra.mxu0 %v1942
    %1994 = vmatpush.bf16.msra.mxu0 %v1938
    %1995 = vmatpush.bf16.msra.mxu0 %v1934
    %1996 = vmatpush.bf16.msra.mxu0 %v1930
    %1997 = vmatpush.bf16.msra.mxu0 %v1926
    %1998 = vmatmul.bf16.gmra.mxu0 0
    %v1999 = vpop.f32.mrf.mxu0
    %v2000 = vadd.f32 0.0, %v1999
    %v2001 = vpop.f32.mrf.mxu0
    %2002 = vdwg.mxu0
    %2003 = vmatpush.bf16.msra.mxu0 %v1955
    %2004 = vmatpush.bf16.msra.mxu0 %v1951
    %2005 = vmatpush.bf16.msra.mxu0 %v1947
    %2006 = vmatpush.bf16.msra.mxu0 %v1943
    %2007 = vmatpush.bf16.msra.mxu0 %v1939
    %2008 = vmatpush.bf16.msra.mxu0 %v1935
    %2009 = vmatpush.bf16.msra.mxu0 %v1931
    %2010 = vmatpush.bf16.msra.mxu0 %v1927
    %2011 = vmatmul.bf16.gmra.mxu0 0
    %v2012 = vpop.f32.mrf.mxu0
    %v2013 = vadd.f32 0.0, %v2012
    %v2014 = vpop.f32.mrf.mxu0
    %2015 = vdwg.mxu0
    %2016 = vmatpush.bf16.msra.mxu0 %v1956
    %2017 = vmatpush.bf16.msra.mxu0 %v1952
    %2018 = vmatpush.bf16.msra.mxu0 %v1948
    %2019 = vmatpush.bf16.msra.mxu0 %v1944
    %2020 = vmatpush.bf16.msra.mxu0 %v1940
    %2021 = vmatpush.bf16.msra.mxu0 %v1936
    %2022 = vmatpush.bf16.msra.mxu0 %v1932
    %2023 = vmatpush.bf16.msra.mxu0 %v1928
    %2024 = vmatmul.bf16.gmra.mxu0 0
    %v2025 = vpop.f32.mrf.mxu0
    %v2026 = vadd.f32 0.0, %v2025
    %v2027 = vpop.f32.mrf.mxu0
    %2028 = vdwg.mxu0
    %2029 = vmatpush.bf16.msra.mxu0 %v1957
    %2030 = vmatpush.bf16.msra.mxu0 %v1953
    %2031 = vmatpush.bf16.msra.mxu0 %v1949
    %2032 = vmatpush.bf16.msra.mxu0 %v1945
    %2033 = vmatpush.bf16.msra.mxu0 %v1941
    %2034 = vmatpush.bf16.msra.mxu0 %v1937
    %2035 = vmatpush.bf16.msra.mxu0 %v1933
    %2036 = vmatpush.bf16.msra.mxu0 %v1929
    %2037 = vmatmul.bf16.gmra.mxu0 0
    %v2038 = vpop.f32.mrf.mxu0
    %v2039 = vadd.f32 0.0, %v2038
    %v2040 = vpop.f32.mrf.mxu0
    %2041 = vdwg.mxu0
    %v2042 = vadd.f32 %v1826, %v2000
    %v2043 = vadd.f32 %v1827, %v2013
    %v2044 = vadd.f32 %v1828, %v2026
    %v2045 = vadd.f32 %v1829, %v2039
    %v2046 = vmul.f32 %v2042, 0.5
    %v2047 = vtanh.pop %v2046
    %v2048 = vmul.f32 %v2047, 0.5
    %v2049 = vadd.f32 %v2048, 0.5
    %v2050 = vmul.f32 %v2043, 0.5
    %v2051 = vtanh.pop %v2050
    %v2052 = vmul.f32 %v2051, 0.5
    %v2053 = vadd.f32 %v2052, 0.5
    %v2054 = vtanh.pop %v2044
    %v2055 = vmul.f32 %v2045, 0.5
    %v2056 = vtanh.pop %v2055
    %v2057 = vmul.f32 %v2056, 0.5
    %v2058 = vadd.f32 %v2057, 0.5
    %v2059 = vmul.f32 %v2053, 0.0
    %v2060 = vmul.f32 %v2049, %v2054
    %v2061 = vadd.f32 %v2059, %v2060
    %v2062 = vtanh.pop %v2061
    %v2063 = vmul.f32 %v2058, %v2062
    %vm2064 = vcmp.eq.s32.totalorder %v110, 0
    %v2065 = vsel %vm2064, 1, 0
    %2066 = vset.pattern.permute.xlu0 0
    %2067 = vperm.xlu0 %2066, %v2065
    %v2068 = vpop.permute.xlu0 %2067
    %vm2069 = vcmp.eq.s32.totalorder %v2068, 1
    %v2070 = vsel %vm2069, %v2063, 0.0
    %v2071 = vld [vmem:[%s776] sm:$0xff]
    %v2072 = vld [vmem:[%s776 + $0x8] sm:$0xff]
    %v2073 = vunpack.c.l.bf16 %v2071
    %v2074 = vunpack.c.h.bf16 %v2071
    %v2075 = vunpack.c.l.bf16 %v2072
    %v2076 = vunpack.c.h.bf16 %v2072
    %v2077 = vadd.f32 %v2073, %v1818
    %v2078 = vadd.f32 %v2074, %v1819
    %v2079 = vadd.f32 %v2075, %v1820
    %v2080 = vadd.f32 %v2076, %v1821
    %v2081 = vpack.c.bf16 %v2063, %v2063
    %2082 = vmatpush.bf16.msra.mxu0 %v1954
    %2083 = vmatpush.bf16.msra.mxu0 %v1950
    %2084 = vmatpush.bf16.msra.mxu0 %v1946
    %2085 = vmatpush.bf16.msra.mxu0 %v1942
    %2086 = vmatpush.bf16.msra.mxu0 %v1938
    %2087 = vmatpush.bf16.msra.mxu0 %v1934
    %2088 = vmatpush.bf16.msra.mxu0 %v1930
    %2089 = vmatpush.bf16.msra.mxu0 %v1926
    %2090 = vmatmul.bf16.gmra.mxu0 %v2081
    %v2091 = vpop.f32.mrf.mxu0
    %v2092 = vadd.f32 0.0, %v2091
    %v2093 = vpop.f32.mrf.mxu0
    %2094 = vdwg.mxu0
    %2095 = vmatpush.bf16.msra.mxu0 %v1955
    %2096 = vmatpush.bf16.msra.mxu0 %v1951
    %2097 = vmatpush.bf16.msra.mxu0 %v1947
    %2098 = vmatpush.bf16.msra.mxu0 %v1943
    %2099 = vmatpush.bf16.msra.mxu0 %v1939
    %2100 = vmatpush.bf16.msra.mxu0 %v1935
    %2101 = vmatpush.bf16.msra.mxu0 %v1931
    %2102 = vmatpush.bf16.msra.mxu0 %v1927
    %2103 = vmatmul.bf16.gmra.mxu0 %v2081
    %v2104 = vpop.f32.mrf.mxu0
    %v2105 = vadd.f32 0.0, %v2104
    %v2106 = vpop.f32.mrf.mxu0
    %2107 = vdwg.mxu0
    %2108 = vmatpush.bf16.msra.mxu0 %v1956
    %2109 = vmatpush.bf16.msra.mxu0 %v1952
    %2110 = vmatpush.bf16.msra.mxu0 %v1948
    %2111 = vmatpush.bf16.msra.mxu0 %v1944
    %2112 = vmatpush.bf16.msra.mxu0 %v1940
    %2113 = vmatpush.bf16.msra.mxu0 %v1936
    %2114 = vmatpush.bf16.msra.mxu0 %v1932
    %2115 = vmatpush.bf16.msra.mxu0 %v1928
    %2116 = vmatmul.bf16.gmra.mxu0 %v2081
    %v2117 = vpop.f32.mrf.mxu0
    %v2118 = vadd.f32 0.0, %v2117
    %v2119 = vpop.f32.mrf.mxu0
    %2120 = vdwg.mxu0
    %2121 = vmatpush.bf16.msra.mxu0 %v1957
    %2122 = vmatpush.bf16.msra.mxu0 %v1953
    %2123 = vmatpush.bf16.msra.mxu0 %v1949
    %2124 = vmatpush.bf16.msra.mxu0 %v1945
    %2125 = vmatpush.bf16.msra.mxu0 %v1941
    %2126 = vmatpush.bf16.msra.mxu0 %v1937
    %2127 = vmatpush.bf16.msra.mxu0 %v1933
    %2128 = vmatpush.bf16.msra.mxu0 %v1929
    %2129 = vmatmul.bf16.gmra.mxu0 %v2081
    %v2130 = vpop.f32.mrf.mxu0
    %v2131 = vadd.f32 0.0, %v2130
    %v2132 = vpop.f32.mrf.mxu0
    %2133 = vdwg.mxu0
    %v2134 = vadd.f32 %v2077, %v2092
    %v2135 = vadd.f32 %v2078, %v2105
    %v2136 = vadd.f32 %v2079, %v2118
    %v2137 = vadd.f32 %v2080, %v2131
    %v2138 = vmul.f32 %v2134, 0.5
    %v2139 = vtanh.pop %v2138
    %v2140 = vmul.f32 %v2139, 0.5
    %v2141 = vadd.f32 %v2140, 0.5
    %v2142 = vmul.f32 %v2135, 0.5
    %v2143 = vtanh.pop %v2142
    %v2144 = vmul.f32 %v2143, 0.5
    %v2145 = vadd.f32 %v2144, 0.5
    %v2146 = vtanh.pop %v2136
    %v2147 = vmul.f32 %v2137, 0.5
    %v2148 = vtanh.pop %v2147
    %v2149 = vmul.f32 %v2148, 0.5
    %v2150 = vadd.f32 %v2149, 0.5
    %v2151 = vmul.f32 %v2145, %v2061
    %v2152 = vmul.f32 %v2141, %v2146
    %v2153 = vadd.f32 %v2151, %v2152
    %v2154 = vtanh.pop %v2153
    %v2155 = vmul.f32 %v2150, %v2154
    %vm2156 = vcmp.eq.s32.totalorder %v110, 1
    %v2157 = vsel %vm2156, 1, 0
    %2158 = vset.pattern.permute.xlu0 0
    %2159 = vperm.xlu0 %2158, %v2157
    %v2160 = vpop.permute.xlu0 %2159
    %vm2161 = vcmp.eq.s32.totalorder %v2160, 1
    %v2162 = vsel %vm2161, %v2155, %v2070
    %v2163 = vld [vmem:[%s866] sm:$0xff]
    %v2164 = vld [vmem:[%s866 + $0x8] sm:$0xff]
    %v2165 = vunpack.c.l.bf16 %v2163
    %v2166 = vunpack.c.h.bf16 %v2163
    %v2167 = vunpack.c.l.bf16 %v2164
    %v2168 = vunpack.c.h.bf16 %v2164
    %v2169 = vadd.f32 %v2165, %v1818
    %v2170 = vadd.f32 %v2166, %v1819
    %v2171 = vadd.f32 %v2167, %v1820
    %v2172 = vadd.f32 %v2168, %v1821
    %v2173 = vpack.c.bf16 %v2155, %v2155
    %2174 = vmatpush.bf16.msra.mxu0 %v1954
    %2175 = vmatpush.bf16.msra.mxu0 %v1950
    %2176 = vmatpush.bf16.msra.mxu0 %v1946
    %2177 = vmatpush.bf16.msra.mxu0 %v1942
    %2178 = vmatpush.bf16.msra.mxu0 %v1938
    %2179 = vmatpush.bf16.msra.mxu0 %v1934
    %2180 = vmatpush.bf16.msra.mxu0 %v1930
    %2181 = vmatpush.bf16.msra.mxu0 %v1926
    %2182 = vmatmul.bf16.gmra.mxu0 %v2173
    %v2183 = vpop.f32.mrf.mxu0
    %v2184 = vadd.f32 0.0, %v2183
    %v2185 = vpop.f32.mrf.mxu0
    %2186 = vdwg.mxu0
    %2187 = vmatpush.bf16.msra.mxu0 %v1955
    %2188 = vmatpush.bf16.msra.mxu0 %v1951
    %2189 = vmatpush.bf16.msra.mxu0 %v1947
    %2190 = vmatpush.bf16.msra.mxu0 %v1943
    %2191 = vmatpush.bf16.msra.mxu0 %v1939
    %2192 = vmatpush.bf16.msra.mxu0 %v1935
    %2193 = vmatpush.bf16.msra.mxu0 %v1931
    %2194 = vmatpush.bf16.msra.mxu0 %v1927
    %2195 = vmatmul.bf16.gmra.mxu0 %v2173
    %v2196 = vpop.f32.mrf.mxu0
    %v2197 = vadd.f32 0.0, %v2196
    %v2198 = vpop.f32.mrf.mxu0
    %2199 = vdwg.mxu0
    %2200 = vmatpush.bf16.msra.mxu0 %v1956
    %2201 = vmatpush.bf16.msra.mxu0 %v1952
    %2202 = vmatpush.bf16.msra.mxu0 %v1948
    %2203 = vmatpush.bf16.msra.mxu0 %v1944
    %2204 = vmatpush.bf16.msra.mxu0 %v1940
    %2205 = vmatpush.bf16.msra.mxu0 %v1936
    %2206 = vmatpush.bf16.msra.mxu0 %v1932
    %2207 = vmatpush.bf16.msra.mxu0 %v1928
    %2208 = vmatmul.bf16.gmra.mxu0 %v2173
    %v2209 = vpop.f32.mrf.mxu0
    %v2210 = vadd.f32 0.0, %v2209
    %v2211 = vpop.f32.mrf.mxu0
    %2212 = vdwg.mxu0
    %2213 = vmatpush.bf16.msra.mxu0 %v1957
    %2214 = vmatpush.bf16.msra.mxu0 %v1953
    %2215 = vmatpush.bf16.msra.mxu0 %v1949
    %2216 = vmatpush.bf16.msra.mxu0 %v1945
    %2217 = vmatpush.bf16.msra.mxu0 %v1941
    %2218 = vmatpush.bf16.msra.mxu0 %v1937
    %2219 = vmatpush.bf16.msra.mxu0 %v1933
    %2220 = vmatpush.bf16.msra.mxu0 %v1929
    %2221 = vmatmul.bf16.gmra.mxu0 %v2173
    %v2222 = vpop.f32.mrf.mxu0
    %v2223 = vadd.f32 0.0, %v2222
    %v2224 = vpop.f32.mrf.mxu0
    %2225 = vdwg.mxu0
    %v2226 = vadd.f32 %v2169, %v2184
    %v2227 = vadd.f32 %v2170, %v2197
    %v2228 = vadd.f32 %v2171, %v2210
    %v2229 = vadd.f32 %v2172, %v2223
    %v2230 = vmul.f32 %v2226, 0.5
    %v2231 = vtanh.pop %v2230
    %v2232 = vmul.f32 %v2231, 0.5
    %v2233 = vadd.f32 %v2232, 0.5
    %v2234 = vmul.f32 %v2227, 0.5
    %v2235 = vtanh.pop %v2234
    %v2236 = vmul.f32 %v2235, 0.5
    %v2237 = vadd.f32 %v2236, 0.5
    %v2238 = vtanh.pop %v2228
    %v2239 = vmul.f32 %v2229, 0.5
    %v2240 = vtanh.pop %v2239
    %v2241 = vmul.f32 %v2240, 0.5
    %v2242 = vadd.f32 %v2241, 0.5
    %v2243 = vmul.f32 %v2237, %v2153
    %v2244 = vmul.f32 %v2233, %v2238
    %v2245 = vadd.f32 %v2243, %v2244
    %v2246 = vtanh.pop %v2245
    %v2247 = vmul.f32 %v2242, %v2246
    %vm2248 = vcmp.eq.s32.totalorder %v110, 2
    %v2249 = vsel %vm2248, 1, 0
    %2250 = vset.pattern.permute.xlu0 0
    %2251 = vperm.xlu0 %2250, %v2249
    %v2252 = vpop.permute.xlu0 %2251
    %vm2253 = vcmp.eq.s32.totalorder %v2252, 1
    %v2254 = vsel %vm2253, %v2247, %v2162
    %v2255 = vld [vmem:[%s956] sm:$0xff]
    %v2256 = vld [vmem:[%s956 + $0x8] sm:$0xff]
    %v2257 = vunpack.c.l.bf16 %v2255
    %v2258 = vunpack.c.h.bf16 %v2255
    %v2259 = vunpack.c.l.bf16 %v2256
    %v2260 = vunpack.c.h.bf16 %v2256
    %v2261 = vadd.f32 %v2257, %v1818
    %v2262 = vadd.f32 %v2258, %v1819
    %v2263 = vadd.f32 %v2259, %v1820
    %v2264 = vadd.f32 %v2260, %v1821
    %v2265 = vpack.c.bf16 %v2247, %v2247
    %2266 = vmatpush.bf16.msra.mxu0 %v1954
    %2267 = vmatpush.bf16.msra.mxu0 %v1950
    %2268 = vmatpush.bf16.msra.mxu0 %v1946
    %2269 = vmatpush.bf16.msra.mxu0 %v1942
    %2270 = vmatpush.bf16.msra.mxu0 %v1938
    %2271 = vmatpush.bf16.msra.mxu0 %v1934
    %2272 = vmatpush.bf16.msra.mxu0 %v1930
    %2273 = vmatpush.bf16.msra.mxu0 %v1926
    %2274 = vmatmul.bf16.gmra.mxu0 %v2265
    %v2275 = vpop.f32.mrf.mxu0
    %v2276 = vadd.f32 0.0, %v2275
    %v2277 = vpop.f32.mrf.mxu0
    %2278 = vdwg.mxu0
    %2279 = vmatpush.bf16.msra.mxu0 %v1955
    %2280 = vmatpush.bf16.msra.mxu0 %v1951
    %2281 = vmatpush.bf16.msra.mxu0 %v1947
    %2282 = vmatpush.bf16.msra.mxu0 %v1943
    %2283 = vmatpush.bf16.msra.mxu0 %v1939
    %2284 = vmatpush.bf16.msra.mxu0 %v1935
    %2285 = vmatpush.bf16.msra.mxu0 %v1931
    %2286 = vmatpush.bf16.msra.mxu0 %v1927
    %2287 = vmatmul.bf16.gmra.mxu0 %v2265
    %v2288 = vpop.f32.mrf.mxu0
    %v2289 = vadd.f32 0.0, %v2288
    %v2290 = vpop.f32.mrf.mxu0
    %2291 = vdwg.mxu0
    %2292 = vmatpush.bf16.msra.mxu0 %v1956
    %2293 = vmatpush.bf16.msra.mxu0 %v1952
    %2294 = vmatpush.bf16.msra.mxu0 %v1948
    %2295 = vmatpush.bf16.msra.mxu0 %v1944
    %2296 = vmatpush.bf16.msra.mxu0 %v1940
    %2297 = vmatpush.bf16.msra.mxu0 %v1936
    %2298 = vmatpush.bf16.msra.mxu0 %v1932
    %2299 = vmatpush.bf16.msra.mxu0 %v1928
    %2300 = vmatmul.bf16.gmra.mxu0 %v2265
    %v2301 = vpop.f32.mrf.mxu0
    %v2302 = vadd.f32 0.0, %v2301
    %v2303 = vpop.f32.mrf.mxu0
    %2304 = vdwg.mxu0
    %2305 = vmatpush.bf16.msra.mxu0 %v1957
    %2306 = vmatpush.bf16.msra.mxu0 %v1953
    %2307 = vmatpush.bf16.msra.mxu0 %v1949
    %2308 = vmatpush.bf16.msra.mxu0 %v1945
    %2309 = vmatpush.bf16.msra.mxu0 %v1941
    %2310 = vmatpush.bf16.msra.mxu0 %v1937
    %2311 = vmatpush.bf16.msra.mxu0 %v1933
    %2312 = vmatpush.bf16.msra.mxu0 %v1929
    %2313 = vmatmul.bf16.gmra.mxu0 %v2265
    %v2314 = vpop.f32.mrf.mxu0
    %v2315 = vadd.f32 0.0, %v2314
    %v2316 = vpop.f32.mrf.mxu0
    %2317 = vdwg.mxu0
    %v2318 = vadd.f32 %v2261, %v2276
    %v2319 = vadd.f32 %v2262, %v2289
    %v2320 = vadd.f32 %v2263, %v2302
    %v2321 = vadd.f32 %v2264, %v2315
    %v2322 = vmul.f32 %v2318, 0.5
    %v2323 = vtanh.pop %v2322
    %v2324 = vmul.f32 %v2323, 0.5
    %v2325 = vadd.f32 %v2324, 0.5
    %v2326 = vmul.f32 %v2319, 0.5
    %v2327 = vtanh.pop %v2326
    %v2328 = vmul.f32 %v2327, 0.5
    %v2329 = vadd.f32 %v2328, 0.5
    %v2330 = vtanh.pop %v2320
    %v2331 = vmul.f32 %v2321, 0.5
    %v2332 = vtanh.pop %v2331
    %v2333 = vmul.f32 %v2332, 0.5
    %v2334 = vadd.f32 %v2333, 0.5
    %v2335 = vmul.f32 %v2329, %v2245
    %v2336 = vmul.f32 %v2325, %v2330
    %v2337 = vadd.f32 %v2335, %v2336
    %v2338 = vtanh.pop %v2337
    %v2339 = vmul.f32 %v2334, %v2338
    %vm2340 = vcmp.eq.s32.totalorder %v110, 3
    %v2341 = vsel %vm2340, 1, 0
    %2342 = vset.pattern.permute.xlu0 0
    %2343 = vperm.xlu0 %2342, %v2341
    %v2344 = vpop.permute.xlu0 %2343
    %vm2345 = vcmp.eq.s32.totalorder %v2344, 1
    %v2346 = vsel %vm2345, %v2339, %v2254
    %v2347 = vld [vmem:[%s1046] sm:$0xff]
    %v2348 = vld [vmem:[%s1046 + $0x8] sm:$0xff]
    %v2349 = vunpack.c.l.bf16 %v2347
    %v2350 = vunpack.c.h.bf16 %v2347
    %v2351 = vunpack.c.l.bf16 %v2348
    %v2352 = vunpack.c.h.bf16 %v2348
    %v2353 = vadd.f32 %v2349, %v1818
    %v2354 = vadd.f32 %v2350, %v1819
    %v2355 = vadd.f32 %v2351, %v1820
    %v2356 = vadd.f32 %v2352, %v1821
    %v2357 = vpack.c.bf16 %v2339, %v2339
    %2358 = vmatpush.bf16.msra.mxu0 %v1954
    %2359 = vmatpush.bf16.msra.mxu0 %v1950
    %2360 = vmatpush.bf16.msra.mxu0 %v1946
    %2361 = vmatpush.bf16.msra.mxu0 %v1942
    %2362 = vmatpush.bf16.msra.mxu0 %v1938
    %2363 = vmatpush.bf16.msra.mxu0 %v1934
    %2364 = vmatpush.bf16.msra.mxu0 %v1930
    %2365 = vmatpush.bf16.msra.mxu0 %v1926
    %2366 = vmatmul.bf16.gmra.mxu0 %v2357
    %v2367 = vpop.f32.mrf.mxu0
    %v2368 = vadd.f32 0.0, %v2367
    %v2369 = vpop.f32.mrf.mxu0
    %2370 = vdwg.mxu0
    %2371 = vmatpush.bf16.msra.mxu0 %v1955
    %2372 = vmatpush.bf16.msra.mxu0 %v1951
    %2373 = vmatpush.bf16.msra.mxu0 %v1947
    %2374 = vmatpush.bf16.msra.mxu0 %v1943
    %2375 = vmatpush.bf16.msra.mxu0 %v1939
    %2376 = vmatpush.bf16.msra.mxu0 %v1935
    %2377 = vmatpush.bf16.msra.mxu0 %v1931
    %2378 = vmatpush.bf16.msra.mxu0 %v1927
    %2379 = vmatmul.bf16.gmra.mxu0 %v2357
    %v2380 = vpop.f32.mrf.mxu0
    %v2381 = vadd.f32 0.0, %v2380
    %v2382 = vpop.f32.mrf.mxu0
    %2383 = vdwg.mxu0
    %2384 = vmatpush.bf16.msra.mxu0 %v1956
    %2385 = vmatpush.bf16.msra.mxu0 %v1952
    %2386 = vmatpush.bf16.msra.mxu0 %v1948
    %2387 = vmatpush.bf16.msra.mxu0 %v1944
    %2388 = vmatpush.bf16.msra.mxu0 %v1940
    %2389 = vmatpush.bf16.msra.mxu0 %v1936
    %2390 = vmatpush.bf16.msra.mxu0 %v1932
    %2391 = vmatpush.bf16.msra.mxu0 %v1928
    %2392 = vmatmul.bf16.gmra.mxu0 %v2357
    %v2393 = vpop.f32.mrf.mxu0
    %v2394 = vadd.f32 0.0, %v2393
    %v2395 = vpop.f32.mrf.mxu0
    %2396 = vdwg.mxu0
    %2397 = vmatpush.bf16.msra.mxu0 %v1957
    %2398 = vmatpush.bf16.msra.mxu0 %v1953
    %2399 = vmatpush.bf16.msra.mxu0 %v1949
    %2400 = vmatpush.bf16.msra.mxu0 %v1945
    %2401 = vmatpush.bf16.msra.mxu0 %v1941
    %2402 = vmatpush.bf16.msra.mxu0 %v1937
    %2403 = vmatpush.bf16.msra.mxu0 %v1933
    %2404 = vmatpush.bf16.msra.mxu0 %v1929
    %2405 = vmatmul.bf16.gmra.mxu0 %v2357
    %v2406 = vpop.f32.mrf.mxu0
    %v2407 = vadd.f32 0.0, %v2406
    %v2408 = vpop.f32.mrf.mxu0
    %2409 = vdwg.mxu0
    %v2410 = vadd.f32 %v2353, %v2368
    %v2411 = vadd.f32 %v2354, %v2381
    %v2412 = vadd.f32 %v2355, %v2394
    %v2413 = vadd.f32 %v2356, %v2407
    %v2414 = vmul.f32 %v2410, 0.5
    %v2415 = vtanh.pop %v2414
    %v2416 = vmul.f32 %v2415, 0.5
    %v2417 = vadd.f32 %v2416, 0.5
    %v2418 = vmul.f32 %v2411, 0.5
    %v2419 = vtanh.pop %v2418
    %v2420 = vmul.f32 %v2419, 0.5
    %v2421 = vadd.f32 %v2420, 0.5
    %v2422 = vtanh.pop %v2412
    %v2423 = vmul.f32 %v2413, 0.5
    %v2424 = vtanh.pop %v2423
    %v2425 = vmul.f32 %v2424, 0.5
    %v2426 = vadd.f32 %v2425, 0.5
    %v2427 = vmul.f32 %v2421, %v2337
    %v2428 = vmul.f32 %v2417, %v2422
    %v2429 = vadd.f32 %v2427, %v2428
    %v2430 = vtanh.pop %v2429
    %v2431 = vmul.f32 %v2426, %v2430
    %vm2432 = vcmp.eq.s32.totalorder %v110, 4
    %v2433 = vsel %vm2432, 1, 0
    %2434 = vset.pattern.permute.xlu0 0
    %2435 = vperm.xlu0 %2434, %v2433
    %v2436 = vpop.permute.xlu0 %2435
    %vm2437 = vcmp.eq.s32.totalorder %v2436, 1
    %v2438 = vsel %vm2437, %v2431, %v2346
    %v2439 = vld [vmem:[%s1136] sm:$0xff]
    %v2440 = vld [vmem:[%s1136 + $0x8] sm:$0xff]
    %v2441 = vunpack.c.l.bf16 %v2439
    %v2442 = vunpack.c.h.bf16 %v2439
    %v2443 = vunpack.c.l.bf16 %v2440
    %v2444 = vunpack.c.h.bf16 %v2440
    %v2445 = vadd.f32 %v2441, %v1818
    %v2446 = vadd.f32 %v2442, %v1819
    %v2447 = vadd.f32 %v2443, %v1820
    %v2448 = vadd.f32 %v2444, %v1821
    %v2449 = vpack.c.bf16 %v2431, %v2431
    %2450 = vmatpush.bf16.msra.mxu0 %v1954
    %2451 = vmatpush.bf16.msra.mxu0 %v1950
    %2452 = vmatpush.bf16.msra.mxu0 %v1946
    %2453 = vmatpush.bf16.msra.mxu0 %v1942
    %2454 = vmatpush.bf16.msra.mxu0 %v1938
    %2455 = vmatpush.bf16.msra.mxu0 %v1934
    %2456 = vmatpush.bf16.msra.mxu0 %v1930
    %2457 = vmatpush.bf16.msra.mxu0 %v1926
    %2458 = vmatmul.bf16.gmra.mxu0 %v2449
    %v2459 = vpop.f32.mrf.mxu0
    %v2460 = vadd.f32 0.0, %v2459
    %v2461 = vpop.f32.mrf.mxu0
    %2462 = vdwg.mxu0
    %2463 = vmatpush.bf16.msra.mxu0 %v1955
    %2464 = vmatpush.bf16.msra.mxu0 %v1951
    %2465 = vmatpush.bf16.msra.mxu0 %v1947
    %2466 = vmatpush.bf16.msra.mxu0 %v1943
    %2467 = vmatpush.bf16.msra.mxu0 %v1939
    %2468 = vmatpush.bf16.msra.mxu0 %v1935
    %2469 = vmatpush.bf16.msra.mxu0 %v1931
    %2470 = vmatpush.bf16.msra.mxu0 %v1927
    %2471 = vmatmul.bf16.gmra.mxu0 %v2449
    %v2472 = vpop.f32.mrf.mxu0
    %v2473 = vadd.f32 0.0, %v2472
    %v2474 = vpop.f32.mrf.mxu0
    %2475 = vdwg.mxu0
    %2476 = vmatpush.bf16.msra.mxu0 %v1956
    %2477 = vmatpush.bf16.msra.mxu0 %v1952
    %2478 = vmatpush.bf16.msra.mxu0 %v1948
    %2479 = vmatpush.bf16.msra.mxu0 %v1944
    %2480 = vmatpush.bf16.msra.mxu0 %v1940
    %2481 = vmatpush.bf16.msra.mxu0 %v1936
    %2482 = vmatpush.bf16.msra.mxu0 %v1932
    %2483 = vmatpush.bf16.msra.mxu0 %v1928
    %2484 = vmatmul.bf16.gmra.mxu0 %v2449
    %v2485 = vpop.f32.mrf.mxu0
    %v2486 = vadd.f32 0.0, %v2485
    %v2487 = vpop.f32.mrf.mxu0
    %2488 = vdwg.mxu0
    %2489 = vmatpush.bf16.msra.mxu0 %v1957
    %2490 = vmatpush.bf16.msra.mxu0 %v1953
    %2491 = vmatpush.bf16.msra.mxu0 %v1949
    %2492 = vmatpush.bf16.msra.mxu0 %v1945
    %2493 = vmatpush.bf16.msra.mxu0 %v1941
    %2494 = vmatpush.bf16.msra.mxu0 %v1937
    %2495 = vmatpush.bf16.msra.mxu0 %v1933
    %2496 = vmatpush.bf16.msra.mxu0 %v1929
    %2497 = vmatmul.bf16.gmra.mxu0 %v2449
    %v2498 = vpop.f32.mrf.mxu0
    %v2499 = vadd.f32 0.0, %v2498
    %v2500 = vpop.f32.mrf.mxu0
    %2501 = vdwg.mxu0
    %v2502 = vadd.f32 %v2445, %v2460
    %v2503 = vadd.f32 %v2446, %v2473
    %v2504 = vadd.f32 %v2447, %v2486
    %v2505 = vadd.f32 %v2448, %v2499
    %v2506 = vmul.f32 %v2502, 0.5
    %v2507 = vtanh.pop %v2506
    %v2508 = vmul.f32 %v2507, 0.5
    %v2509 = vadd.f32 %v2508, 0.5
    %v2510 = vmul.f32 %v2503, 0.5
    %v2511 = vtanh.pop %v2510
    %v2512 = vmul.f32 %v2511, 0.5
    %v2513 = vadd.f32 %v2512, 0.5
    %v2514 = vtanh.pop %v2504
    %v2515 = vmul.f32 %v2505, 0.5
    %v2516 = vtanh.pop %v2515
    %v2517 = vmul.f32 %v2516, 0.5
    %v2518 = vadd.f32 %v2517, 0.5
    %v2519 = vmul.f32 %v2513, %v2429
    %v2520 = vmul.f32 %v2509, %v2514
    %v2521 = vadd.f32 %v2519, %v2520
    %v2522 = vtanh.pop %v2521
    %v2523 = vmul.f32 %v2518, %v2522
    %vm2524 = vcmp.eq.s32.totalorder %v110, 5
    %v2525 = vsel %vm2524, 1, 0
    %2526 = vset.pattern.permute.xlu0 0
    %2527 = vperm.xlu0 %2526, %v2525
    %v2528 = vpop.permute.xlu0 %2527
    %vm2529 = vcmp.eq.s32.totalorder %v2528, 1
    %v2530 = vsel %vm2529, %v2523, %v2438
    %v2531 = vld [vmem:[%s1226] sm:$0xff]
    %v2532 = vld [vmem:[%s1226 + $0x8] sm:$0xff]
    %v2533 = vunpack.c.l.bf16 %v2531
    %v2534 = vunpack.c.h.bf16 %v2531
    %v2535 = vunpack.c.l.bf16 %v2532
    %v2536 = vunpack.c.h.bf16 %v2532
    %v2537 = vadd.f32 %v2533, %v1818
    %v2538 = vadd.f32 %v2534, %v1819
    %v2539 = vadd.f32 %v2535, %v1820
    %v2540 = vadd.f32 %v2536, %v1821
    %v2541 = vpack.c.bf16 %v2523, %v2523
    %2542 = vmatpush.bf16.msra.mxu0 %v1954
    %2543 = vmatpush.bf16.msra.mxu0 %v1950
    %2544 = vmatpush.bf16.msra.mxu0 %v1946
    %2545 = vmatpush.bf16.msra.mxu0 %v1942
    %2546 = vmatpush.bf16.msra.mxu0 %v1938
    %2547 = vmatpush.bf16.msra.mxu0 %v1934
    %2548 = vmatpush.bf16.msra.mxu0 %v1930
    %2549 = vmatpush.bf16.msra.mxu0 %v1926
    %2550 = vmatmul.bf16.gmra.mxu0 %v2541
    %v2551 = vpop.f32.mrf.mxu0
    %v2552 = vadd.f32 0.0, %v2551
    %v2553 = vpop.f32.mrf.mxu0
    %2554 = vdwg.mxu0
    %2555 = vmatpush.bf16.msra.mxu0 %v1955
    %2556 = vmatpush.bf16.msra.mxu0 %v1951
    %2557 = vmatpush.bf16.msra.mxu0 %v1947
    %2558 = vmatpush.bf16.msra.mxu0 %v1943
    %2559 = vmatpush.bf16.msra.mxu0 %v1939
    %2560 = vmatpush.bf16.msra.mxu0 %v1935
    %2561 = vmatpush.bf16.msra.mxu0 %v1931
    %2562 = vmatpush.bf16.msra.mxu0 %v1927
    %2563 = vmatmul.bf16.gmra.mxu0 %v2541
    %v2564 = vpop.f32.mrf.mxu0
    %v2565 = vadd.f32 0.0, %v2564
    %v2566 = vpop.f32.mrf.mxu0
    %2567 = vdwg.mxu0
    %2568 = vmatpush.bf16.msra.mxu0 %v1956
    %2569 = vmatpush.bf16.msra.mxu0 %v1952
    %2570 = vmatpush.bf16.msra.mxu0 %v1948
    %2571 = vmatpush.bf16.msra.mxu0 %v1944
    %2572 = vmatpush.bf16.msra.mxu0 %v1940
    %2573 = vmatpush.bf16.msra.mxu0 %v1936
    %2574 = vmatpush.bf16.msra.mxu0 %v1932
    %2575 = vmatpush.bf16.msra.mxu0 %v1928
    %2576 = vmatmul.bf16.gmra.mxu0 %v2541
    %v2577 = vpop.f32.mrf.mxu0
    %v2578 = vadd.f32 0.0, %v2577
    %v2579 = vpop.f32.mrf.mxu0
    %2580 = vdwg.mxu0
    %2581 = vmatpush.bf16.msra.mxu0 %v1957
    %2582 = vmatpush.bf16.msra.mxu0 %v1953
    %2583 = vmatpush.bf16.msra.mxu0 %v1949
    %2584 = vmatpush.bf16.msra.mxu0 %v1945
    %2585 = vmatpush.bf16.msra.mxu0 %v1941
    %2586 = vmatpush.bf16.msra.mxu0 %v1937
    %2587 = vmatpush.bf16.msra.mxu0 %v1933
    %2588 = vmatpush.bf16.msra.mxu0 %v1929
    %2589 = vmatmul.bf16.gmra.mxu0 %v2541
    %v2590 = vpop.f32.mrf.mxu0
    %v2591 = vadd.f32 0.0, %v2590
    %v2592 = vpop.f32.mrf.mxu0
    %2593 = vdwg.mxu0
    %v2594 = vadd.f32 %v2537, %v2552
    %v2595 = vadd.f32 %v2538, %v2565
    %v2596 = vadd.f32 %v2539, %v2578
    %v2597 = vadd.f32 %v2540, %v2591
    %v2598 = vmul.f32 %v2594, 0.5
    %v2599 = vtanh.pop %v2598
    %v2600 = vmul.f32 %v2599, 0.5
    %v2601 = vadd.f32 %v2600, 0.5
    %v2602 = vmul.f32 %v2595, 0.5
    %v2603 = vtanh.pop %v2602
    %v2604 = vmul.f32 %v2603, 0.5
    %v2605 = vadd.f32 %v2604, 0.5
    %v2606 = vtanh.pop %v2596
    %v2607 = vmul.f32 %v2597, 0.5
    %v2608 = vtanh.pop %v2607
    %v2609 = vmul.f32 %v2608, 0.5
    %v2610 = vadd.f32 %v2609, 0.5
    %v2611 = vmul.f32 %v2605, %v2521
    %v2612 = vmul.f32 %v2601, %v2606
    %v2613 = vadd.f32 %v2611, %v2612
    %v2614 = vtanh.pop %v2613
    %v2615 = vmul.f32 %v2610, %v2614
    %vm2616 = vcmp.eq.s32.totalorder %v110, 6
    %v2617 = vsel %vm2616, 1, 0
    %2618 = vset.pattern.permute.xlu0 0
    %2619 = vperm.xlu0 %2618, %v2617
    %v2620 = vpop.permute.xlu0 %2619
    %vm2621 = vcmp.eq.s32.totalorder %v2620, 1
    %v2622 = vsel %vm2621, %v2615, %v2530
    %v2623 = vld [vmem:[%s1316] sm:$0xff]
    %v2624 = vld [vmem:[%s1316 + $0x8] sm:$0xff]
    %v2625 = vunpack.c.l.bf16 %v2623
    %v2626 = vunpack.c.h.bf16 %v2623
    %v2627 = vunpack.c.l.bf16 %v2624
    %v2628 = vunpack.c.h.bf16 %v2624
    %v2629 = vadd.f32 %v2625, %v1818
    %v2630 = vadd.f32 %v2626, %v1819
    %v2631 = vadd.f32 %v2627, %v1820
    %v2632 = vadd.f32 %v2628, %v1821
    %v2633 = vpack.c.bf16 %v2615, %v2615
    %2634 = vmatpush.bf16.msra.mxu0 %v1954
    %2635 = vmatpush.bf16.msra.mxu0 %v1950
    %2636 = vmatpush.bf16.msra.mxu0 %v1946
    %2637 = vmatpush.bf16.msra.mxu0 %v1942
    %2638 = vmatpush.bf16.msra.mxu0 %v1938
    %2639 = vmatpush.bf16.msra.mxu0 %v1934
    %2640 = vmatpush.bf16.msra.mxu0 %v1930
    %2641 = vmatpush.bf16.msra.mxu0 %v1926
    %2642 = vmatmul.bf16.gmra.mxu0 %v2633
    %v2643 = vpop.f32.mrf.mxu0
    %v2644 = vadd.f32 0.0, %v2643
    %v2645 = vpop.f32.mrf.mxu0
    %2646 = vdwg.mxu0
    %2647 = vmatpush.bf16.msra.mxu0 %v1955
    %2648 = vmatpush.bf16.msra.mxu0 %v1951
    %2649 = vmatpush.bf16.msra.mxu0 %v1947
    %2650 = vmatpush.bf16.msra.mxu0 %v1943
    %2651 = vmatpush.bf16.msra.mxu0 %v1939
    %2652 = vmatpush.bf16.msra.mxu0 %v1935
    %2653 = vmatpush.bf16.msra.mxu0 %v1931
    %2654 = vmatpush.bf16.msra.mxu0 %v1927
    %2655 = vmatmul.bf16.gmra.mxu0 %v2633
    %v2656 = vpop.f32.mrf.mxu0
    %v2657 = vadd.f32 0.0, %v2656
    %v2658 = vpop.f32.mrf.mxu0
    %2659 = vdwg.mxu0
    %2660 = vmatpush.bf16.msra.mxu0 %v1956
    %2661 = vmatpush.bf16.msra.mxu0 %v1952
    %2662 = vmatpush.bf16.msra.mxu0 %v1948
    %2663 = vmatpush.bf16.msra.mxu0 %v1944
    %2664 = vmatpush.bf16.msra.mxu0 %v1940
    %2665 = vmatpush.bf16.msra.mxu0 %v1936
    %2666 = vmatpush.bf16.msra.mxu0 %v1932
    %2667 = vmatpush.bf16.msra.mxu0 %v1928
    %2668 = vmatmul.bf16.gmra.mxu0 %v2633
    %v2669 = vpop.f32.mrf.mxu0
    %v2670 = vadd.f32 0.0, %v2669
    %v2671 = vpop.f32.mrf.mxu0
    %2672 = vdwg.mxu0
    %2673 = vmatpush.bf16.msra.mxu0 %v1957
    %2674 = vmatpush.bf16.msra.mxu0 %v1953
    %2675 = vmatpush.bf16.msra.mxu0 %v1949
    %2676 = vmatpush.bf16.msra.mxu0 %v1945
    %2677 = vmatpush.bf16.msra.mxu0 %v1941
    %2678 = vmatpush.bf16.msra.mxu0 %v1937
    %2679 = vmatpush.bf16.msra.mxu0 %v1933
    %2680 = vmatpush.bf16.msra.mxu0 %v1929
    %2681 = vmatmul.bf16.gmra.mxu0 %v2633
    %v2682 = vpop.f32.mrf.mxu0
    %v2683 = vadd.f32 0.0, %v2682
    %v2684 = vpop.f32.mrf.mxu0
    %2685 = vdwg.mxu0
    %v2686 = vadd.f32 %v2629, %v2644
    %v2687 = vadd.f32 %v2630, %v2657
    %v2688 = vadd.f32 %v2631, %v2670
    %v2689 = vadd.f32 %v2632, %v2683
    %v2690 = vmul.f32 %v2686, 0.5
    %v2691 = vtanh.pop %v2690
    %v2692 = vmul.f32 %v2691, 0.5
    %v2693 = vadd.f32 %v2692, 0.5
    %v2694 = vmul.f32 %v2687, 0.5
    %v2695 = vtanh.pop %v2694
    %v2696 = vmul.f32 %v2695, 0.5
    %v2697 = vadd.f32 %v2696, 0.5
    %v2698 = vtanh.pop %v2688
    %v2699 = vmul.f32 %v2689, 0.5
    %v2700 = vtanh.pop %v2699
    %v2701 = vmul.f32 %v2700, 0.5
    %v2702 = vadd.f32 %v2701, 0.5
    %v2703 = vmul.f32 %v2697, %v2613
    %v2704 = vmul.f32 %v2693, %v2698
    %v2705 = vadd.f32 %v2703, %v2704
    %v2706 = vtanh.pop %v2705
    %v2707 = vmul.f32 %v2702, %v2706
    %vm2708 = vcmp.eq.s32.totalorder %v110, 7
    %v2709 = vsel %vm2708, 1, 0
    %2710 = vset.pattern.permute.xlu0 0
    %2711 = vperm.xlu0 %2710, %v2709
    %v2712 = vpop.permute.xlu0 %2711
    %vm2713 = vcmp.eq.s32.totalorder %v2712, 1
    %v2714 = vsel %vm2713, %v2707, %v2622
    %v2715 = vpack.c.bf16 %v2714, %v2714
    %v2716 = vld [vmem:[#allocation12] sm:$0xf]
    %v2717 = vld [vmem:[#allocation12 + $0x4] sm:$0xf]
    %v2718 = vld [vmem:[#allocation12 + $0x8] sm:$0xf]
    %v2719 = vld [vmem:[#allocation12 + $0xc] sm:$0xf]
    %v2720 = vld [vmem:[#allocation12 + $0x10] sm:$0xf]
    %v2721 = vld [vmem:[#allocation12 + $0x14] sm:$0xf]
    %v2722 = vld [vmem:[#allocation12 + $0x18] sm:$0xf]
    %v2723 = vld [vmem:[#allocation12 + $0x1c] sm:$0xf]
    %v2724 = vld [vmem:[#allocation12 + $0x20] sm:$0xf]
    %v2725 = vld [vmem:[#allocation12 + $0x24] sm:$0xf]
    %v2726 = vld [vmem:[#allocation12 + $0x28] sm:$0xf]
    %v2727 = vld [vmem:[#allocation12 + $0x2c] sm:$0xf]
    %v2728 = vld [vmem:[#allocation12 + $0x30] sm:$0xf]
    %v2729 = vld [vmem:[#allocation12 + $0x34] sm:$0xf]
    %v2730 = vld [vmem:[#allocation12 + $0x38] sm:$0xf]
    %v2731 = vld [vmem:[#allocation12 + $0x3c] sm:$0xf]
    %v2732 = vld [vmem:[%s7] sm:$0x1]
    %v2734 = vperm.slane %v2732, 0
    %v2752 = vunpack.c.l.b16 %v2716
    %v2753 = vunpack.c.l.b16 %v2717
    %v2754 = vunpack.c.l.b16 %v2718
    %v2755 = vunpack.c.l.b16 %v2719
    %v2756 = vunpack.c.l.b16 %v2720
    %v2757 = vunpack.c.l.b16 %v2721
    %v2758 = vunpack.c.l.b16 %v2722
    %v2759 = vunpack.c.l.b16 %v2723
    %v2760 = vunpack.c.l.b16 %v2724
    %v2761 = vunpack.c.l.b16 %v2725
    %v2762 = vunpack.c.l.b16 %v2726
    %v2763 = vunpack.c.l.b16 %v2727
    %v2764 = vunpack.c.l.b16 %v2728
    %v2765 = vunpack.c.l.b16 %v2729
    %v2766 = vunpack.c.l.b16 %v2730
    %v2767 = vunpack.c.l.b16 %v2731
    %v2768 = vpack.c.b16 %v2753, %v2752
    %v2769 = vpack.c.b16 %v2755, %v2754
    %v2770 = vpack.c.b16 %v2757, %v2756
    %v2771 = vpack.c.b16 %v2759, %v2758
    %v2772 = vpack.c.b16 %v2761, %v2760
    %v2773 = vpack.c.b16 %v2763, %v2762
    %v2774 = vpack.c.b16 %v2765, %v2764
    %v2775 = vpack.c.b16 %v2767, %v2766
    %2784 = vmatpush.bf16.msra.mxu0 %v2775
    %2785 = vmatpush.bf16.msra.mxu0 %v2774
    %2786 = vmatpush.bf16.msra.mxu0 %v2773
    %2787 = vmatpush.bf16.msra.mxu0 %v2772
    %2788 = vmatpush.bf16.msra.mxu0 %v2771
    %2789 = vmatpush.bf16.msra.mxu0 %v2770
    %2790 = vmatpush.bf16.msra.mxu0 %v2769
    %2791 = vmatpush.bf16.msra.mxu0 %v2768
    %2792 = vmatmul.bf16.gmra.mxu0 %v2715
    %v2793 = vpop.f32.mrf.mxu0
    %v2794 = vadd.f32 %v2734, %v2793
    %v2795 = vpop.f32.mrf.mxu0
    %2796 = vdwg.mxu0
    %2797 = vmax.xlane.f32.xlu0 %v2794
    %v2798 = vpop.xlane.xlu0 %2797
    %v2799 = vsub.f32 %v2794, %v2798
    %v2800 = vmul.f32 %v2799, 1.442695
    %v2801 = vpow.pop %v2800
    %2802 = vadd.xlane.f32.xlu0 %v2801
    %v2803 = vpop.xlane.xlu0 %2802
    %v2804 = vrcp.pop %v2803
    %v2805 = vmul.f32 %v2803, %v2804
    %v2806 = vsub.f32 1.0, %v2805
    %v2807 = vmul.f32 %v2804, %v2806
    %v2808 = vadd.f32 %v2804, %v2807
    %vm2809 = vweird.f32 %v2803
    %vm2810 = vweird.f32 %v2804
    %vm2811 = vmor %vm2809, %vm2810
    %v2812 = vsel %vm2811, %v2804, %v2808
    %v2813 = vand.u32 2147483647, %v2803
    %vm2814 = vcmp.eq.f32.partialorder %v2813, 8.507059e+37
    %v2815 = vand.u32 %v2803, 2147483648
    %v2816 = vor.u32 1.1754944e-38, %v2815
    %v2817 = vsel %vm2814, %v2816, %v2812
    %v2818 = vmul.f32 %v2801, %v2817
    %2819 = vst [vmem:[#allocation13] sm:$0xff] %v2818
    // Predicated region
    $region54: #{tpu_custom_call.1} parent=1 // pred_check
      _
    $region55: #{tpu_custom_call.1} parent=1 // pred_check_branch
      %2821 = sbr.rel (0) target = $region57
    $region56: #{tpu_custom_call.1} parent=1 // pred_region
      %2823 = vsyncadd [#allocation6], 0
      %s2825 = sshll.u32 [#allocation13], 4
      %s2826 = int_to_ptr.vmem [resolvable:$true] %s2825
      %s2827 = sshll.u32 %s8, 4
      %s2828 = int_to_ptr.hbm [resolvable:$true] %s2827
      %2830 = dma.vmem_to_hbm [thread:$0]  %s2826, 128, %s2828, [#allocation6]
    $region57: #{tpu_custom_call.1} parent=1 // pred_fallthru
      _
    // Predicated region
    $region58: #{tpu_custom_call.1} parent=1 // pred_check
      _
    $region59: #{tpu_custom_call.1} parent=1 // pred_check_branch
      %2832 = sbr.rel (0) target = $region61
    $region60: #{tpu_custom_call.1} parent=1 // pred_region
      %2834 = dma.done [#allocation6], 128
    $region61: #{tpu_custom_call.1} parent=1 // pred_fallthru
      _
    %2835 = vsyncpa [#allocation5], 1
    %2836 = vsyncpa [#allocation8], 1
    %2837 = vsyncpa [#allocation11], 1
    %2838 = vsyncpa [#allocation6], 1

</llo_original>
